<compile_context>
chip_gen: v5e
topology: v5e:2x2
jax: 0.10.0
libtpu: 0.0.40
codegen_flags: <defaults>
</compile_context>

<pallas_src>
import jax
import jax.numpy as jnp
import numpy as np
from jax.experimental import pallas as pl
from jax.experimental.pallas import tpu as pltpu

EPS = 1e-5  # PyTorch BatchNorm default eps


# ----------------------------------------------------------------------------
# Fused forward kernel
# ----------------------------------------------------------------------------
def _encoder_fused_kernel(
    x_ref, sel2_ref, sel3_ref, selfc_ref,
    w1_ref, s1_ref, t1_ref,
    w2_ref, s2_ref, t2_ref,
    w3_ref, s3_ref, t3_ref,
    sfc_ref, tfc_ref,
    wout_ref, bout_ref,
    wfc_hbm_ref,                 # big FC weight, left in HBM (pl.ANY)
    o_ref,                       # (B, latent) output
    wfc_vmem, wfc_sem,           # scratch: VMEM landing buffer + DMA semaphore
):
    # Kick off the (largest) FC-weight DMA so it overlaps the conv-stack compute.
    wfc_copy = pltpu.make_async_copy(wfc_hbm_ref, wfc_vmem, wfc_sem)
    wfc_copy.start()

    f32 = jnp.float32
    bf16 = jnp.bfloat16
    C1 = w1_ref.shape[1]
    C2 = w2_ref.shape[1]
    C3 = w3_ref.shape[1]
    T3 = selfc_ref.shape[0]

    # conv1: Conv2d(1, C1, (1, F)) + BN2d + ReLU  ==  per-frame matmul over (B*T, F).
    h1 = jnp.dot(x_ref[...], w1_ref[...], preferred_element_type=f32)
    h1 = jnp.maximum(h1 * s1_ref[...] + t1_ref[...], 0.0).astype(bf16)

    # conv2: Conv2d(C1, C2, (3,1), stride (2,1)) + BN2d + ReLU.
    # Time-strided gather = block-diagonal 0/1 selection matmul:
    #   sel2[dt] @ h1 picks rows (b*T + 2u + dt) for every (b, u).
    acc2 = jnp.zeros((sel2_ref.shape[1], C2), f32)
    for dt in range(3):
        taps = jnp.dot(sel2_ref[dt], h1, preferred_element_type=f32).astype(bf16)
        acc2 += jnp.dot(taps, w2_ref[pl.ds(dt * C1, C1), :], preferred_element_type=f32)
    h2 = jnp.maximum(acc2 * s2_ref[...] + t2_ref[...], 0.0).astype(bf16)

    # conv3: Conv2d(C2, C3, (3,1), stride (2,1)) + BN2d + ReLU.
    acc3 = jnp.zeros((sel3_ref.shape[1], C3), f32)
    for dt in range(3):
        taps = jnp.dot(sel3_ref[dt], h2, preferred_element_type=f32).astype(bf16)
        acc3 += jnp.dot(taps, w3_ref[pl.ds(dt * C2, C2), :], preferred_element_type=f32)
    h3 = jnp.maximum(acc3 * s3_ref[...] + t3_ref[...], 0.0).astype(bf16)

    # fc: Linear + BN1d + ReLU.  torch.flatten(NCHW) (channel-major) ordering was folded
    # into the time-major-permuted wfc rows at prep time, so no runtime transpose:
    #   fc[b] = sum_t h3[b*T3 + t, :] @ wfc_tm[t*C3:(t+1)*C3, :]
    wfc_copy.wait()
    accf = jnp.zeros((selfc_ref.shape[1], sfc_ref.shape[1]), f32)
    for t in range(T3):
        taps = jnp.dot(selfc_ref[t], h3, preferred_element_type=f32).astype(bf16)
        accf += jnp.dot(taps, wfc_vmem[pl.ds(t * C3, C3), :], preferred_element_type=f32)
    hfc = jnp.maximum(accf * sfc_ref[...] + tfc_ref[...], 0.0).astype(bf16)

    # output layer: plain Linear, fused (the (B, 512) hidden never leaves vregs/VMEM).
    out = jnp.dot(hfc, wout_ref[...], preferred_element_type=f32) + bout_ref[...]
    o_ref[...] = out.astype(o_ref.dtype)


def conv_encoder_forward(x, prep):
    """x: (B, num_frame, num_freq) float32 -> (B, latent) float32."""
    B, T, F = x.shape
    xf = x.reshape(B * T, F).astype(jnp.bfloat16)
    latent = prep['bout'].shape[1]
    vmem = pl.BlockSpec(memory_space=pltpu.MemorySpace.VMEM)
    return pl.pallas_call(
        _encoder_fused_kernel,
        out_shape=jax.ShapeDtypeStruct((B, latent), jnp.float32),
        in_specs=[vmem] * 17 + [pl.BlockSpec(memory_space=pl.ANY)],
        out_specs=vmem,
        scratch_shapes=[
            pltpu.VMEM(prep['wfc'].shape, jnp.bfloat16),
            pltpu.SemaphoreType.DMA,
        ],
    )(xf, prep['sel2'], prep['sel3'], prep['selfc'],
      prep['w1'], prep['s1'], prep['t1'],
      prep['w2'], prep['s2'], prep['t2'],
      prep['w3'], prep['s3'], prep['t3'],
      prep['sfc'], prep['tfc'],
      prep['wout'], prep['bout'],
      prep['wfc'])


# ----------------------------------------------------------------------------
# Parameter init (raw, PyTorch-like, f32) and one-time kernel-ready prep
# ----------------------------------------------------------------------------
def fold_bn(bias, bn_stats):
    """Fold (conv/linear bias) + inference-mode BatchNorm into per-channel scale/shift."""
    gamma, beta, mean, var = bn_stats
    scale = gamma / jnp.sqrt(var + EPS)
    shift = beta + (bias - mean) * scale
    return scale.astype(jnp.float32), shift.astype(jnp.float32)


def init_params(key, num_freq, num_frame, latent_dim,
                channels=(64, 128, 256), fc_nodes=(512,)):
    C1, C2, C3 = channels
    keys = iter(jax.random.split(key, 32))

    def dense(shape, fan_in):
        return jax.random.normal(next(keys), shape, jnp.float32) / np.sqrt(fan_in)

    def bias(n):
        return 0.1 * jax.random.normal(next(keys), (n,), jnp.float32)

    def bn(n):
        k1, k2, k3, k4 = jax.random.split(next(keys), 4)
        gamma = jax.random.uniform(k1, (n,), jnp.float32, 0.5, 1.5)
        beta = 0.1 * jax.random.normal(k2, (n,), jnp.float32)
        mean = 0.1 * jax.random.normal(k3, (n,), jnp.float32)
        var = jax.random.uniform(k4, (n,), jnp.float32, 0.5, 1.5)
        return (gamma, beta, mean, var)

    t2 = (num_frame - 3) // 2 + 1
    t3 = (t2 - 3) // 2 + 1
    conv_size = C3 * t3

    p = {}
    # conv1: PyTorch weight (C1, 1, 1, F)   <-> ours (F, C1)
    p['w1'], p['b1'], p['bn1'] = dense((num_freq, C1), num_freq), bias(C1), bn(C1)
    # conv2: PyTorch weight (C2, C1, 3, 1)  <-> ours (3*C1, C2), row = dt*C1 + c_in
    p['w2'], p['b2'], p['bn2'] = dense((3 * C1, C2), 3 * C1), bias(C2), bn(C2)
    # conv3: PyTorch weight (C3, C2, 3, 1)  <-> ours (3*C2, C3), row = dt*C2 + c_in
    p['w3'], p['b3'], p['bn3'] = dense((3 * C2, C3), 3 * C2), bias(C3), bn(C3)
    # fc on flattened (C3*T3) features, channel-major rows (PyTorch flatten of NCHW)
    p['wfc'], p['bfc'], p['bnfc'] = (dense((conv_size, fc_nodes[0]), conv_size),
                                     bias(fc_nodes[0]), bn(fc_nodes[0]))
    # output layer
    p['wout'], p['bout'] = dense((fc_nodes[0], latent_dim), fc_nodes[0]), bias(latent_dim)
    return p


def _conv_selection(batch, t_in, t_out, kernel, stride):
    """sel[dt, b*t_out + u, b*t_in + stride*u + dt] = 1  (block-diagonal over batch)."""
    sel = np.zeros((kernel, batch * t_out, batch * t_in), np.float32)
    for dt in range(kernel):
        for b in range(batch):
            for u in range(t_out):
                sel[dt, b * t_out + u, b * t_in + stride * u + dt] = 1.0
    return jnp.asarray(sel, jnp.bfloat16)


def _flatten_selection(batch, t_out):
    """sel[t, b, b*t_out + t] = 1 : picks the (batch b, time t) row of the conv3 output."""
    sel = np.zeros((t_out, batch, batch * t_out), np.float32)
    for t in range(t_out):
        for b in range(batch):
            sel[t, b, b * t_out + t] = 1.0
    return jnp.asarray(sel, jnp.bfloat16)


def prepare_params(raw, batch, num_frame):
    """One-time conversion: bf16 weights, folded BN, permuted wfc, selection matrices."""
    bf16 = jnp.bfloat16
    C1, C2, C3 = raw['w1'].shape[1], raw['w2'].shape[1], raw['w3'].shape[1]
    T = num_frame
    T2 = (T - 3) // 2 + 1
    T3 = (T2 - 3) // 2 + 1
    conv_size = C3 * T3
    assert raw['wfc'].shape[0] == conv_size

    p = {}
    p['w1'] = raw['w1'].astype(bf16)
    p['w2'] = raw['w2'].astype(bf16)
    p['w3'] = raw['w3'].astype(bf16)
    p['wout'] = raw['wout'].astype(bf16)
    for name, n in (('1', C1), ('2', C2), ('3', C3)):
        s, t = fold_bn(raw['b' + name], raw['bn' + name])
        p['s' + name] = s.reshape(1, n)
        p['t' + name] = t.reshape(1, n)
    sfc, tfc = fold_bn(raw['bfc'], raw['bnfc'])
    p['sfc'] = sfc.reshape(1, -1)
    p['tfc'] = tfc.reshape(1, -1)
    p['bout'] = raw['bout'].reshape(1, -1).astype(jnp.float32)

    # torch.flatten(start_dim=1) on (B, C3, T3, 1) is channel-major (row = c*T3 + t).
    # Permute wfc rows once to time-major (row = t*C3 + c): no runtime transpose needed.
    idx = np.arange(conv_size)
    perm = (idx % C3) * T3 + (idx // C3)
    p['wfc'] = raw['wfc'][perm, :].astype(bf16)

    # 0/1 selection matrices implementing strided-in-time im2col and the flatten gather.
    p['sel2'] = _conv_selection(batch, T, T2, 3, 2)
    p['sel3'] = _conv_selection(batch, T2, T3, 3, 2)
    p['selfc'] = _flatten_selection(batch, T3)
    return p


# ----------------------------------------------------------------------------
# Pure-JAX reference (PyTorch conv/flatten semantics, inference-mode BN), using
# the same bf16 quantization of weights / pre-matmul activations as the kernel.
# ----------------------------------------------------------------------------
def ref_forward(x, raw):
    q = lambda a: a.astype(jnp.bfloat16).astype(jnp.float32)
    B = x.shape[0]

    def conv_time(h, w, k, s):
        cin = h.shape[-1]
        t_out = (h.shape[1] - k) // s + 1
        out = 0.0
        for dt in range(k):
            out = out + jnp.einsum('btc,cd->btd', h[:, dt:dt + s * t_out:s, :],
                                   q(w[dt * cin:(dt + 1) * cin, :]))
        return out

    s1, t1 = fold_bn(raw['b1'], raw['bn1'])
    h = jnp.maximum(jnp.einsum('btf,fc->btc', q(x), q(raw['w1'])) * s1 + t1, 0.0)
    s2, t2 = fold_bn(raw['b2'], raw['bn2'])
    h = jnp.maximum(conv_time(q(h), raw['w2'], 3, 2) * s2 + t2, 0.0)
    s3, t3 = fold_bn(raw['b3'], raw['bn3'])
    h = jnp.maximum(conv_time(q(h), raw['w3'], 3, 2) * s3 + t3, 0.0)
    h = jnp.transpose(h, (0, 2, 1)).reshape(B, -1)          # NCHW flatten (channel-major)
    sfc, tfc = fold_bn(raw['bfc'], raw['bnfc'])
    h = jnp.maximum(q(h) @ q(raw['wfc']) * sfc + tfc, 0.0)
    return q(h) @ q(raw['wout']) + raw['bout']


if __name__ == "__main__":
    BATCH, NUM_FRAME, NUM_FREQ, LATENT = 2, 25, 16, 16

    key = jax.random.PRNGKey(0)
    kx, kp = jax.random.split(key)
    x = jax.random.normal(kx, (BATCH, NUM_FRAME, NUM_FREQ), jnp.float32)
    raw = init_params(kp, NUM_FREQ, NUM_FRAME, LATENT)
    prep = prepare_params(raw, BATCH, NUM_FRAME)

    out = jax.jit(conv_encoder_forward)(x, prep)
    out = jax.block_until_ready(out)

    ref = ref_forward(x, raw)
    assert out.shape == (BATCH, LATENT)
    np.testing.assert_allclose(np.asarray(out), np.asarray(ref), rtol=2e-3, atol=2e-3)
    print("KERNEL_OK")
</pallas_src>

<mosaic_0001>
module attributes {stable_mosaic.version = 11 : i64} {
  func.func @_encoder_fused_kernel(%arg0: memref<50x16xbf16, #tpu.memory_space<vmem>>, %arg1: memref<3x24x50xbf16, #tpu.memory_space<vmem>>, %arg2: memref<3x10x24xbf16, #tpu.memory_space<vmem>>, %arg3: memref<5x2x10xbf16, #tpu.memory_space<vmem>>, %arg4: memref<16x64xbf16, #tpu.memory_space<vmem>>, %arg5: memref<1x64xf32, #tpu.memory_space<vmem>>, %arg6: memref<1x64xf32, #tpu.memory_space<vmem>>, %arg7: memref<192x128xbf16, #tpu.memory_space<vmem>>, %arg8: memref<1x128xf32, #tpu.memory_space<vmem>>, %arg9: memref<1x128xf32, #tpu.memory_space<vmem>>, %arg10: memref<384x256xbf16, #tpu.memory_space<vmem>>, %arg11: memref<1x256xf32, #tpu.memory_space<vmem>>, %arg12: memref<1x256xf32, #tpu.memory_space<vmem>>, %arg13: memref<1x512xf32, #tpu.memory_space<vmem>>, %arg14: memref<1x512xf32, #tpu.memory_space<vmem>>, %arg15: memref<512x16xbf16, #tpu.memory_space<vmem>>, %arg16: memref<1x16xf32, #tpu.memory_space<vmem>>, %arg17: memref<1280x512xbf16, #tpu.memory_space<any>>, %arg18: memref<2x16xf32, #tpu.memory_space<vmem>>, %arg19: memref<1280x512xbf16, #tpu.memory_space<vmem>>, %arg20: memref<!tpu.dma_semaphore, #tpu.memory_space<semaphore_mem>>) attributes {dimension_semantics = [], scalar_prefetch = 0 : i64, scratch_operands = 2 : i64, tpu.core_type = #tpu.core_type<tc>} {
    tpu.enqueue_dma source(%arg17 : memref<1280x512xbf16, #tpu.memory_space<any>>) target(%arg19 : memref<1280x512xbf16, #tpu.memory_space<vmem>>) target_semaphore(%arg20 : memref<!tpu.dma_semaphore, #tpu.memory_space<semaphore_mem>>)
    %c0 = arith.constant 0 : index
    %c0_0 = arith.constant 0 : index
    %0 = vector.load %arg0[%c0, %c0_0] : memref<50x16xbf16, #tpu.memory_space<vmem>>, vector<50x16xbf16>
    %c0_1 = arith.constant 0 : index
    %c0_2 = arith.constant 0 : index
    %1 = vector.load %arg4[%c0_1, %c0_2] : memref<16x64xbf16, #tpu.memory_space<vmem>>, vector<16x64xbf16>
    %cst = arith.constant dense<0.000000e+00> : vector<50x64xf32>
    %2 = tpu.matmul %0, %1, %cst {dimension_numbers = #tpu.dot_dimension_numbers<[1], [0], [0], [1], [0, 0, 1, 1], [], []>} : vector<50x16xbf16>, vector<16x64xbf16>, vector<50x64xf32> -> vector<50x64xf32>
    %c0_3 = arith.constant 0 : index
    %c0_4 = arith.constant 0 : index
    %3 = vector.load %arg5[%c0_3, %c0_4] : memref<1x64xf32, #tpu.memory_space<vmem>>, vector<1x64xf32>
    %4 = vector.broadcast %3 : vector<1x64xf32> to vector<50x64xf32>
    %5 = arith.mulf %2, %4 : vector<50x64xf32>
    %c0_5 = arith.constant 0 : index
    %c0_6 = arith.constant 0 : index
    %6 = vector.load %arg6[%c0_5, %c0_6] : memref<1x64xf32, #tpu.memory_space<vmem>>, vector<1x64xf32>
    %7 = vector.broadcast %6 : vector<1x64xf32> to vector<50x64xf32>
    %8 = arith.addf %5, %7 : vector<50x64xf32>
    %cst_7 = arith.constant 0.000000e+00 : f32
    %9 = vector.broadcast %cst_7 : f32 to vector<50x64xf32>
    %10 = arith.maximumf %8, %9 : vector<50x64xf32>
    %11 = arith.truncf %10 : vector<50x64xf32> to vector<50x64xbf16>
    %cst_8 = arith.constant 0.000000e+00 : f32
    %12 = vector.broadcast %cst_8 : f32 to vector<24x128xf32>
    %c0_9 = arith.constant 0 : index
    %c0_10 = arith.constant 0 : index
    %c0_11 = arith.constant 0 : index
    %13 = vector.load %arg1[%c0_9, %c0_10, %c0_11] : memref<3x24x50xbf16, #tpu.memory_space<vmem>>, vector<1x24x50xbf16>
    %14 = vector.shape_cast %13 : vector<1x24x50xbf16> to vector<24x50xbf16>
    %cst_12 = arith.constant dense<0.000000e+00> : vector<24x64xf32>
    %15 = tpu.matmul %14, %11, %cst_12 {dimension_numbers = #tpu.dot_dimension_numbers<[1], [0], [0], [1], [0, 0, 1, 1], [], []>} : vector<24x50xbf16>, vector<50x64xbf16>, vector<24x64xf32> -> vector<24x64xf32>
    %16 = arith.truncf %15 : vector<24x64xf32> to vector<24x64xbf16>
    %c0_13 = arith.constant 0 : index
    %c0_14 = arith.constant 0 : index
    %17 = vector.load %arg7[%c0_13, %c0_14] : memref<192x128xbf16, #tpu.memory_space<vmem>>, vector<64x128xbf16>
    %cst_15 = arith.constant dense<0.000000e+00> : vector<24x128xf32>
    %18 = tpu.matmul %16, %17, %cst_15 {dimension_numbers = #tpu.dot_dimension_numbers<[1], [0], [0], [1], [0, 0, 1, 1], [], []>} : vector<24x64xbf16>, vector<64x128xbf16>, vector<24x128xf32> -> vector<24x128xf32>
    %19 = arith.addf %12, %18 : vector<24x128xf32>
    %c1 = arith.constant 1 : index
    %c0_16 = arith.constant 0 : index
    %c0_17 = arith.constant 0 : index
    %20 = vector.load %arg1[%c1, %c0_16, %c0_17] : memref<3x24x50xbf16, #tpu.memory_space<vmem>>, vector<1x24x50xbf16>
    %21 = vector.shape_cast %20 : vector<1x24x50xbf16> to vector<24x50xbf16>
    %cst_18 = arith.constant dense<0.000000e+00> : vector<24x64xf32>
    %22 = tpu.matmul %21, %11, %cst_18 {dimension_numbers = #tpu.dot_dimension_numbers<[1], [0], [0], [1], [0, 0, 1, 1], [], []>} : vector<24x50xbf16>, vector<50x64xbf16>, vector<24x64xf32> -> vector<24x64xf32>
    %23 = arith.truncf %22 : vector<24x64xf32> to vector<24x64xbf16>
    %c64 = arith.constant 64 : index
    %c0_19 = arith.constant 0 : index
    %24 = vector.load %arg7[%c64, %c0_19] : memref<192x128xbf16, #tpu.memory_space<vmem>>, vector<64x128xbf16>
    %cst_20 = arith.constant dense<0.000000e+00> : vector<24x128xf32>
    %25 = tpu.matmul %23, %24, %cst_20 {dimension_numbers = #tpu.dot_dimension_numbers<[1], [0], [0], [1], [0, 0, 1, 1], [], []>} : vector<24x64xbf16>, vector<64x128xbf16>, vector<24x128xf32> -> vector<24x128xf32>
    %26 = arith.addf %19, %25 : vector<24x128xf32>
    %c2 = arith.constant 2 : index
    %c0_21 = arith.constant 0 : index
    %c0_22 = arith.constant 0 : index
    %27 = vector.load %arg1[%c2, %c0_21, %c0_22] : memref<3x24x50xbf16, #tpu.memory_space<vmem>>, vector<1x24x50xbf16>
    %28 = vector.shape_cast %27 : vector<1x24x50xbf16> to vector<24x50xbf16>
    %cst_23 = arith.constant dense<0.000000e+00> : vector<24x64xf32>
    %29 = tpu.matmul %28, %11, %cst_23 {dimension_numbers = #tpu.dot_dimension_numbers<[1], [0], [0], [1], [0, 0, 1, 1], [], []>} : vector<24x50xbf16>, vector<50x64xbf16>, vector<24x64xf32> -> vector<24x64xf32>
    %30 = arith.truncf %29 : vector<24x64xf32> to vector<24x64xbf16>
    %c128 = arith.constant 128 : index
    %c0_24 = arith.constant 0 : index
    %31 = vector.load %arg7[%c128, %c0_24] : memref<192x128xbf16, #tpu.memory_space<vmem>>, vector<64x128xbf16>
    %cst_25 = arith.constant dense<0.000000e+00> : vector<24x128xf32>
    %32 = tpu.matmul %30, %31, %cst_25 {dimension_numbers = #tpu.dot_dimension_numbers<[1], [0], [0], [1], [0, 0, 1, 1], [], []>} : vector<24x64xbf16>, vector<64x128xbf16>, vector<24x128xf32> -> vector<24x128xf32>
    %33 = arith.addf %26, %32 : vector<24x128xf32>
    %c0_26 = arith.constant 0 : index
    %c0_27 = arith.constant 0 : index
    %34 = vector.load %arg8[%c0_26, %c0_27] : memref<1x128xf32, #tpu.memory_space<vmem>>, vector<1x128xf32>
    %35 = vector.broadcast %34 : vector<1x128xf32> to vector<24x128xf32>
    %36 = arith.mulf %33, %35 : vector<24x128xf32>
    %c0_28 = arith.constant 0 : index
    %c0_29 = arith.constant 0 : index
    %37 = vector.load %arg9[%c0_28, %c0_29] : memref<1x128xf32, #tpu.memory_space<vmem>>, vector<1x128xf32>
    %38 = vector.broadcast %37 : vector<1x128xf32> to vector<24x128xf32>
    %39 = arith.addf %36, %38 : vector<24x128xf32>
    %cst_30 = arith.constant 0.000000e+00 : f32
    %40 = vector.broadcast %cst_30 : f32 to vector<24x128xf32>
    %41 = arith.maximumf %39, %40 : vector<24x128xf32>
    %42 = arith.truncf %41 : vector<24x128xf32> to vector<24x128xbf16>
    %cst_31 = arith.constant 0.000000e+00 : f32
    %43 = vector.broadcast %cst_31 : f32 to vector<10x256xf32>
    %c0_32 = arith.constant 0 : index
    %c0_33 = arith.constant 0 : index
    %c0_34 = arith.constant 0 : index
    %44 = vector.load %arg2[%c0_32, %c0_33, %c0_34] : memref<3x10x24xbf16, #tpu.memory_space<vmem>>, vector<1x10x24xbf16>
    %45 = vector.shape_cast %44 : vector<1x10x24xbf16> to vector<10x24xbf16>
    %cst_35 = arith.constant dense<0.000000e+00> : vector<10x128xf32>
    %46 = tpu.matmul %45, %42, %cst_35 {dimension_numbers = #tpu.dot_dimension_numbers<[1], [0], [0], [1], [0, 0, 1, 1], [], []>} : vector<10x24xbf16>, vector<24x128xbf16>, vector<10x128xf32> -> vector<10x128xf32>
    %47 = arith.truncf %46 : vector<10x128xf32> to vector<10x128xbf16>
    %c0_36 = arith.constant 0 : index
    %c0_37 = arith.constant 0 : index
    %48 = vector.load %arg10[%c0_36, %c0_37] : memref<384x256xbf16, #tpu.memory_space<vmem>>, vector<128x256xbf16>
    %cst_38 = arith.constant dense<0.000000e+00> : vector<10x256xf32>
    %49 = tpu.matmul %47, %48, %cst_38 {dimension_numbers = #tpu.dot_dimension_numbers<[1], [0], [0], [1], [0, 0, 1, 1], [], []>} : vector<10x128xbf16>, vector<128x256xbf16>, vector<10x256xf32> -> vector<10x256xf32>
    %50 = arith.addf %43, %49 : vector<10x256xf32>
    %c1_39 = arith.constant 1 : index
    %c0_40 = arith.constant 0 : index
    %c0_41 = arith.constant 0 : index
    %51 = vector.load %arg2[%c1_39, %c0_40, %c0_41] : memref<3x10x24xbf16, #tpu.memory_space<vmem>>, vector<1x10x24xbf16>
    %52 = vector.shape_cast %51 : vector<1x10x24xbf16> to vector<10x24xbf16>
    %cst_42 = arith.constant dense<0.000000e+00> : vector<10x128xf32>
    %53 = tpu.matmul %52, %42, %cst_42 {dimension_numbers = #tpu.dot_dimension_numbers<[1], [0], [0], [1], [0, 0, 1, 1], [], []>} : vector<10x24xbf16>, vector<24x128xbf16>, vector<10x128xf32> -> vector<10x128xf32>
    %54 = arith.truncf %53 : vector<10x128xf32> to vector<10x128xbf16>
    %c128_43 = arith.constant 128 : index
    %c0_44 = arith.constant 0 : index
    %55 = vector.load %arg10[%c128_43, %c0_44] : memref<384x256xbf16, #tpu.memory_space<vmem>>, vector<128x256xbf16>
    %cst_45 = arith.constant dense<0.000000e+00> : vector<10x256xf32>
    %56 = tpu.matmul %54, %55, %cst_45 {dimension_numbers = #tpu.dot_dimension_numbers<[1], [0], [0], [1], [0, 0, 1, 1], [], []>} : vector<10x128xbf16>, vector<128x256xbf16>, vector<10x256xf32> -> vector<10x256xf32>
    %57 = arith.addf %50, %56 : vector<10x256xf32>
    %c2_46 = arith.constant 2 : index
    %c0_47 = arith.constant 0 : index
    %c0_48 = arith.constant 0 : index
    %58 = vector.load %arg2[%c2_46, %c0_47, %c0_48] : memref<3x10x24xbf16, #tpu.memory_space<vmem>>, vector<1x10x24xbf16>
    %59 = vector.shape_cast %58 : vector<1x10x24xbf16> to vector<10x24xbf16>
    %cst_49 = arith.constant dense<0.000000e+00> : vector<10x128xf32>
    %60 = tpu.matmul %59, %42, %cst_49 {dimension_numbers = #tpu.dot_dimension_numbers<[1], [0], [0], [1], [0, 0, 1, 1], [], []>} : vector<10x24xbf16>, vector<24x128xbf16>, vector<10x128xf32> -> vector<10x128xf32>
    %61 = arith.truncf %60 : vector<10x128xf32> to vector<10x128xbf16>
    %c256 = arith.constant 256 : index
    %c0_50 = arith.constant 0 : index
    %62 = vector.load %arg10[%c256, %c0_50] : memref<384x256xbf16, #tpu.memory_space<vmem>>, vector<128x256xbf16>
    %cst_51 = arith.constant dense<0.000000e+00> : vector<10x256xf32>
    %63 = tpu.matmul %61, %62, %cst_51 {dimension_numbers = #tpu.dot_dimension_numbers<[1], [0], [0], [1], [0, 0, 1, 1], [], []>} : vector<10x128xbf16>, vector<128x256xbf16>, vector<10x256xf32> -> vector<10x256xf32>
    %64 = arith.addf %57, %63 : vector<10x256xf32>
    %c0_52 = arith.constant 0 : index
    %c0_53 = arith.constant 0 : index
    %65 = vector.load %arg11[%c0_52, %c0_53] : memref<1x256xf32, #tpu.memory_space<vmem>>, vector<1x256xf32>
    %66 = vector.broadcast %65 : vector<1x256xf32> to vector<10x256xf32>
    %67 = arith.mulf %64, %66 : vector<10x256xf32>
    %c0_54 = arith.constant 0 : index
    %c0_55 = arith.constant 0 : index
    %68 = vector.load %arg12[%c0_54, %c0_55] : memref<1x256xf32, #tpu.memory_space<vmem>>, vector<1x256xf32>
    %69 = vector.broadcast %68 : vector<1x256xf32> to vector<10x256xf32>
    %70 = arith.addf %67, %69 : vector<10x256xf32>
    %cst_56 = arith.constant 0.000000e+00 : f32
    %71 = vector.broadcast %cst_56 : f32 to vector<10x256xf32>
    %72 = arith.maximumf %70, %71 : vector<10x256xf32>
    %73 = arith.truncf %72 : vector<10x256xf32> to vector<10x256xbf16>
    tpu.wait_dma2 semaphore(%arg20 : memref<!tpu.dma_semaphore, #tpu.memory_space<semaphore_mem>>) src(%arg17 : memref<1280x512xbf16, #tpu.memory_space<any>>) dst(%arg19 : memref<1280x512xbf16, #tpu.memory_space<vmem>>)
    %cst_57 = arith.constant 0.000000e+00 : f32
    %74 = vector.broadcast %cst_57 : f32 to vector<2x512xf32>
    %c0_58 = arith.constant 0 : index
    %c0_59 = arith.constant 0 : index
    %c0_60 = arith.constant 0 : index
    %75 = vector.load %arg3[%c0_58, %c0_59, %c0_60] : memref<5x2x10xbf16, #tpu.memory_space<vmem>>, vector<1x2x10xbf16>
    %76 = vector.shape_cast %75 : vector<1x2x10xbf16> to vector<2x10xbf16>
    %cst_61 = arith.constant dense<0.000000e+00> : vector<2x256xf32>
    %77 = tpu.matmul %76, %73, %cst_61 {dimension_numbers = #tpu.dot_dimension_numbers<[1], [0], [0], [1], [0, 0, 1, 1], [], []>} : vector<2x10xbf16>, vector<10x256xbf16>, vector<2x256xf32> -> vector<2x256xf32>
    %78 = arith.truncf %77 : vector<2x256xf32> to vector<2x256xbf16>
    %c0_62 = arith.constant 0 : index
    %c0_63 = arith.constant 0 : index
    %79 = vector.load %arg19[%c0_62, %c0_63] : memref<1280x512xbf16, #tpu.memory_space<vmem>>, vector<256x512xbf16>
    %cst_64 = arith.constant dense<0.000000e+00> : vector<2x512xf32>
    %80 = tpu.matmul %78, %79, %cst_64 {dimension_numbers = #tpu.dot_dimension_numbers<[1], [0], [0], [1], [0, 0, 1, 1], [], []>} : vector<2x256xbf16>, vector<256x512xbf16>, vector<2x512xf32> -> vector<2x512xf32>
    %81 = arith.addf %74, %80 : vector<2x512xf32>
    %c1_65 = arith.constant 1 : index
    %c0_66 = arith.constant 0 : index
    %c0_67 = arith.constant 0 : index
    %82 = vector.load %arg3[%c1_65, %c0_66, %c0_67] : memref<5x2x10xbf16, #tpu.memory_space<vmem>>, vector<1x2x10xbf16>
    %83 = vector.shape_cast %82 : vector<1x2x10xbf16> to vector<2x10xbf16>
    %cst_68 = arith.constant dense<0.000000e+00> : vector<2x256xf32>
    %84 = tpu.matmul %83, %73, %cst_68 {dimension_numbers = #tpu.dot_dimension_numbers<[1], [0], [0], [1], [0, 0, 1, 1], [], []>} : vector<2x10xbf16>, vector<10x256xbf16>, vector<2x256xf32> -> vector<2x256xf32>
    %85 = arith.truncf %84 : vector<2x256xf32> to vector<2x256xbf16>
    %c256_69 = arith.constant 256 : index
    %c0_70 = arith.constant 0 : index
    %86 = vector.load %arg19[%c256_69, %c0_70] : memref<1280x512xbf16, #tpu.memory_space<vmem>>, vector<256x512xbf16>
    %cst_71 = arith.constant dense<0.000000e+00> : vector<2x512xf32>
    %87 = tpu.matmul %85, %86, %cst_71 {dimension_numbers = #tpu.dot_dimension_numbers<[1], [0], [0], [1], [0, 0, 1, 1], [], []>} : vector<2x256xbf16>, vector<256x512xbf16>, vector<2x512xf32> -> vector<2x512xf32>
    %88 = arith.addf %81, %87 : vector<2x512xf32>
    %c2_72 = arith.constant 2 : index
    %c0_73 = arith.constant 0 : index
    %c0_74 = arith.constant 0 : index
    %89 = vector.load %arg3[%c2_72, %c0_73, %c0_74] : memref<5x2x10xbf16, #tpu.memory_space<vmem>>, vector<1x2x10xbf16>
    %90 = vector.shape_cast %89 : vector<1x2x10xbf16> to vector<2x10xbf16>
    %cst_75 = arith.constant dense<0.000000e+00> : vector<2x256xf32>
    %91 = tpu.matmul %90, %73, %cst_75 {dimension_numbers = #tpu.dot_dimension_numbers<[1], [0], [0], [1], [0, 0, 1, 1], [], []>} : vector<2x10xbf16>, vector<10x256xbf16>, vector<2x256xf32> -> vector<2x256xf32>
    %92 = arith.truncf %91 : vector<2x256xf32> to vector<2x256xbf16>
    %c512 = arith.constant 512 : index
    %c0_76 = arith.constant 0 : index
    %93 = vector.load %arg19[%c512, %c0_76] : memref<1280x512xbf16, #tpu.memory_space<vmem>>, vector<256x512xbf16>
    %cst_77 = arith.constant dense<0.000000e+00> : vector<2x512xf32>
    %94 = tpu.matmul %92, %93, %cst_77 {dimension_numbers = #tpu.dot_dimension_numbers<[1], [0], [0], [1], [0, 0, 1, 1], [], []>} : vector<2x256xbf16>, vector<256x512xbf16>, vector<2x512xf32> -> vector<2x512xf32>
    %95 = arith.addf %88, %94 : vector<2x512xf32>
    %c3 = arith.constant 3 : index
    %c0_78 = arith.constant 0 : index
    %c0_79 = arith.constant 0 : index
    %96 = vector.load %arg3[%c3, %c0_78, %c0_79] : memref<5x2x10xbf16, #tpu.memory_space<vmem>>, vector<1x2x10xbf16>
    %97 = vector.shape_cast %96 : vector<1x2x10xbf16> to vector<2x10xbf16>
    %cst_80 = arith.constant dense<0.000000e+00> : vector<2x256xf32>
    %98 = tpu.matmul %97, %73, %cst_80 {dimension_numbers = #tpu.dot_dimension_numbers<[1], [0], [0], [1], [0, 0, 1, 1], [], []>} : vector<2x10xbf16>, vector<10x256xbf16>, vector<2x256xf32> -> vector<2x256xf32>
    %99 = arith.truncf %98 : vector<2x256xf32> to vector<2x256xbf16>
    %c768 = arith.constant 768 : index
    %c0_81 = arith.constant 0 : index
    %100 = vector.load %arg19[%c768, %c0_81] : memref<1280x512xbf16, #tpu.memory_space<vmem>>, vector<256x512xbf16>
    %cst_82 = arith.constant dense<0.000000e+00> : vector<2x512xf32>
    %101 = tpu.matmul %99, %100, %cst_82 {dimension_numbers = #tpu.dot_dimension_numbers<[1], [0], [0], [1], [0, 0, 1, 1], [], []>} : vector<2x256xbf16>, vector<256x512xbf16>, vector<2x512xf32> -> vector<2x512xf32>
    %102 = arith.addf %95, %101 : vector<2x512xf32>
    %c4 = arith.constant 4 : index
    %c0_83 = arith.constant 0 : index
    %c0_84 = arith.constant 0 : index
    %103 = vector.load %arg3[%c4, %c0_83, %c0_84] : memref<5x2x10xbf16, #tpu.memory_space<vmem>>, vector<1x2x10xbf16>
    %104 = vector.shape_cast %103 : vector<1x2x10xbf16> to vector<2x10xbf16>
    %cst_85 = arith.constant dense<0.000000e+00> : vector<2x256xf32>
    %105 = tpu.matmul %104, %73, %cst_85 {dimension_numbers = #tpu.dot_dimension_numbers<[1], [0], [0], [1], [0, 0, 1, 1], [], []>} : vector<2x10xbf16>, vector<10x256xbf16>, vector<2x256xf32> -> vector<2x256xf32>
    %106 = arith.truncf %105 : vector<2x256xf32> to vector<2x256xbf16>
    %c1024 = arith.constant 1024 : index
    %c0_86 = arith.constant 0 : index
    %107 = vector.load %arg19[%c1024, %c0_86] : memref<1280x512xbf16, #tpu.memory_space<vmem>>, vector<256x512xbf16>
    %cst_87 = arith.constant dense<0.000000e+00> : vector<2x512xf32>
    %108 = tpu.matmul %106, %107, %cst_87 {dimension_numbers = #tpu.dot_dimension_numbers<[1], [0], [0], [1], [0, 0, 1, 1], [], []>} : vector<2x256xbf16>, vector<256x512xbf16>, vector<2x512xf32> -> vector<2x512xf32>
    %109 = arith.addf %102, %108 : vector<2x512xf32>
    %c0_88 = arith.constant 0 : index
    %c0_89 = arith.constant 0 : index
    %110 = vector.load %arg13[%c0_88, %c0_89] : memref<1x512xf32, #tpu.memory_space<vmem>>, vector<1x512xf32>
    %111 = vector.broadcast %110 : vector<1x512xf32> to vector<2x512xf32>
    %112 = arith.mulf %109, %111 : vector<2x512xf32>
    %c0_90 = arith.constant 0 : index
    %c0_91 = arith.constant 0 : index
    %113 = vector.load %arg14[%c0_90, %c0_91] : memref<1x512xf32, #tpu.memory_space<vmem>>, vector<1x512xf32>
    %114 = vector.broadcast %113 : vector<1x512xf32> to vector<2x512xf32>
    %115 = arith.addf %112, %114 : vector<2x512xf32>
    %cst_92 = arith.constant 0.000000e+00 : f32
    %116 = vector.broadcast %cst_92 : f32 to vector<2x512xf32>
    %117 = arith.maximumf %115, %116 : vector<2x512xf32>
    %118 = arith.truncf %117 : vector<2x512xf32> to vector<2x512xbf16>
    %c0_93 = arith.constant 0 : index
    %c0_94 = arith.constant 0 : index
    %119 = vector.load %arg15[%c0_93, %c0_94] : memref<512x16xbf16, #tpu.memory_space<vmem>>, vector<512x16xbf16>
    %cst_95 = arith.constant dense<0.000000e+00> : vector<2x16xf32>
    %120 = tpu.matmul %118, %119, %cst_95 {dimension_numbers = #tpu.dot_dimension_numbers<[1], [0], [0], [1], [0, 0, 1, 1], [], []>} : vector<2x512xbf16>, vector<512x16xbf16>, vector<2x16xf32> -> vector<2x16xf32>
    %c0_96 = arith.constant 0 : index
    %c0_97 = arith.constant 0 : index
    %121 = vector.load %arg16[%c0_96, %c0_97] : memref<1x16xf32, #tpu.memory_space<vmem>>, vector<1x16xf32>
    %122 = vector.broadcast %121 : vector<1x16xf32> to vector<2x16xf32>
    %123 = arith.addf %120, %122 : vector<2x16xf32>
    %c0_98 = arith.constant 0 : index
    %c0_99 = arith.constant 0 : index
    %124 = vector.load %arg18[%c0_98, %c0_99] : memref<2x16xf32, #tpu.memory_space<vmem>>, vector<2x16xf32>
    tpu.vector_store %arg18[%c0_98, %c0_99], %123 {strides = array<i32>} : memref<2x16xf32, #tpu.memory_space<vmem>>, vector<2x16xf32>,
    return
  }
}

</mosaic_0001>

<llo_original>
// kernel: conv_encoder_forward.1
$region0: #{conv_encoder_forward.1}
  #allocation0 [shape = 'u32[]', space=smem, size = 0x4, offset = 0x4, fixed_abs, tag = 'smem constant byte address 0x4 - core index']
  #allocation1 [shape = 'u32[72,128]{1,0:T(1,128)}', space=vmem, size = 0x9000, scoped, tag = 'internal scratch']
  #allocation2 [shape = 'bf16[1280,512]{1,0:T(8,128)(2,1)}', space=vmem, size = 0x140000, scoped, tag = 'scratch operand']
  #allocation3 [shape = 's32[1]{0}', space=sflag, size = 0x4, scoped, tag = 'scratch operand']
  #allocation28 [shape = 's32[]', space=sflag, size = 0x4, offset = 0, fixed_abs, tag = 'sflag constant byte address 0x0 - dummy sync flag']
  #allocation29 [shape = 's32[]', space=sflag, size = 0x4, offset = 0, fixed_abs, tag = 'sflag constant byte address 0x0 - dummy sync flag']
  #allocation30 [shape = 'u32[]', space=smem, size = 0x4, offset = 0x44, fixed_abs, tag = 'smem constant byte address 0x44 - assertion arg 0']
  #allocation31 [shape = 'u32[]', space=smem, size = 0x4, offset = 0x48, fixed_abs, tag = 'smem constant byte address 0x48 - assertion arg 1']
  %s0 = inlined_call_operand.vmem [shape: bf16[50,16], index: 0, kind: input, shape index: {}]
  %s1 = inlined_call_operand.hbm [shape: bf16[3,24,50], index: 1, kind: input, shape index: {}]
  %s2 = inlined_call_operand.vmem [shape: bf16[3,10,24], index: 2, kind: input, shape index: {}]
  %s3 = inlined_call_operand.hbm [shape: bf16[5,2,10], index: 3, kind: input, shape index: {}]
  %s4 = inlined_call_operand.hbm [shape: bf16[16,64], index: 4, kind: input, shape index: {}]
  %s5 = inlined_call_operand.hbm [shape: f32[1,64], index: 5, kind: input, shape index: {}]
  %s6 = inlined_call_operand.hbm [shape: f32[1,64], index: 6, kind: input, shape index: {}]
  %s7 = inlined_call_operand.hbm [shape: bf16[192,128], index: 7, kind: input, shape index: {}]
  %s8 = inlined_call_operand.hbm [shape: f32[1,128], index: 8, kind: input, shape index: {}]
  %s9 = inlined_call_operand.hbm [shape: f32[1,128], index: 9, kind: input, shape index: {}]
  %s10 = inlined_call_operand.hbm [shape: bf16[384,256], index: 10, kind: input, shape index: {}]
  %s11 = inlined_call_operand.hbm [shape: f32[1,256], index: 11, kind: input, shape index: {}]
  %s12 = inlined_call_operand.hbm [shape: f32[1,256], index: 12, kind: input, shape index: {}]
  %s13 = inlined_call_operand.hbm [shape: f32[1,512], index: 13, kind: input, shape index: {}]
  %s14 = inlined_call_operand.hbm [shape: f32[1,512], index: 14, kind: input, shape index: {}]
  %s15 = inlined_call_operand.vmem [shape: bf16[512,16], index: 15, kind: input, shape index: {}]
  %s16 = inlined_call_operand.hbm [shape: f32[1,16], index: 16, kind: input, shape index: {}]
  %s17 = inlined_call_operand.hbm [shape: bf16[1280,512], index: 17, kind: input, shape index: {}]
  %s18 = inlined_call_operand.hbm [shape: f32[2,16], index: 18, kind: output, shape index: {}]
  %s19 = sld [smem:[#allocation0]]
  $region138: #{conv_encoder_forward.1} parent=0
    _
  %s21 = ssub.s32 1, %s19
  %s22 = scalar_select 0, %s21, %s19
  $region1: #{conv_encoder_forward.1} parent=0
    #allocation4 [shape = 'u8[18432]{0}', space=vmem, size = 0x4800, scoped, tag = 'input window, operand 1, single buffered']
    #allocation5 [shape = 's32[1]{0}', space=sflag, size = 0x4, scoped, tag = 'scoped memory for conv_encoder_forward.1']
    #allocation6 [shape = 's32[1]{0}', space=sflag, size = 0x4, scoped, tag = 'scoped memory for conv_encoder_forward.1']
    #allocation7 [shape = 'u8[2560]{0}', space=vmem, size = 0xc00, scoped, tag = 'input window, operand 3, single buffered']
    #allocation8 [shape = 's32[1]{0}', space=sflag, size = 0x4, scoped, tag = 'scoped memory for conv_encoder_forward.1']
    #allocation9 [shape = 'u8[4096]{0}', space=vmem, size = 0x1000, scoped, tag = 'input window, operand 4, single buffered']
    #allocation10 [shape = 'u8[512]{0}', space=vmem, size = 0x400, scoped, tag = 'input window, operand 5, single buffered']
    #allocation11 [shape = 's32[1]{0}', space=sflag, size = 0x4, scoped, tag = 'scoped memory for conv_encoder_forward.1']
    #allocation12 [shape = 'u8[512]{0}', space=vmem, size = 0x400, scoped, tag = 'input window, operand 6, single buffered']
    #allocation13 [shape = 'u8[49152]{0}', space=vmem, size = 0xc000, scoped, tag = 'input window, operand 7, single buffered']
    #allocation14 [shape = 's32[1]{0}', space=sflag, size = 0x4, scoped, tag = 'scoped memory for conv_encoder_forward.1']
    #allocation15 [shape = 'u8[512]{0}', space=vmem, size = 0x400, scoped, tag = 'input window, operand 8, single buffered']
    #allocation16 [shape = 'u8[512]{0}', space=vmem, size = 0x400, scoped, tag = 'input window, operand 9, single buffered']
    #allocation17 [shape = 's32[1]{0}', space=sflag, size = 0x4, scoped, tag = 'scoped memory for conv_encoder_forward.1']
    #allocation18 [shape = 'u8[196608]{0}', space=vmem, size = 0x30000, scoped, tag = 'input window, operand 10, single buffered']
    #allocation19 [shape = 'u8[1024]{0}', space=vmem, size = 0x400, scoped, tag = 'input window, operand 11, single buffered']
    #allocation20 [shape = 's32[1]{0}', space=sflag, size = 0x4, scoped, tag = 'scoped memory for conv_encoder_forward.1']
    #allocation21 [shape = 'u8[1024]{0}', space=vmem, size = 0x400, scoped, tag = 'input window, operand 12, single buffered']
    #allocation22 [shape = 'u8[2048]{0}', space=vmem, size = 0x800, scoped, tag = 'input window, operand 13, single buffered']
    #allocation23 [shape = 's32[1]{0}', space=sflag, size = 0x4, scoped, tag = 'scoped memory for conv_encoder_forward.1']
    #allocation24 [shape = 'u8[2048]{0}', space=vmem, size = 0x800, scoped, tag = 'input window, operand 14, single buffered']
    #allocation25 [shape = 'u8[512]{0}', space=vmem, size = 0x400, scoped, tag = 'input window, operand 16, single buffered']
    #allocation26 [shape = 's32[1]{0}', space=sflag, size = 0x4, scoped, tag = 'scoped memory for conv_encoder_forward.1']
    #allocation27 [shape = 'u8[1024]{0}', space=vmem, size = 0x400, scoped, tag = 'output window, operand 0, single buffered']
    %23 = vsyncpa [#allocation5], 0
    %24 = vsyncpa [#allocation8], 0
    %25 = vsyncpa [#allocation11], 0
    %26 = vsyncpa [#allocation14], 0
    %27 = vsyncpa [#allocation17], 0
    %28 = vsyncpa [#allocation20], 0
    %29 = vsyncpa [#allocation23], 0
    %30 = vsyncpa [#allocation26], 0
    %31 = vsyncpa [#allocation6], 0
    // Predicated region
    $region2: #{conv_encoder_forward.1} parent=1 // pred_check
      _
    $region3: #{conv_encoder_forward.1} parent=1 // pred_check_branch
      %33 = sbr.rel (0) target = $region5
    $region4: #{conv_encoder_forward.1} parent=1 // pred_region
      _
    $region5: #{conv_encoder_forward.1} parent=1 // pred_fallthru
      _
    // Predicated region
    $region6: #{conv_encoder_forward.1} parent=1 // pred_check
      _
    $region7: #{conv_encoder_forward.1} parent=1 // pred_check_branch
      %35 = sbr.rel (0) target = $region9
    $region8: #{conv_encoder_forward.1} parent=1 // pred_region
      %37 = vsyncadd [#allocation5], 0
      %s38 = sshll.u32 %s1, 4
      %s39 = int_to_ptr.hbm [resolvable:$true] %s38
      %s40 = sshll.u32 [#allocation4], 4
      %s41 = int_to_ptr.vmem [resolvable:$true] %s40
      %46 = dma.hbm_to_vmem [thread:$0]  %s39, 576, %s41, [#allocation5], 64, 64, 4
    $region9: #{conv_encoder_forward.1} parent=1 // pred_fallthru
      _
    // Predicated region
    $region10: #{conv_encoder_forward.1} parent=1 // pred_check
      _
    $region11: #{conv_encoder_forward.1} parent=1 // pred_check_branch
      %48 = sbr.rel (0) target = $region13
    $region12: #{conv_encoder_forward.1} parent=1 // pred_region
      _
    $region13: #{conv_encoder_forward.1} parent=1 // pred_fallthru
      _
    // Predicated region
    $region14: #{conv_encoder_forward.1} parent=1 // pred_check
      _
    $region15: #{conv_encoder_forward.1} parent=1 // pred_check_branch
      %50 = sbr.rel (0) target = $region17
    $region16: #{conv_encoder_forward.1} parent=1 // pred_region
      %52 = vsyncadd [#allocation8], 0
      %s53 = sshll.u32 %s3, 4
      %s54 = int_to_ptr.hbm [resolvable:$true] %s53
      %s55 = sshll.u32 [#allocation7], 4
      %s56 = int_to_ptr.vmem [resolvable:$true] %s55
      %61 = dma.hbm_to_vmem [thread:$0]  %s54, 80, %s56, [#allocation8], 16, 16, 1
    $region17: #{conv_encoder_forward.1} parent=1 // pred_fallthru
      _
    // Predicated region
    $region18: #{conv_encoder_forward.1} parent=1 // pred_check
      _
    $region19: #{conv_encoder_forward.1} parent=1 // pred_check_branch
      %63 = sbr.rel (0) target = $region21
    $region20: #{conv_encoder_forward.1} parent=1 // pred_region
      %65 = vsyncadd [#allocation8], 0
      %s66 = sshll.u32 %s4, 4
      %s67 = int_to_ptr.hbm [resolvable:$true] %s66
      %s68 = sshll.u32 [#allocation9], 4
      %s69 = int_to_ptr.vmem [resolvable:$true] %s68
      %74 = dma.hbm_to_vmem [thread:$0]  %s67, 128, %s69, [#allocation8], 64, 64, 4
    $region21: #{conv_encoder_forward.1} parent=1 // pred_fallthru
      _
    // Predicated region
    $region22: #{conv_encoder_forward.1} parent=1 // pred_check
      _
    $region23: #{conv_encoder_forward.1} parent=1 // pred_check_branch
      %76 = sbr.rel (0) target = $region25
    $region24: #{conv_encoder_forward.1} parent=1 // pred_region
      %78 = vsyncadd [#allocation11], 0
      %s80 = sshll.u32 %s5, 4
      %s81 = int_to_ptr.hbm [resolvable:$true] %s80
      %s82 = sshll.u32 [#allocation10], 4
      %s83 = int_to_ptr.vmem [resolvable:$true] %s82
      %85 = dma.hbm_to_vmem [thread:$0]  %s81, 16, %s83, [#allocation11]
    $region25: #{conv_encoder_forward.1} parent=1 // pred_fallthru
      _
    // Predicated region
    $region26: #{conv_encoder_forward.1} parent=1 // pred_check
      _
    $region27: #{conv_encoder_forward.1} parent=1 // pred_check_branch
      %87 = sbr.rel (0) target = $region29
    $region28: #{conv_encoder_forward.1} parent=1 // pred_region
      %89 = vsyncadd [#allocation11], 0
      %s91 = sshll.u32 %s6, 4
      %s92 = int_to_ptr.hbm [resolvable:$true] %s91
      %s93 = sshll.u32 [#allocation12], 4
      %s94 = int_to_ptr.vmem [resolvable:$true] %s93
      %96 = dma.hbm_to_vmem [thread:$0]  %s92, 16, %s94, [#allocation11]
    $region29: #{conv_encoder_forward.1} parent=1 // pred_fallthru
      _
    // Predicated region
    $region30: #{conv_encoder_forward.1} parent=1 // pred_check
      _
    $region31: #{conv_encoder_forward.1} parent=1 // pred_check_branch
      %98 = sbr.rel (0) target = $region33
    $region32: #{conv_encoder_forward.1} parent=1 // pred_region
      %100 = vsyncadd [#allocation14], 0
      %s101 = sshll.u32 %s7, 4
      %s102 = int_to_ptr.hbm [resolvable:$true] %s101
      %s103 = sshll.u32 [#allocation13], 4
      %s104 = int_to_ptr.vmem [resolvable:$true] %s103
      %109 = dma.hbm_to_vmem [thread:$0]  %s102, 1536, %s104, [#allocation14], 64, 64, 4
    $region33: #{conv_encoder_forward.1} parent=1 // pred_fallthru
      _
    // Predicated region
    $region34: #{conv_encoder_forward.1} parent=1 // pred_check
      _
    $region35: #{conv_encoder_forward.1} parent=1 // pred_check_branch
      %111 = sbr.rel (0) target = $region37
    $region36: #{conv_encoder_forward.1} parent=1 // pred_region
      %113 = vsyncadd [#allocation14], 0
      %s115 = sshll.u32 %s8, 4
      %s116 = int_to_ptr.hbm [resolvable:$true] %s115
      %s117 = sshll.u32 [#allocation15], 4
      %s118 = int_to_ptr.vmem [resolvable:$true] %s117
      %120 = dma.hbm_to_vmem [thread:$0]  %s116, 16, %s118, [#allocation14]
    $region37: #{conv_encoder_forward.1} parent=1 // pred_fallthru
      _
    // Predicated region
    $region38: #{conv_encoder_forward.1} parent=1 // pred_check
      _
    $region39: #{conv_encoder_forward.1} parent=1 // pred_check_branch
      %122 = sbr.rel (0) target = $region41
    $region40: #{conv_encoder_forward.1} parent=1 // pred_region
      %124 = vsyncadd [#allocation17], 0
      %s126 = sshll.u32 %s9, 4
      %s127 = int_to_ptr.hbm [resolvable:$true] %s126
      %s128 = sshll.u32 [#allocation16], 4
      %s129 = int_to_ptr.vmem [resolvable:$true] %s128
      %131 = dma.hbm_to_vmem [thread:$0]  %s127, 16, %s129, [#allocation17]
    $region41: #{conv_encoder_forward.1} parent=1 // pred_fallthru
      _
    // Predicated region
    $region42: #{conv_encoder_forward.1} parent=1 // pred_check
      _
    $region43: #{conv_encoder_forward.1} parent=1 // pred_check_branch
      %133 = sbr.rel (0) target = $region45
    $region44: #{conv_encoder_forward.1} parent=1 // pred_region
      %135 = vsyncadd [#allocation17], 0
      %s136 = sshll.u32 %s10, 4
      %s137 = int_to_ptr.hbm [resolvable:$true] %s136
      %s138 = sshll.u32 [#allocation18], 4
      %s139 = int_to_ptr.vmem [resolvable:$true] %s138
      %144 = dma.hbm_to_vmem [thread:$0]  %s137, 6144, %s139, [#allocation17], 128, 128, 8
    $region45: #{conv_encoder_forward.1} parent=1 // pred_fallthru
      _
    // Predicated region
    $region46: #{conv_encoder_forward.1} parent=1 // pred_check
      _
    $region47: #{conv_encoder_forward.1} parent=1 // pred_check_branch
      %146 = sbr.rel (0) target = $region49
    $region48: #{conv_encoder_forward.1} parent=1 // pred_region
      %148 = vsyncadd [#allocation20], 0
      %s150 = sshll.u32 %s11, 4
      %s151 = int_to_ptr.hbm [resolvable:$true] %s150
      %s152 = sshll.u32 [#allocation19], 4
      %s153 = int_to_ptr.vmem [resolvable:$true] %s152
      %155 = dma.hbm_to_vmem [thread:$0]  %s151, 32, %s153, [#allocation20]
    $region49: #{conv_encoder_forward.1} parent=1 // pred_fallthru
      _
    // Predicated region
    $region50: #{conv_encoder_forward.1} parent=1 // pred_check
      _
    $region51: #{conv_encoder_forward.1} parent=1 // pred_check_branch
      %157 = sbr.rel (0) target = $region53
    $region52: #{conv_encoder_forward.1} parent=1 // pred_region
      %159 = vsyncadd [#allocation20], 0
      %s161 = sshll.u32 %s12, 4
      %s162 = int_to_ptr.hbm [resolvable:$true] %s161
      %s163 = sshll.u32 [#allocation21], 4
      %s164 = int_to_ptr.vmem [resolvable:$true] %s163
      %166 = dma.hbm_to_vmem [thread:$0]  %s162, 32, %s164, [#allocation20]
    $region53: #{conv_encoder_forward.1} parent=1 // pred_fallthru
      _
    // Predicated region
    $region54: #{conv_encoder_forward.1} parent=1 // pred_check
      _
    $region55: #{conv_encoder_forward.1} parent=1 // pred_check_branch
      %168 = sbr.rel (0) target = $region57
    $region56: #{conv_encoder_forward.1} parent=1 // pred_region
      %170 = vsyncadd [#allocation23], 0
      %s172 = sshll.u32 %s13, 4
      %s173 = int_to_ptr.hbm [resolvable:$true] %s172
      %s174 = sshll.u32 [#allocation22], 4
      %s175 = int_to_ptr.vmem [resolvable:$true] %s174
      %177 = dma.hbm_to_vmem [thread:$0]  %s173, 64, %s175, [#allocation23]
    $region57: #{conv_encoder_forward.1} parent=1 // pred_fallthru
      _
    // Predicated region
    $region58: #{conv_encoder_forward.1} parent=1 // pred_check
      _
    $region59: #{conv_encoder_forward.1} parent=1 // pred_check_branch
      %179 = sbr.rel (0) target = $region61
    $region60: #{conv_encoder_forward.1} parent=1 // pred_region
      %181 = vsyncadd [#allocation23], 0
      %s183 = sshll.u32 %s14, 4
      %s184 = int_to_ptr.hbm [resolvable:$true] %s183
      %s185 = sshll.u32 [#allocation24], 4
      %s186 = int_to_ptr.vmem [resolvable:$true] %s185
      %188 = dma.hbm_to_vmem [thread:$0]  %s184, 64, %s186, [#allocation23]
    $region61: #{conv_encoder_forward.1} parent=1 // pred_fallthru
      _
    // Predicated region
    $region62: #{conv_encoder_forward.1} parent=1 // pred_check
      _
    $region63: #{conv_encoder_forward.1} parent=1 // pred_check_branch
      %190 = sbr.rel (0) target = $region65
    $region64: #{conv_encoder_forward.1} parent=1 // pred_region
      _
    $region65: #{conv_encoder_forward.1} parent=1 // pred_fallthru
      _
    // Predicated region
    $region66: #{conv_encoder_forward.1} parent=1 // pred_check
      _
    $region67: #{conv_encoder_forward.1} parent=1 // pred_check_branch
      %192 = sbr.rel (0) target = $region69
    $region68: #{conv_encoder_forward.1} parent=1 // pred_region
      %194 = vsyncadd [#allocation26], 0
      %s196 = sshll.u32 %s16, 4
      %s197 = int_to_ptr.hbm [resolvable:$true] %s196
      %s198 = sshll.u32 [#allocation25], 4
      %s199 = int_to_ptr.vmem [resolvable:$true] %s198
      %201 = dma.hbm_to_vmem [thread:$0]  %s197, 16, %s199, [#allocation26]
    $region69: #{conv_encoder_forward.1} parent=1 // pred_fallthru
      _
    // Predicated region
    $region70: #{conv_encoder_forward.1} parent=1 // pred_check
      _
    $region71: #{conv_encoder_forward.1} parent=1 // pred_check_branch
      %203 = sbr.rel (0) target = $region73
    $region72: #{conv_encoder_forward.1} parent=1 // pred_region
      %205 = dma.done [#allocation5], 576
    $region73: #{conv_encoder_forward.1} parent=1 // pred_fallthru
      _
    // Predicated region
    $region74: #{conv_encoder_forward.1} parent=1 // pred_check
      _
    $region75: #{conv_encoder_forward.1} parent=1 // pred_check_branch
      %207 = sbr.rel (0) target = $region77
    $region76: #{conv_encoder_forward.1} parent=1 // pred_region
      %209 = dma.done [#allocation8], 80
    $region77: #{conv_encoder_forward.1} parent=1 // pred_fallthru
      _
    // Predicated region
    $region78: #{conv_encoder_forward.1} parent=1 // pred_check
      _
    $region79: #{conv_encoder_forward.1} parent=1 // pred_check_branch
      %211 = sbr.rel (0) target = $region81
    $region80: #{conv_encoder_forward.1} parent=1 // pred_region
      %213 = dma.done [#allocation8], 128
    $region81: #{conv_encoder_forward.1} parent=1 // pred_fallthru
      _
    // Predicated region
    $region82: #{conv_encoder_forward.1} parent=1 // pred_check
      _
    $region83: #{conv_encoder_forward.1} parent=1 // pred_check_branch
      %215 = sbr.rel (0) target = $region85
    $region84: #{conv_encoder_forward.1} parent=1 // pred_region
      %217 = dma.done [#allocation11], 16
    $region85: #{conv_encoder_forward.1} parent=1 // pred_fallthru
      _
    // Predicated region
    $region86: #{conv_encoder_forward.1} parent=1 // pred_check
      _
    $region87: #{conv_encoder_forward.1} parent=1 // pred_check_branch
      %219 = sbr.rel (0) target = $region89
    $region88: #{conv_encoder_forward.1} parent=1 // pred_region
      %221 = dma.done [#allocation11], 16
    $region89: #{conv_encoder_forward.1} parent=1 // pred_fallthru
      _
    // Predicated region
    $region90: #{conv_encoder_forward.1} parent=1 // pred_check
      _
    $region91: #{conv_encoder_forward.1} parent=1 // pred_check_branch
      %223 = sbr.rel (0) target = $region93
    $region92: #{conv_encoder_forward.1} parent=1 // pred_region
      %225 = dma.done [#allocation14], 1536
    $region93: #{conv_encoder_forward.1} parent=1 // pred_fallthru
      _
    // Predicated region
    $region94: #{conv_encoder_forward.1} parent=1 // pred_check
      _
    $region95: #{conv_encoder_forward.1} parent=1 // pred_check_branch
      %227 = sbr.rel (0) target = $region97
    $region96: #{conv_encoder_forward.1} parent=1 // pred_region
      %229 = dma.done [#allocation14], 16
    $region97: #{conv_encoder_forward.1} parent=1 // pred_fallthru
      _
    // Predicated region
    $region98: #{conv_encoder_forward.1} parent=1 // pred_check
      _
    $region99: #{conv_encoder_forward.1} parent=1 // pred_check_branch
      %231 = sbr.rel (0) target = $region101
    $region100: #{conv_encoder_forward.1} parent=1 // pred_region
      %233 = dma.done [#allocation17], 16
    $region101: #{conv_encoder_forward.1} parent=1 // pred_fallthru
      _
    // Predicated region
    $region102: #{conv_encoder_forward.1} parent=1 // pred_check
      _
    $region103: #{conv_encoder_forward.1} parent=1 // pred_check_branch
      %235 = sbr.rel (0) target = $region105
    $region104: #{conv_encoder_forward.1} parent=1 // pred_region
      %237 = dma.done [#allocation17], 6144
    $region105: #{conv_encoder_forward.1} parent=1 // pred_fallthru
      _
    // Predicated region
    $region106: #{conv_encoder_forward.1} parent=1 // pred_check
      _
    $region107: #{conv_encoder_forward.1} parent=1 // pred_check_branch
      %239 = sbr.rel (0) target = $region109
    $region108: #{conv_encoder_forward.1} parent=1 // pred_region
      %241 = dma.done [#allocation20], 32
    $region109: #{conv_encoder_forward.1} parent=1 // pred_fallthru
      _
    // Predicated region
    $region110: #{conv_encoder_forward.1} parent=1 // pred_check
      _
    $region111: #{conv_encoder_forward.1} parent=1 // pred_check_branch
      %243 = sbr.rel (0) target = $region113
    $region112: #{conv_encoder_forward.1} parent=1 // pred_region
      %245 = dma.done [#allocation20], 32
    $region113: #{conv_encoder_forward.1} parent=1 // pred_fallthru
      _
    // Predicated region
    $region114: #{conv_encoder_forward.1} parent=1 // pred_check
      _
    $region115: #{conv_encoder_forward.1} parent=1 // pred_check_branch
      %247 = sbr.rel (0) target = $region117
    $region116: #{conv_encoder_forward.1} parent=1 // pred_region
      %249 = dma.done [#allocation23], 64
    $region117: #{conv_encoder_forward.1} parent=1 // pred_fallthru
      _
    // Predicated region
    $region118: #{conv_encoder_forward.1} parent=1 // pred_check
      _
    $region119: #{conv_encoder_forward.1} parent=1 // pred_check_branch
      %251 = sbr.rel (0) target = $region121
    $region120: #{conv_encoder_forward.1} parent=1 // pred_region
      %253 = dma.done [#allocation23], 64
    $region121: #{conv_encoder_forward.1} parent=1 // pred_fallthru
      _
    // Predicated region
    $region122: #{conv_encoder_forward.1} parent=1 // pred_check
      _
    $region123: #{conv_encoder_forward.1} parent=1 // pred_check_branch
      %255 = sbr.rel (0) target = $region125
    $region124: #{conv_encoder_forward.1} parent=1 // pred_region
      %257 = dma.done [#allocation26], 16
    $region125: #{conv_encoder_forward.1} parent=1 // pred_fallthru
      _
    // Predicated region
    $region126: #{conv_encoder_forward.1} parent=1 // pred_check
      _
    $region127: #{conv_encoder_forward.1} parent=1 // pred_check_branch
      %260 = sbr.rel target = $region129
    $region128: #{conv_encoder_forward.1} parent=1 // pred_region
      %261 = sst [smem:[#allocation30]] [#allocation29]
      %262 = sst [smem:[#allocation31]] [#allocation28]
    $region129: #{conv_encoder_forward.1} parent=1 // pred_fallthru
      _
    %264 = shalt.err (0)
    %s266 = sshll.u32 %s17, 4
    %s267 = int_to_ptr.hbm [resolvable:$true] %s266
    %s268 = sshll.u32 [#allocation2], 4
    %s269 = int_to_ptr.vmem [resolvable:$true] %s268
    %271 = dma.hbm_to_vmem [thread:$0]  %s267, 40960, %s269, [#allocation3]
    %v272 = vld [vmem:[%s0] sm:$0xf]
    %v273 = vld [vmem:[%s0 + $0x4] sm:$0xf]
    %v274 = vld [vmem:[%s0 + $0x8] sm:$0xf]
    %v275 = vld [vmem:[%s0 + $0xc] sm:$0xf]
    %v276 = vld [vmem:[%s0 + $0x10] sm:$0xf]
    %v277 = vld [vmem:[%s0 + $0x14] sm:$0xf]
    %v278 = vld [vmem:[%s0 + $0x18] sm:$0x1]
    %v279 = vld [vmem:[#allocation9] sm:$0xf]
    %v280 = vld [vmem:[#allocation9 + $0x4] sm:$0xf]
    %v288 = vunpack.c.l.b16 %v272
    %v289 = vunpack.c.l.b16 %v273
    %v290 = vunpack.c.l.b16 %v274
    %v291 = vunpack.c.l.b16 %v275
    %v292 = vunpack.c.l.b16 %v276
    %v293 = vunpack.c.l.b16 %v277
    %v294 = vunpack.c.l.b16 %v278
    %v295 = vpack.c.b16 %v289, %v288
    %v296 = vpack.c.b16 %v291, %v290
    %v297 = vpack.c.b16 %v293, %v292
    %v298 = vpack.c.b16 %v294, %v294
    %v301 = vunpack.c.l.b16 %v279
    %v302 = vunpack.c.l.b16 %v280
    %v303 = vpack.c.b16 %v302, %v301
    %vm305 = vcmask 130048
    %v307 = vsel %vm305, %v295, 0
    %v310 = vsel %vm305, %v296, 0
    %v313 = vsel %vm305, %v297, 0
    %v316 = vsel %vm305, %v298, 0
    %318 = vmatpush.bf16.msra.mxu0 0
    %319 = vmatpush.bf16.msra.mxu0 0
    %320 = vmatpush.bf16.msra.mxu0 0
    %321 = vmatpush.bf16.msra.mxu0 0
    %322 = vmatpush.bf16.msra.mxu0 0
    %323 = vmatpush.bf16.msra.mxu0 0
    %324 = vmatpush.bf16.msra.mxu0 0
    %325 = vmatpush.bf16.msra.mxu0 %v303
    %326 = vmatmul.bf16.gmra.mxu0 %v307
    %v327 = vpop.f32.mrf.mxu0
    %v328 = vadd.f32 0.0, %v327
    %v329 = vpop.f32.mrf.mxu0
    %v330 = vadd.f32 0.0, %v329
    %331 = vmatmul.bf16.gmra.mxu0 %v310
    %v332 = vpop.f32.mrf.mxu0
    %v333 = vadd.f32 0.0, %v332
    %v334 = vpop.f32.mrf.mxu0
    %v335 = vadd.f32 0.0, %v334
    %336 = vmatmul.bf16.gmra.mxu0 %v313
    %v337 = vpop.f32.mrf.mxu0
    %v338 = vadd.f32 0.0, %v337
    %v339 = vpop.f32.mrf.mxu0
    %v340 = vadd.f32 0.0, %v339
    %341 = vmatmul.bf16.gmra.mxu0 %v316
    %v342 = vpop.f32.mrf.mxu0
    %v343 = vadd.f32 0.0, %v342
    %v344 = vpop.f32.mrf.mxu0
    %345 = vdwg.mxu0
    %v346 = vld [vmem:[#allocation10] sm:$0x1]
    %v348 = vperm.slane %v346, 0
    %v350 = vmul.f32 %v328, %v348
    %v351 = vmul.f32 %v330, %v348
    %v352 = vmul.f32 %v333, %v348
    %v353 = vmul.f32 %v335, %v348
    %v354 = vmul.f32 %v338, %v348
    %v355 = vmul.f32 %v340, %v348
    %v356 = vmul.f32 %v343, %v348
    %v357 = vld [vmem:[#allocation12] sm:$0x1]
    %v359 = vperm.slane %v357, 0
    %v361 = vadd.f32 %v350, %v359
    %v362 = vadd.f32 %v351, %v359
    %v363 = vadd.f32 %v352, %v359
    %v364 = vadd.f32 %v353, %v359
    %v365 = vadd.f32 %v354, %v359
    %v366 = vadd.f32 %v355, %v359
    %v367 = vadd.f32 %v356, %v359
    %v368 = vmax.f32 %v361, 0.0
    %v369 = vmax.f32 %v362, 0.0
    %v370 = vmax.f32 %v363, 0.0
    %v371 = vmax.f32 %v364, 0.0
    %v372 = vmax.f32 %v365, 0.0
    %v373 = vmax.f32 %v366, 0.0
    %v374 = vmax.f32 %v367, 0.0
    %v375 = vpack.c.bf16 %v369, %v368
    %v376 = vpack.c.bf16 %v371, %v370
    %v377 = vpack.c.bf16 %v373, %v372
    %v378 = vpack.c.bf16 %v374, %v374
    %v379 = vld [vmem:[#allocation4] sm:$0xf]
    %v380 = vld [vmem:[#allocation4 + $0x4] sm:$0xf]
    %v381 = vld [vmem:[#allocation4 + $0x8] sm:$0xf]
    %v385 = vunpack.c.l.b16 %v379
    %v386 = vunpack.c.l.b16 %v380
    %v387 = vunpack.c.l.b16 %v381
    %v388 = vpack.c.b16 %v386, %v385
    %v389 = vpack.c.b16 %v387, %v387
    %vm390 = vcmask 408576
    %v392 = vsel %vm390, %v388, 0
    %v395 = vsel %vm390, %v389, 0
    %vm397 = vcmask 1040384
    %v399 = vsel %vm397, %v378, 0
    %401 = vmatpush.bf16.msra.mxu0 0
    %402 = vmatpush.bf16.msra.mxu0 0
    %403 = vmatpush.bf16.msra.mxu0 0
    %404 = vmatpush.bf16.msra.mxu0 0
    %405 = vmatpush.bf16.msra.mxu0 %v399
    %406 = vmatpush.bf16.msra.mxu0 %v377
    %407 = vmatpush.bf16.msra.mxu0 %v376
    %408 = vmatpush.bf16.msra.mxu0 %v375
    %409 = vmatmul.bf16.gmra.mxu0 %v392
    %v410 = vpop.f32.mrf.mxu0
    %v411 = vadd.f32 0.0, %v410
    %v412 = vpop.f32.mrf.mxu0
    %v413 = vadd.f32 0.0, %v412
    %414 = vmatmul.bf16.gmra.mxu0 %v395
    %v415 = vpop.f32.mrf.mxu0
    %v416 = vadd.f32 0.0, %v415
    %v417 = vpop.f32.mrf.mxu0
    %418 = vdwg.mxu0
    %v419 = vpack.c.bf16 %v413, %v411
    %v420 = vpack.c.bf16 %v416, %v416
    %v421 = vld [vmem:[#allocation13] sm:$0xf]
    %v422 = vld [vmem:[#allocation13 + $0x4] sm:$0xf]
    %v423 = vld [vmem:[#allocation13 + $0x8] sm:$0xf]
    %v424 = vld [vmem:[#allocation13 + $0xc] sm:$0xf]
    %v425 = vld [vmem:[#allocation13 + $0x10] sm:$0xf]
    %v426 = vld [vmem:[#allocation13 + $0x14] sm:$0xf]
    %v427 = vld [vmem:[#allocation13 + $0x18] sm:$0xf]
    %v428 = vld [vmem:[#allocation13 + $0x1c] sm:$0xf]
    %s429 = scalar_lea.vmem [#allocation4], 12
    %v430 = vld [vmem:[%s429] sm:$0xf]
    %v431 = vld [vmem:[%s429 + $0x4] sm:$0xf]
    %v432 = vld [vmem:[%s429 + $0x8] sm:$0xf]
    %v436 = vunpack.c.l.b16 %v430
    %v437 = vunpack.c.l.b16 %v431
    %v438 = vunpack.c.l.b16 %v432
    %v439 = vpack.c.b16 %v437, %v436
    %v440 = vpack.c.b16 %v438, %v438
    %v442 = vsel %vm390, %v439, 0
    %v445 = vsel %vm390, %v440, 0
    %447 = vmatpush.bf16.msra.mxu0 0
    %448 = vmatpush.bf16.msra.mxu0 0
    %449 = vmatpush.bf16.msra.mxu0 0
    %450 = vmatpush.bf16.msra.mxu0 0
    %451 = vmatpush.bf16.msra.mxu0 %v399
    %452 = vmatpush.bf16.msra.mxu0 %v377
    %453 = vmatpush.bf16.msra.mxu0 %v376
    %454 = vmatpush.bf16.msra.mxu0 %v375
    %455 = vmatmul.bf16.gmra.mxu0 %v442
    %v456 = vpop.f32.mrf.mxu0
    %v457 = vadd.f32 0.0, %v456
    %v458 = vpop.f32.mrf.mxu0
    %v459 = vadd.f32 0.0, %v458
    %460 = vmatmul.bf16.gmra.mxu0 %v445
    %v461 = vpop.f32.mrf.mxu0
    %v462 = vadd.f32 0.0, %v461
    %v463 = vpop.f32.mrf.mxu0
    %464 = vdwg.mxu0
    %v465 = vpack.c.bf16 %v459, %v457
    %v466 = vpack.c.bf16 %v462, %v462
    %v467 = vld [vmem:[#allocation13 + $0x20] sm:$0xf]
    %v468 = vld [vmem:[#allocation13 + $0x24] sm:$0xf]
    %v469 = vld [vmem:[#allocation13 + $0x28] sm:$0xf]
    %v470 = vld [vmem:[#allocation13 + $0x2c] sm:$0xf]
    %v471 = vld [vmem:[#allocation13 + $0x30] sm:$0xf]
    %v472 = vld [vmem:[#allocation13 + $0x34] sm:$0xf]
    %v473 = vld [vmem:[#allocation13 + $0x38] sm:$0xf]
    %v474 = vld [vmem:[#allocation13 + $0x3c] sm:$0xf]
    %v483 = vunpack.c.l.b16 %v467
    %v484 = vunpack.c.l.b16 %v468
    %v485 = vunpack.c.l.b16 %v469
    %v486 = vunpack.c.l.b16 %v470
    %v487 = vunpack.c.l.b16 %v471
    %v488 = vunpack.c.l.b16 %v472
    %v489 = vunpack.c.l.b16 %v473
    %v490 = vunpack.c.l.b16 %v474
    %v491 = vpack.c.b16 %v484, %v483
    %v492 = vpack.c.b16 %v486, %v485
    %v493 = vpack.c.b16 %v488, %v487
    %v494 = vpack.c.b16 %v490, %v489
    %vm499 = vcmask 523264
    %v501 = vsel %vm499, %v465, 0
    %v504 = vsel %vm499, %v466, 0
    %506 = vmatpush.bf16.msra.mxu0 0
    %507 = vmatpush.bf16.msra.mxu0 0
    %508 = vmatpush.bf16.msra.mxu0 0
    %509 = vmatpush.bf16.msra.mxu0 0
    %510 = vmatpush.bf16.msra.mxu0 %v494
    %511 = vmatpush.bf16.msra.mxu0 %v493
    %512 = vmatpush.bf16.msra.mxu0 %v492
    %513 = vmatpush.bf16.msra.mxu0 %v491
    %514 = vmatmul.bf16.gmra.mxu0 %v501
    %v515 = vpop.f32.mrf.mxu0
    %v516 = vadd.f32 0.0, %v515
    %v517 = vpop.f32.mrf.mxu0
    %v518 = vadd.f32 0.0, %v517
    %519 = vmatmul.bf16.gmra.mxu0 %v504
    %v520 = vpop.f32.mrf.mxu0
    %v521 = vadd.f32 0.0, %v520
    %v522 = vpop.f32.mrf.mxu0
    %523 = vdwg.mxu0
    %v532 = vunpack.c.l.b16 %v421
    %v533 = vunpack.c.l.b16 %v422
    %v534 = vunpack.c.l.b16 %v423
    %v535 = vunpack.c.l.b16 %v424
    %v536 = vunpack.c.l.b16 %v425
    %v537 = vunpack.c.l.b16 %v426
    %v538 = vunpack.c.l.b16 %v427
    %v539 = vunpack.c.l.b16 %v428
    %v540 = vpack.c.b16 %v533, %v532
    %v541 = vpack.c.b16 %v535, %v534
    %v542 = vpack.c.b16 %v537, %v536
    %v543 = vpack.c.b16 %v539, %v538
    %v549 = vsel %vm499, %v419, 0
    %v552 = vsel %vm499, %v420, 0
    %554 = vmatpush.bf16.msra.mxu0 0
    %555 = vmatpush.bf16.msra.mxu0 0
    %556 = vmatpush.bf16.msra.mxu0 0
    %557 = vmatpush.bf16.msra.mxu0 0
    %558 = vmatpush.bf16.msra.mxu0 %v543
    %559 = vmatpush.bf16.msra.mxu0 %v542
    %560 = vmatpush.bf16.msra.mxu0 %v541
    %561 = vmatpush.bf16.msra.mxu0 %v540
    %562 = vmatmul.bf16.gmra.mxu0 %v549
    %v563 = vpop.f32.mrf.mxu0
    %v564 = vadd.f32 %v516, %v563
    %v565 = vpop.f32.mrf.mxu0
    %v566 = vadd.f32 %v518, %v565
    %567 = vmatmul.bf16.gmra.mxu0 %v552
    %v568 = vpop.f32.mrf.mxu0
    %v569 = vadd.f32 %v521, %v568
    %v570 = vpop.f32.mrf.mxu0
    %571 = vdwg.mxu0
    %s572 = scalar_lea.vmem [#allocation4], 24
    %v573 = vld [vmem:[%s572] sm:$0xf]
    %v574 = vld [vmem:[%s572 + $0x4] sm:$0xf]
    %v575 = vld [vmem:[%s572 + $0x8] sm:$0xf]
    %v579 = vunpack.c.l.b16 %v573
    %v580 = vunpack.c.l.b16 %v574
    %v581 = vunpack.c.l.b16 %v575
    %v582 = vpack.c.b16 %v580, %v579
    %v583 = vpack.c.b16 %v581, %v581
    %v585 = vsel %vm390, %v582, 0
    %v588 = vsel %vm390, %v583, 0
    %590 = vmatpush.bf16.msra.mxu0 0
    %591 = vmatpush.bf16.msra.mxu0 0
    %592 = vmatpush.bf16.msra.mxu0 0
    %593 = vmatpush.bf16.msra.mxu0 0
    %594 = vmatpush.bf16.msra.mxu0 %v399
    %595 = vmatpush.bf16.msra.mxu0 %v377
    %596 = vmatpush.bf16.msra.mxu0 %v376
    %597 = vmatpush.bf16.msra.mxu0 %v375
    %598 = vmatmul.bf16.gmra.mxu0 %v585
    %v599 = vpop.f32.mrf.mxu0
    %v600 = vadd.f32 0.0, %v599
    %v601 = vpop.f32.mrf.mxu0
    %v602 = vadd.f32 0.0, %v601
    %603 = vmatmul.bf16.gmra.mxu0 %v588
    %v604 = vpop.f32.mrf.mxu0
    %v605 = vadd.f32 0.0, %v604
    %v606 = vpop.f32.mrf.mxu0
    %607 = vdwg.mxu0
    %v608 = vpack.c.bf16 %v602, %v600
    %v609 = vpack.c.bf16 %v605, %v605
    %v610 = vld [vmem:[#allocation13 + $0x40] sm:$0xf]
    %v611 = vld [vmem:[#allocation13 + $0x44] sm:$0xf]
    %v612 = vld [vmem:[#allocation13 + $0x48] sm:$0xf]
    %v613 = vld [vmem:[#allocation13 + $0x4c] sm:$0xf]
    %v614 = vld [vmem:[#allocation13 + $0x50] sm:$0xf]
    %v615 = vld [vmem:[#allocation13 + $0x54] sm:$0xf]
    %v616 = vld [vmem:[#allocation13 + $0x58] sm:$0xf]
    %v617 = vld [vmem:[#allocation13 + $0x5c] sm:$0xf]
    %v626 = vunpack.c.l.b16 %v610
    %v627 = vunpack.c.l.b16 %v611
    %v628 = vunpack.c.l.b16 %v612
    %v629 = vunpack.c.l.b16 %v613
    %v630 = vunpack.c.l.b16 %v614
    %v631 = vunpack.c.l.b16 %v615
    %v632 = vunpack.c.l.b16 %v616
    %v633 = vunpack.c.l.b16 %v617
    %v634 = vpack.c.b16 %v627, %v626
    %v635 = vpack.c.b16 %v629, %v628
    %v636 = vpack.c.b16 %v631, %v630
    %v637 = vpack.c.b16 %v633, %v632
    %v643 = vsel %vm499, %v608, 0
    %v646 = vsel %vm499, %v609, 0
    %648 = vmatpush.bf16.msra.mxu0 0
    %649 = vmatpush.bf16.msra.mxu0 0
    %650 = vmatpush.bf16.msra.mxu0 0
    %651 = vmatpush.bf16.msra.mxu0 0
    %652 = vmatpush.bf16.msra.mxu0 %v637
    %653 = vmatpush.bf16.msra.mxu0 %v636
    %654 = vmatpush.bf16.msra.mxu0 %v635
    %655 = vmatpush.bf16.msra.mxu0 %v634
    %656 = vmatmul.bf16.gmra.mxu0 %v643
    %v657 = vpop.f32.mrf.mxu0
    %v658 = vadd.f32 0.0, %v657
    %v659 = vpop.f32.mrf.mxu0
    %v660 = vadd.f32 0.0, %v659
    %661 = vmatmul.bf16.gmra.mxu0 %v646
    %v662 = vpop.f32.mrf.mxu0
    %v663 = vadd.f32 0.0, %v662
    %v664 = vpop.f32.mrf.mxu0
    %665 = vdwg.mxu0
    %v666 = vadd.f32 %v564, %v658
    %v667 = vadd.f32 %v566, %v660
    %v668 = vadd.f32 %v569, %v663
    %v669 = vld [vmem:[#allocation15] sm:$0x1]
    %v671 = vperm.slane %v669, 0
    %v673 = vmul.f32 %v666, %v671
    %v674 = vmul.f32 %v667, %v671
    %v675 = vmul.f32 %v668, %v671
    %v676 = vld [vmem:[#allocation16] sm:$0x1]
    %v678 = vperm.slane %v676, 0
    %v680 = vadd.f32 %v673, %v678
    %v681 = vadd.f32 %v674, %v678
    %v682 = vadd.f32 %v675, %v678
    %v683 = vmax.f32 %v680, 0.0
    %v684 = vmax.f32 %v681, 0.0
    %v685 = vmax.f32 %v682, 0.0
    %v686 = vpack.c.bf16 %v684, %v683
    %v687 = vpack.c.bf16 %v685, %v685
    %v688 = vld [vmem:[%s2] sm:$0xf]
    %v689 = vld [vmem:[%s2 + $0x4] sm:$0x1]
    %v692 = vunpack.c.l.b16 %v688
    %v693 = vunpack.c.l.b16 %v689
    %v694 = vpack.c.b16 %v693, %v692
    %vm695 = vcmask 195584
    %v697 = vsel %vm695, %v694, 0
    %vm699 = vcmask 1043456
    %v701 = vsel %vm699, %v687, 0
    %703 = vmatpush.bf16.msra.mxu0 0
    %704 = vmatpush.bf16.msra.mxu0 0
    %705 = vmatpush.bf16.msra.mxu0 0
    %706 = vmatpush.bf16.msra.mxu0 0
    %707 = vmatpush.bf16.msra.mxu0 0
    %708 = vmatpush.bf16.msra.mxu0 0
    %709 = vmatpush.bf16.msra.mxu0 %v701
    %710 = vmatpush.bf16.msra.mxu0 %v686
    %711 = vmatmul.bf16.gmra.mxu0 %v697
    %v712 = vpop.f32.mrf.mxu0
    %v713 = vadd.f32 0.0, %v712
    %v714 = vpop.f32.mrf.mxu0
    %v715 = vadd.f32 0.0, %v714
    %716 = vdwg.mxu0
    %v717 = vpack.c.bf16 %v715, %v713
    %v718 = vld [vmem:[#allocation18] sm:$0xff]
    %v719 = vld [vmem:[#allocation18 + $0x8] sm:$0xff]
    %v720 = vld [vmem:[#allocation18 + $0x10] sm:$0xff]
    %v721 = vld [vmem:[#allocation18 + $0x18] sm:$0xff]
    %v722 = vld [vmem:[#allocation18 + $0x20] sm:$0xff]
    %v723 = vld [vmem:[#allocation18 + $0x28] sm:$0xff]
    %v724 = vld [vmem:[#allocation18 + $0x30] sm:$0xff]
    %v725 = vld [vmem:[#allocation18 + $0x38] sm:$0xff]
    %v726 = vld [vmem:[#allocation18 + $0x40] sm:$0xff]
    %v727 = vld [vmem:[#allocation18 + $0x48] sm:$0xff]
    %v728 = vld [vmem:[#allocation18 + $0x50] sm:$0xff]
    %v729 = vld [vmem:[#allocation18 + $0x58] sm:$0xff]
    %v730 = vld [vmem:[#allocation18 + $0x60] sm:$0xff]
    %v731 = vld [vmem:[#allocation18 + $0x68] sm:$0xff]
    %v732 = vld [vmem:[#allocation18 + $0x70] sm:$0xff]
    %v733 = vld [vmem:[#allocation18 + $0x78] sm:$0xff]
    %s734 = scalar_lea.vmem %s2, 8
    %v735 = vld [vmem:[%s734] sm:$0xf]
    %v736 = vld [vmem:[%s734 + $0x4] sm:$0x1]
    %v739 = vunpack.c.l.b16 %v735
    %v740 = vunpack.c.l.b16 %v736
    %v741 = vpack.c.b16 %v740, %v739
    %v743 = vsel %vm695, %v741, 0
    %745 = vmatpush.bf16.msra.mxu0 0
    %746 = vmatpush.bf16.msra.mxu0 0
    %747 = vmatpush.bf16.msra.mxu0 0
    %748 = vmatpush.bf16.msra.mxu0 0
    %749 = vmatpush.bf16.msra.mxu0 0
    %750 = vmatpush.bf16.msra.mxu0 0
    %751 = vmatpush.bf16.msra.mxu0 %v701
    %752 = vmatpush.bf16.msra.mxu0 %v686
    %753 = vmatmul.bf16.gmra.mxu0 %v743
    %v754 = vpop.f32.mrf.mxu0
    %v755 = vadd.f32 0.0, %v754
    %v756 = vpop.f32.mrf.mxu0
    %v757 = vadd.f32 0.0, %v756
    %758 = vdwg.mxu0
    %v759 = vpack.c.bf16 %v757, %v755
    %v760 = vld [vmem:[#allocation18 + $0x80] sm:$0xff]
    %v761 = vld [vmem:[#allocation18 + $0x88] sm:$0xff]
    %v762 = vld [vmem:[#allocation18 + $0x90] sm:$0xff]
    %v763 = vld [vmem:[#allocation18 + $0x98] sm:$0xff]
    %v764 = vld [vmem:[#allocation18 + $0xa0] sm:$0xff]
    %v765 = vld [vmem:[#allocation18 + $0xa8] sm:$0xff]
    %v766 = vld [vmem:[#allocation18 + $0xb0] sm:$0xff]
    %v767 = vld [vmem:[#allocation18 + $0xb8] sm:$0xff]
    %v768 = vld [vmem:[#allocation18 + $0xc0] sm:$0xff]
    %v769 = vld [vmem:[#allocation18 + $0xc8] sm:$0xff]
    %v770 = vld [vmem:[#allocation18 + $0xd0] sm:$0xff]
    %v771 = vld [vmem:[#allocation18 + $0xd8] sm:$0xff]
    %v772 = vld [vmem:[#allocation18 + $0xe0] sm:$0xff]
    %v773 = vld [vmem:[#allocation18 + $0xe8] sm:$0xff]
    %v774 = vld [vmem:[#allocation18 + $0xf0] sm:$0xff]
    %v775 = vld [vmem:[#allocation18 + $0xf8] sm:$0xff]
    %v792 = vunpack.c.l.b16 %v760
    %v793 = vunpack.c.h.b16 %v760
    %v794 = vunpack.c.l.b16 %v761
    %v795 = vunpack.c.h.b16 %v761
    %v796 = vunpack.c.l.b16 %v762
    %v797 = vunpack.c.h.b16 %v762
    %v798 = vunpack.c.l.b16 %v763
    %v799 = vunpack.c.h.b16 %v763
    %v800 = vunpack.c.l.b16 %v764
    %v801 = vunpack.c.h.b16 %v764
    %v802 = vunpack.c.l.b16 %v765
    %v803 = vunpack.c.h.b16 %v765
    %v804 = vunpack.c.l.b16 %v766
    %v805 = vunpack.c.h.b16 %v766
    %v806 = vunpack.c.l.b16 %v767
    %v807 = vunpack.c.h.b16 %v767
    %v808 = vunpack.c.l.b16 %v768
    %v809 = vunpack.c.h.b16 %v768
    %v810 = vunpack.c.l.b16 %v769
    %v811 = vunpack.c.h.b16 %v769
    %v812 = vunpack.c.l.b16 %v770
    %v813 = vunpack.c.h.b16 %v770
    %v814 = vunpack.c.l.b16 %v771
    %v815 = vunpack.c.h.b16 %v771
    %v816 = vunpack.c.l.b16 %v772
    %v817 = vunpack.c.h.b16 %v772
    %v818 = vunpack.c.l.b16 %v773
    %v819 = vunpack.c.h.b16 %v773
    %v820 = vunpack.c.l.b16 %v774
    %v821 = vunpack.c.h.b16 %v774
    %v822 = vunpack.c.l.b16 %v775
    %v823 = vunpack.c.h.b16 %v775
    %v824 = vpack.c.b16 %v794, %v792
    %v825 = vpack.c.b16 %v795, %v793
    %v826 = vpack.c.b16 %v798, %v796
    %v827 = vpack.c.b16 %v799, %v797
    %v828 = vpack.c.b16 %v802, %v800
    %v829 = vpack.c.b16 %v803, %v801
    %v830 = vpack.c.b16 %v806, %v804
    %v831 = vpack.c.b16 %v807, %v805
    %v832 = vpack.c.b16 %v810, %v808
    %v833 = vpack.c.b16 %v811, %v809
    %v834 = vpack.c.b16 %v814, %v812
    %v835 = vpack.c.b16 %v815, %v813
    %v836 = vpack.c.b16 %v818, %v816
    %v837 = vpack.c.b16 %v819, %v817
    %v838 = vpack.c.b16 %v822, %v820
    %v839 = vpack.c.b16 %v823, %v821
    %856 = vmatpush.bf16.msra.mxu0 %v838
    %857 = vmatpush.bf16.msra.mxu0 %v836
    %858 = vmatpush.bf16.msra.mxu0 %v834
    %859 = vmatpush.bf16.msra.mxu0 %v832
    %860 = vmatpush.bf16.msra.mxu0 %v830
    %861 = vmatpush.bf16.msra.mxu0 %v828
    %862 = vmatpush.bf16.msra.mxu0 %v826
    %863 = vmatpush.bf16.msra.mxu0 %v824
    %864 = vmatmul.bf16.gmra.mxu0 %v759
    %v865 = vpop.f32.mrf.mxu0
    %v866 = vadd.f32 0.0, %v865
    %v867 = vpop.f32.mrf.mxu0
    %v868 = vadd.f32 0.0, %v867
    %869 = vdwg.mxu0
    %870 = vmatpush.bf16.msra.mxu0 %v839
    %871 = vmatpush.bf16.msra.mxu0 %v837
    %872 = vmatpush.bf16.msra.mxu0 %v835
    %873 = vmatpush.bf16.msra.mxu0 %v833
    %874 = vmatpush.bf16.msra.mxu0 %v831
    %875 = vmatpush.bf16.msra.mxu0 %v829
    %876 = vmatpush.bf16.msra.mxu0 %v827
    %877 = vmatpush.bf16.msra.mxu0 %v825
    %878 = vmatmul.bf16.gmra.mxu0 %v759
    %v879 = vpop.f32.mrf.mxu0
    %v880 = vadd.f32 0.0, %v879
    %v881 = vpop.f32.mrf.mxu0
    %v882 = vadd.f32 0.0, %v881
    %883 = vdwg.mxu0
    %v900 = vunpack.c.l.b16 %v718
    %v901 = vunpack.c.h.b16 %v718
    %v902 = vunpack.c.l.b16 %v719
    %v903 = vunpack.c.h.b16 %v719
    %v904 = vunpack.c.l.b16 %v720
    %v905 = vunpack.c.h.b16 %v720
    %v906 = vunpack.c.l.b16 %v721
    %v907 = vunpack.c.h.b16 %v721
    %v908 = vunpack.c.l.b16 %v722
    %v909 = vunpack.c.h.b16 %v722
    %v910 = vunpack.c.l.b16 %v723
    %v911 = vunpack.c.h.b16 %v723
    %v912 = vunpack.c.l.b16 %v724
    %v913 = vunpack.c.h.b16 %v724
    %v914 = vunpack.c.l.b16 %v725
    %v915 = vunpack.c.h.b16 %v725
    %v916 = vunpack.c.l.b16 %v726
    %v917 = vunpack.c.h.b16 %v726
    %v918 = vunpack.c.l.b16 %v727
    %v919 = vunpack.c.h.b16 %v727
    %v920 = vunpack.c.l.b16 %v728
    %v921 = vunpack.c.h.b16 %v728
    %v922 = vunpack.c.l.b16 %v729
    %v923 = vunpack.c.h.b16 %v729
    %v924 = vunpack.c.l.b16 %v730
    %v925 = vunpack.c.h.b16 %v730
    %v926 = vunpack.c.l.b16 %v731
    %v927 = vunpack.c.h.b16 %v731
    %v928 = vunpack.c.l.b16 %v732
    %v929 = vunpack.c.h.b16 %v732
    %v930 = vunpack.c.l.b16 %v733
    %v931 = vunpack.c.h.b16 %v733
    %v932 = vpack.c.b16 %v902, %v900
    %v933 = vpack.c.b16 %v903, %v901
    %v934 = vpack.c.b16 %v906, %v904
    %v935 = vpack.c.b16 %v907, %v905
    %v936 = vpack.c.b16 %v910, %v908
    %v937 = vpack.c.b16 %v911, %v909
    %v938 = vpack.c.b16 %v914, %v912
    %v939 = vpack.c.b16 %v915, %v913
    %v940 = vpack.c.b16 %v918, %v916
    %v941 = vpack.c.b16 %v919, %v917
    %v942 = vpack.c.b16 %v922, %v920
    %v943 = vpack.c.b16 %v923, %v921
    %v944 = vpack.c.b16 %v926, %v924
    %v945 = vpack.c.b16 %v927, %v925
    %v946 = vpack.c.b16 %v930, %v928
    %v947 = vpack.c.b16 %v931, %v929
    %964 = vmatpush.bf16.msra.mxu0 %v946
    %965 = vmatpush.bf16.msra.mxu0 %v944
    %966 = vmatpush.bf16.msra.mxu0 %v942
    %967 = vmatpush.bf16.msra.mxu0 %v940
    %968 = vmatpush.bf16.msra.mxu0 %v938
    %969 = vmatpush.bf16.msra.mxu0 %v936
    %970 = vmatpush.bf16.msra.mxu0 %v934
    %971 = vmatpush.bf16.msra.mxu0 %v932
    %972 = vmatmul.bf16.gmra.mxu0 %v717
    %v973 = vpop.f32.mrf.mxu0
    %v974 = vadd.f32 %v866, %v973
    %v975 = vpop.f32.mrf.mxu0
    %v976 = vadd.f32 %v868, %v975
    %977 = vdwg.mxu0
    %978 = vmatpush.bf16.msra.mxu0 %v947
    %979 = vmatpush.bf16.msra.mxu0 %v945
    %980 = vmatpush.bf16.msra.mxu0 %v943
    %981 = vmatpush.bf16.msra.mxu0 %v941
    %982 = vmatpush.bf16.msra.mxu0 %v939
    %983 = vmatpush.bf16.msra.mxu0 %v937
    %984 = vmatpush.bf16.msra.mxu0 %v935
    %985 = vmatpush.bf16.msra.mxu0 %v933
    %986 = vmatmul.bf16.gmra.mxu0 %v717
    %v987 = vpop.f32.mrf.mxu0
    %v988 = vadd.f32 %v880, %v987
    %v989 = vpop.f32.mrf.mxu0
    %v990 = vadd.f32 %v882, %v989
    %991 = vdwg.mxu0
    %s992 = scalar_lea.vmem %s2, 16
    %v993 = vld [vmem:[%s992] sm:$0xf]
    %v994 = vld [vmem:[%s992 + $0x4] sm:$0x1]
    %v997 = vunpack.c.l.b16 %v993
    %v998 = vunpack.c.l.b16 %v994
    %v999 = vpack.c.b16 %v998, %v997
    %v1001 = vsel %vm695, %v999, 0
    %1003 = vmatpush.bf16.msra.mxu0 0
    %1004 = vmatpush.bf16.msra.mxu0 0
    %1005 = vmatpush.bf16.msra.mxu0 0
    %1006 = vmatpush.bf16.msra.mxu0 0
    %1007 = vmatpush.bf16.msra.mxu0 0
    %1008 = vmatpush.bf16.msra.mxu0 0
    %1009 = vmatpush.bf16.msra.mxu0 %v701
    %1010 = vmatpush.bf16.msra.mxu0 %v686
    %1011 = vmatmul.bf16.gmra.mxu0 %v1001
    %v1012 = vpop.f32.mrf.mxu0
    %v1013 = vadd.f32 0.0, %v1012
    %v1014 = vpop.f32.mrf.mxu0
    %v1015 = vadd.f32 0.0, %v1014
    %1016 = vdwg.mxu0
    %v1017 = vpack.c.bf16 %v1015, %v1013
    %v1018 = vld [vmem:[#allocation18 + $0x100] sm:$0xff]
    %v1019 = vld [vmem:[#allocation18 + $0x108] sm:$0xff]
    %v1020 = vld [vmem:[#allocation18 + $0x110] sm:$0xff]
    %v1021 = vld [vmem:[#allocation18 + $0x118] sm:$0xff]
    %v1022 = vld [vmem:[#allocation18 + $0x120] sm:$0xff]
    %v1023 = vld [vmem:[#allocation18 + $0x128] sm:$0xff]
    %v1024 = vld [vmem:[#allocation18 + $0x130] sm:$0xff]
    %v1025 = vld [vmem:[#allocation18 + $0x138] sm:$0xff]
    %v1026 = vld [vmem:[#allocation18 + $0x140] sm:$0xff]
    %v1027 = vld [vmem:[#allocation18 + $0x148] sm:$0xff]
    %v1028 = vld [vmem:[#allocation18 + $0x150] sm:$0xff]
    %v1029 = vld [vmem:[#allocation18 + $0x158] sm:$0xff]
    %v1030 = vld [vmem:[#allocation18 + $0x160] sm:$0xff]
    %v1031 = vld [vmem:[#allocation18 + $0x168] sm:$0xff]
    %v1032 = vld [vmem:[#allocation18 + $0x170] sm:$0xff]
    %v1033 = vld [vmem:[#allocation18 + $0x178] sm:$0xff]
    %v1050 = vunpack.c.l.b16 %v1018
    %v1051 = vunpack.c.h.b16 %v1018
    %v1052 = vunpack.c.l.b16 %v1019
    %v1053 = vunpack.c.h.b16 %v1019
    %v1054 = vunpack.c.l.b16 %v1020
    %v1055 = vunpack.c.h.b16 %v1020
    %v1056 = vunpack.c.l.b16 %v1021
    %v1057 = vunpack.c.h.b16 %v1021
    %v1058 = vunpack.c.l.b16 %v1022
    %v1059 = vunpack.c.h.b16 %v1022
    %v1060 = vunpack.c.l.b16 %v1023
    %v1061 = vunpack.c.h.b16 %v1023
    %v1062 = vunpack.c.l.b16 %v1024
    %v1063 = vunpack.c.h.b16 %v1024
    %v1064 = vunpack.c.l.b16 %v1025
    %v1065 = vunpack.c.h.b16 %v1025
    %v1066 = vunpack.c.l.b16 %v1026
    %v1067 = vunpack.c.h.b16 %v1026
    %v1068 = vunpack.c.l.b16 %v1027
    %v1069 = vunpack.c.h.b16 %v1027
    %v1070 = vunpack.c.l.b16 %v1028
    %v1071 = vunpack.c.h.b16 %v1028
    %v1072 = vunpack.c.l.b16 %v1029
    %v1073 = vunpack.c.h.b16 %v1029
    %v1074 = vunpack.c.l.b16 %v1030
    %v1075 = vunpack.c.h.b16 %v1030
    %v1076 = vunpack.c.l.b16 %v1031
    %v1077 = vunpack.c.h.b16 %v1031
    %v1078 = vunpack.c.l.b16 %v1032
    %v1079 = vunpack.c.h.b16 %v1032
    %v1080 = vunpack.c.l.b16 %v1033
    %v1081 = vunpack.c.h.b16 %v1033
    %v1082 = vpack.c.b16 %v1052, %v1050
    %v1083 = vpack.c.b16 %v1053, %v1051
    %v1084 = vpack.c.b16 %v1056, %v1054
    %v1085 = vpack.c.b16 %v1057, %v1055
    %v1086 = vpack.c.b16 %v1060, %v1058
    %v1087 = vpack.c.b16 %v1061, %v1059
    %v1088 = vpack.c.b16 %v1064, %v1062
    %v1089 = vpack.c.b16 %v1065, %v1063
    %v1090 = vpack.c.b16 %v1068, %v1066
    %v1091 = vpack.c.b16 %v1069, %v1067
    %v1092 = vpack.c.b16 %v1072, %v1070
    %v1093 = vpack.c.b16 %v1073, %v1071
    %v1094 = vpack.c.b16 %v1076, %v1074
    %v1095 = vpack.c.b16 %v1077, %v1075
    %v1096 = vpack.c.b16 %v1080, %v1078
    %v1097 = vpack.c.b16 %v1081, %v1079
    %1114 = vmatpush.bf16.msra.mxu0 %v1096
    %1115 = vmatpush.bf16.msra.mxu0 %v1094
    %1116 = vmatpush.bf16.msra.mxu0 %v1092
    %1117 = vmatpush.bf16.msra.mxu0 %v1090
    %1118 = vmatpush.bf16.msra.mxu0 %v1088
    %1119 = vmatpush.bf16.msra.mxu0 %v1086
    %1120 = vmatpush.bf16.msra.mxu0 %v1084
    %1121 = vmatpush.bf16.msra.mxu0 %v1082
    %1122 = vmatmul.bf16.gmra.mxu0 %v1017
    %v1123 = vpop.f32.mrf.mxu0
    %v1124 = vadd.f32 0.0, %v1123
    %v1125 = vpop.f32.mrf.mxu0
    %v1126 = vadd.f32 0.0, %v1125
    %1127 = vdwg.mxu0
    %1128 = vmatpush.bf16.msra.mxu0 %v1097
    %1129 = vmatpush.bf16.msra.mxu0 %v1095
    %1130 = vmatpush.bf16.msra.mxu0 %v1093
    %1131 = vmatpush.bf16.msra.mxu0 %v1091
    %1132 = vmatpush.bf16.msra.mxu0 %v1089
    %1133 = vmatpush.bf16.msra.mxu0 %v1087
    %1134 = vmatpush.bf16.msra.mxu0 %v1085
    %1135 = vmatpush.bf16.msra.mxu0 %v1083
    %1136 = vmatmul.bf16.gmra.mxu0 %v1017
    %v1137 = vpop.f32.mrf.mxu0
    %v1138 = vadd.f32 0.0, %v1137
    %v1139 = vpop.f32.mrf.mxu0
    %v1140 = vadd.f32 0.0, %v1139
    %1141 = vdwg.mxu0
    %v1142 = vadd.f32 %v974, %v1124
    %v1143 = vadd.f32 %v988, %v1138
    %v1144 = vadd.f32 %v976, %v1126
    %v1145 = vadd.f32 %v990, %v1140
    %v1146 = vld [vmem:[#allocation19] sm:$0x3]
    %v1148 = vperm.slane %v1146, 0
    %v1149 = vperm.slane %v1146, 1
    %v1152 = vmul.f32 %v1142, %v1148
    %v1153 = vmul.f32 %v1143, %v1149
    %v1154 = vmul.f32 %v1144, %v1148
    %v1155 = vmul.f32 %v1145, %v1149
    %v1156 = vld [vmem:[#allocation21] sm:$0x3]
    %v1158 = vperm.slane %v1156, 0
    %v1159 = vperm.slane %v1156, 1
    %v1162 = vadd.f32 %v1152, %v1158
    %v1163 = vadd.f32 %v1153, %v1159
    %v1164 = vadd.f32 %v1154, %v1158
    %v1165 = vadd.f32 %v1155, %v1159
    %v1166 = vmax.f32 %v1162, 0.0
    %v1167 = vmax.f32 %v1163, 0.0
    %v1168 = vmax.f32 %v1164, 0.0
    %v1169 = vmax.f32 %v1165, 0.0
    %v1170 = vpack.c.bf16 %v1168, %v1166
    %v1171 = vpack.c.bf16 %v1169, %v1167
    %s1172 = smul.u32 4, 160
    %s1173 = smul.u32 %s1172, 4
    %s1174 = sshll.u32 %s1173, 4
    %1175 = dma.done [#allocation3], %s1174
    %v1176 = vld [vmem:[#allocation7] sm:$0x1]
    %vm1177 = vcmask 80896
    %v1179 = vsel %vm1177, %v1176, 0
    %vm1181 = vcmask 1044480
    %v1183 = vsel %vm1181, %v1170, 0
    %v1186 = vsel %vm1181, %v1171, 0
    %1188 = vmatpush.bf16.msra.mxu0 0
    %1189 = vmatpush.bf16.msra.mxu0 0
    %1190 = vmatpush.bf16.msra.mxu0 0
    %1191 = vmatpush.bf16.msra.mxu0 0
    %1192 = vmatpush.bf16.msra.mxu0 0
    %1193 = vmatpush.bf16.msra.mxu0 0
    %1194 = vmatpush.bf16.msra.mxu0 0
    %1195 = vmatpush.bf16.msra.mxu0 %v1183
    %1196 = vmatmul.bf16.gmra.mxu0 %v1179
    %v1197 = vpop.f32.mrf.mxu0
    %v1198 = vadd.f32 0.0, %v1197
    %v1199 = vpop.f32.mrf.mxu0
    %1200 = vdwg.mxu0
    %1201 = vmatpush.bf16.msra.mxu0 0
    %1202 = vmatpush.bf16.msra.mxu0 0
    %1203 = vmatpush.bf16.msra.mxu0 0
    %1204 = vmatpush.bf16.msra.mxu0 0
    %1205 = vmatpush.bf16.msra.mxu0 0
    %1206 = vmatpush.bf16.msra.mxu0 0
    %1207 = vmatpush.bf16.msra.mxu0 0
    %1208 = vmatpush.bf16.msra.mxu0 %v1186
    %1209 = vmatmul.bf16.gmra.mxu0 %v1179
    %v1210 = vpop.f32.mrf.mxu0
    %v1211 = vadd.f32 0.0, %v1210
    %v1212 = vpop.f32.mrf.mxu0
    %1213 = vdwg.mxu0
    %v1214 = vpack.c.bf16 %v1198, %v1198
    %v1215 = vpack.c.bf16 %v1211, %v1211
    %v1216 = vld [vmem:[#allocation2] sm:$0xff]
    %v1217 = vld [vmem:[#allocation2 + $0x8] sm:$0xff]
    %v1218 = vld [vmem:[#allocation2 + $0x10] sm:$0xff]
    %v1219 = vld [vmem:[#allocation2 + $0x18] sm:$0xff]
    %v1220 = vld [vmem:[#allocation2 + $0x20] sm:$0xff]
    %v1221 = vld [vmem:[#allocation2 + $0x28] sm:$0xff]
    %v1222 = vld [vmem:[#allocation2 + $0x30] sm:$0xff]
    %v1223 = vld [vmem:[#allocation2 + $0x38] sm:$0xff]
    %v1224 = vld [vmem:[#allocation2 + $0x40] sm:$0xff]
    %v1225 = vld [vmem:[#allocation2 + $0x48] sm:$0xff]
    %v1226 = vld [vmem:[#allocation2 + $0x50] sm:$0xff]
    %v1227 = vld [vmem:[#allocation2 + $0x58] sm:$0xff]
    %v1228 = vld [vmem:[#allocation2 + $0x60] sm:$0xff]
    %v1229 = vld [vmem:[#allocation2 + $0x68] sm:$0xff]
    %v1230 = vld [vmem:[#allocation2 + $0x70] sm:$0xff]
    %v1231 = vld [vmem:[#allocation2 + $0x78] sm:$0xff]
    %v1232 = vld [vmem:[#allocation2 + $0x80] sm:$0xff]
    %v1233 = vld [vmem:[#allocation2 + $0x88] sm:$0xff]
    %v1234 = vld [vmem:[#allocation2 + $0x90] sm:$0xff]
    %v1235 = vld [vmem:[#allocation2 + $0x98] sm:$0xff]
    %v1236 = vld [vmem:[#allocation2 + $0xa0] sm:$0xff]
    %v1237 = vld [vmem:[#allocation2 + $0xa8] sm:$0xff]
    %v1238 = vld [vmem:[#allocation2 + $0xb0] sm:$0xff]
    %v1239 = vld [vmem:[#allocation2 + $0xb8] sm:$0xff]
    %v1240 = vld [vmem:[#allocation2 + $0xc0] sm:$0xff]
    %v1241 = vld [vmem:[#allocation2 + $0xc8] sm:$0xff]
    %v1242 = vld [vmem:[#allocation2 + $0xd0] sm:$0xff]
    %v1243 = vld [vmem:[#allocation2 + $0xd8] sm:$0xff]
    %v1244 = vld [vmem:[#allocation2 + $0xe0] sm:$0xff]
    %v1245 = vld [vmem:[#allocation2 + $0xe8] sm:$0xff]
    %v1246 = vld [vmem:[#allocation2 + $0xf0] sm:$0xff]
    %v1247 = vld [vmem:[#allocation2 + $0xf8] sm:$0xff]
    %v1248 = vld [vmem:[#allocation2 + $0x100] sm:$0xff]
    %v1249 = vld [vmem:[#allocation2 + $0x108] sm:$0xff]
    %v1250 = vld [vmem:[#allocation2 + $0x110] sm:$0xff]
    %v1251 = vld [vmem:[#allocation2 + $0x118] sm:$0xff]
    %v1252 = vld [vmem:[#allocation2 + $0x120] sm:$0xff]
    %v1253 = vld [vmem:[#allocation2 + $0x128] sm:$0xff]
    %v1254 = vld [vmem:[#allocation2 + $0x130] sm:$0xff]
    %v1255 = vld [vmem:[#allocation2 + $0x138] sm:$0xff]
    %v1256 = vld [vmem:[#allocation2 + $0x140] sm:$0xff]
    %v1257 = vld [vmem:[#allocation2 + $0x148] sm:$0xff]
    %v1258 = vld [vmem:[#allocation2 + $0x150] sm:$0xff]
    %v1259 = vld [vmem:[#allocation2 + $0x158] sm:$0xff]
    %v1260 = vld [vmem:[#allocation2 + $0x160] sm:$0xff]
    %v1261 = vld [vmem:[#allocation2 + $0x168] sm:$0xff]
    %v1262 = vld [vmem:[#allocation2 + $0x170] sm:$0xff]
    %v1263 = vld [vmem:[#allocation2 + $0x178] sm:$0xff]
    %v1264 = vld [vmem:[#allocation2 + $0x180] sm:$0xff]
    %v1265 = vld [vmem:[#allocation2 + $0x188] sm:$0xff]
    %v1266 = vld [vmem:[#allocation2 + $0x190] sm:$0xff]
    %v1267 = vld [vmem:[#allocation2 + $0x198] sm:$0xff]
    %v1268 = vld [vmem:[#allocation2 + $0x1a0] sm:$0xff]
    %v1269 = vld [vmem:[#allocation2 + $0x1a8] sm:$0xff]
    %v1270 = vld [vmem:[#allocation2 + $0x1b0] sm:$0xff]
    %v1271 = vld [vmem:[#allocation2 + $0x1b8] sm:$0xff]
    %v1272 = vld [vmem:[#allocation2 + $0x1c0] sm:$0xff]
    %v1273 = vld [vmem:[#allocation2 + $0x1c8] sm:$0xff]
    %v1274 = vld [vmem:[#allocation2 + $0x1d0] sm:$0xff]
    %v1275 = vld [vmem:[#allocation2 + $0x1d8] sm:$0xff]
    %v1276 = vld [vmem:[#allocation2 + $0x1e0] sm:$0xff]
    %v1277 = vld [vmem:[#allocation2 + $0x1e8] sm:$0xff]
    %v1278 = vld [vmem:[#allocation2 + $0x1f0] sm:$0xff]
    %v1279 = vld [vmem:[#allocation2 + $0x1f8] sm:$0xff]
    %s1280 = scalar_lea.vmem [#allocation7], 1
    %v1281 = vld [vmem:[%s1280] sm:$0x1]
    %v1283 = vsel %vm1177, %v1281, 0
    %1285 = vmatpush.bf16.msra.mxu0 0
    %1286 = vmatpush.bf16.msra.mxu0 0
    %1287 = vmatpush.bf16.msra.mxu0 0
    %1288 = vmatpush.bf16.msra.mxu0 0
    %1289 = vmatpush.bf16.msra.mxu0 0
    %1290 = vmatpush.bf16.msra.mxu0 0
    %1291 = vmatpush.bf16.msra.mxu0 0
    %1292 = vmatpush.bf16.msra.mxu0 %v1183
    %1293 = vmatmul.bf16.gmra.mxu0 %v1283
    %v1294 = vpop.f32.mrf.mxu0
    %v1295 = vadd.f32 0.0, %v1294
    %v1296 = vpop.f32.mrf.mxu0
    %1297 = vdwg.mxu0
    %1298 = vmatpush.bf16.msra.mxu0 0
    %1299 = vmatpush.bf16.msra.mxu0 0
    %1300 = vmatpush.bf16.msra.mxu0 0
    %1301 = vmatpush.bf16.msra.mxu0 0
    %1302 = vmatpush.bf16.msra.mxu0 0
    %1303 = vmatpush.bf16.msra.mxu0 0
    %1304 = vmatpush.bf16.msra.mxu0 0
    %1305 = vmatpush.bf16.msra.mxu0 %v1186
    %1306 = vmatmul.bf16.gmra.mxu0 %v1283
    %v1307 = vpop.f32.mrf.mxu0
    %v1308 = vadd.f32 0.0, %v1307
    %v1309 = vpop.f32.mrf.mxu0
    %1310 = vdwg.mxu0
    %v1311 = vpack.c.bf16 %v1295, %v1295
    %v1312 = vpack.c.bf16 %v1308, %v1308
    %v1313 = vld [vmem:[#allocation2 + $0x200] sm:$0xff]
    %v1314 = vld [vmem:[#allocation2 + $0x208] sm:$0xff]
    %v1315 = vld [vmem:[#allocation2 + $0x210] sm:$0xff]
    %v1316 = vld [vmem:[#allocation2 + $0x218] sm:$0xff]
    %v1317 = vld [vmem:[#allocation2 + $0x220] sm:$0xff]
    %v1318 = vld [vmem:[#allocation2 + $0x228] sm:$0xff]
    %v1319 = vld [vmem:[#allocation2 + $0x230] sm:$0xff]
    %v1320 = vld [vmem:[#allocation2 + $0x238] sm:$0xff]
    %v1321 = vld [vmem:[#allocation2 + $0x240] sm:$0xff]
    %v1322 = vld [vmem:[#allocation2 + $0x248] sm:$0xff]
    %v1323 = vld [vmem:[#allocation2 + $0x250] sm:$0xff]
    %v1324 = vld [vmem:[#allocation2 + $0x258] sm:$0xff]
    %v1325 = vld [vmem:[#allocation2 + $0x260] sm:$0xff]
    %v1326 = vld [vmem:[#allocation2 + $0x268] sm:$0xff]
    %v1327 = vld [vmem:[#allocation2 + $0x270] sm:$0xff]
    %v1328 = vld [vmem:[#allocation2 + $0x278] sm:$0xff]
    %v1329 = vld [vmem:[#allocation2 + $0x280] sm:$0xff]
    %v1330 = vld [vmem:[#allocation2 + $0x288] sm:$0xff]
    %v1331 = vld [vmem:[#allocation2 + $0x290] sm:$0xff]
    %v1332 = vld [vmem:[#allocation2 + $0x298] sm:$0xff]
    %v1333 = vld [vmem:[#allocation2 + $0x2a0] sm:$0xff]
    %v1334 = vld [vmem:[#allocation2 + $0x2a8] sm:$0xff]
    %v1335 = vld [vmem:[#allocation2 + $0x2b0] sm:$0xff]
    %v1336 = vld [vmem:[#allocation2 + $0x2b8] sm:$0xff]
    %v1337 = vld [vmem:[#allocation2 + $0x2c0] sm:$0xff]
    %v1338 = vld [vmem:[#allocation2 + $0x2c8] sm:$0xff]
    %v1339 = vld [vmem:[#allocation2 + $0x2d0] sm:$0xff]
    %v1340 = vld [vmem:[#allocation2 + $0x2d8] sm:$0xff]
    %v1341 = vld [vmem:[#allocation2 + $0x2e0] sm:$0xff]
    %v1342 = vld [vmem:[#allocation2 + $0x2e8] sm:$0xff]
    %v1343 = vld [vmem:[#allocation2 + $0x2f0] sm:$0xff]
    %v1344 = vld [vmem:[#allocation2 + $0x2f8] sm:$0xff]
    %v1345 = vld [vmem:[#allocation2 + $0x300] sm:$0xff]
    %v1346 = vld [vmem:[#allocation2 + $0x308] sm:$0xff]
    %v1347 = vld [vmem:[#allocation2 + $0x310] sm:$0xff]
    %v1348 = vld [vmem:[#allocation2 + $0x318] sm:$0xff]
    %v1349 = vld [vmem:[#allocation2 + $0x320] sm:$0xff]
    %v1350 = vld [vmem:[#allocation2 + $0x328] sm:$0xff]
    %v1351 = vld [vmem:[#allocation2 + $0x330] sm:$0xff]
    %v1352 = vld [vmem:[#allocation2 + $0x338] sm:$0xff]
    %v1353 = vld [vmem:[#allocation2 + $0x340] sm:$0xff]
    %v1354 = vld [vmem:[#allocation2 + $0x348] sm:$0xff]
    %v1355 = vld [vmem:[#allocation2 + $0x350] sm:$0xff]
    %v1356 = vld [vmem:[#allocation2 + $0x358] sm:$0xff]
    %v1357 = vld [vmem:[#allocation2 + $0x360] sm:$0xff]
    %v1358 = vld [vmem:[#allocation2 + $0x368] sm:$0xff]
    %v1359 = vld [vmem:[#allocation2 + $0x370] sm:$0xff]
    %v1360 = vld [vmem:[#allocation2 + $0x378] sm:$0xff]
    %v1361 = vld [vmem:[#allocation2 + $0x380] sm:$0xff]
    %v1362 = vld [vmem:[#allocation2 + $0x388] sm:$0xff]
    %v1363 = vld [vmem:[#allocation2 + $0x390] sm:$0xff]
    %v1364 = vld [vmem:[#allocation2 + $0x398] sm:$0xff]
    %v1365 = vld [vmem:[#allocation2 + $0x3a0] sm:$0xff]
    %v1366 = vld [vmem:[#allocation2 + $0x3a8] sm:$0xff]
    %v1367 = vld [vmem:[#allocation2 + $0x3b0] sm:$0xff]
    %v1368 = vld [vmem:[#allocation2 + $0x3b8] sm:$0xff]
    %v1369 = vld [vmem:[#allocation2 + $0x3c0] sm:$0xff]
    %v1370 = vld [vmem:[#allocation2 + $0x3c8] sm:$0xff]
    %v1371 = vld [vmem:[#allocation2 + $0x3d0] sm:$0xff]
    %v1372 = vld [vmem:[#allocation2 + $0x3d8] sm:$0xff]
    %v1373 = vld [vmem:[#allocation2 + $0x3e0] sm:$0xff]
    %v1374 = vld [vmem:[#allocation2 + $0x3e8] sm:$0xff]
    %v1375 = vld [vmem:[#allocation2 + $0x3f0] sm:$0xff]
    %v1376 = vld [vmem:[#allocation2 + $0x3f8] sm:$0xff]
    %v1441 = vunpack.c.l.b16 %v1313
    %v1442 = vunpack.c.h.b16 %v1313
    %v1443 = vunpack.c.l.b16 %v1314
    %v1444 = vunpack.c.h.b16 %v1314
    %v1445 = vunpack.c.l.b16 %v1315
    %v1446 = vunpack.c.h.b16 %v1315
    %v1447 = vunpack.c.l.b16 %v1316
    %v1448 = vunpack.c.h.b16 %v1316
    %v1449 = vunpack.c.l.b16 %v1317
    %v1450 = vunpack.c.h.b16 %v1317
    %v1451 = vunpack.c.l.b16 %v1318
    %v1452 = vunpack.c.h.b16 %v1318
    %v1453 = vunpack.c.l.b16 %v1319
    %v1454 = vunpack.c.h.b16 %v1319
    %v1455 = vunpack.c.l.b16 %v1320
    %v1456 = vunpack.c.h.b16 %v1320
    %v1457 = vunpack.c.l.b16 %v1321
    %v1458 = vunpack.c.h.b16 %v1321
    %v1459 = vunpack.c.l.b16 %v1322
    %v1460 = vunpack.c.h.b16 %v1322
    %v1461 = vunpack.c.l.b16 %v1323
    %v1462 = vunpack.c.h.b16 %v1323
    %v1463 = vunpack.c.l.b16 %v1324
    %v1464 = vunpack.c.h.b16 %v1324
    %v1465 = vunpack.c.l.b16 %v1325
    %v1466 = vunpack.c.h.b16 %v1325
    %v1467 = vunpack.c.l.b16 %v1326
    %v1468 = vunpack.c.h.b16 %v1326
    %v1469 = vunpack.c.l.b16 %v1327
    %v1470 = vunpack.c.h.b16 %v1327
    %v1471 = vunpack.c.l.b16 %v1328
    %v1472 = vunpack.c.h.b16 %v1328
    %v1473 = vunpack.c.l.b16 %v1329
    %v1474 = vunpack.c.h.b16 %v1329
    %v1475 = vunpack.c.l.b16 %v1330
    %v1476 = vunpack.c.h.b16 %v1330
    %v1477 = vunpack.c.l.b16 %v1331
    %v1478 = vunpack.c.h.b16 %v1331
    %v1479 = vunpack.c.l.b16 %v1332
    %v1480 = vunpack.c.h.b16 %v1332
    %v1481 = vunpack.c.l.b16 %v1333
    %v1482 = vunpack.c.h.b16 %v1333
    %v1483 = vunpack.c.l.b16 %v1334
    %v1484 = vunpack.c.h.b16 %v1334
    %v1485 = vunpack.c.l.b16 %v1335
    %v1486 = vunpack.c.h.b16 %v1335
    %v1487 = vunpack.c.l.b16 %v1336
    %v1488 = vunpack.c.h.b16 %v1336
    %v1489 = vunpack.c.l.b16 %v1337
    %v1490 = vunpack.c.h.b16 %v1337
    %v1491 = vunpack.c.l.b16 %v1338
    %v1492 = vunpack.c.h.b16 %v1338
    %v1493 = vunpack.c.l.b16 %v1339
    %v1494 = vunpack.c.h.b16 %v1339
    %v1495 = vunpack.c.l.b16 %v1340
    %v1496 = vunpack.c.h.b16 %v1340
    %v1497 = vunpack.c.l.b16 %v1341
    %v1498 = vunpack.c.h.b16 %v1341
    %v1499 = vunpack.c.l.b16 %v1342
    %v1500 = vunpack.c.h.b16 %v1342
    %v1501 = vunpack.c.l.b16 %v1343
    %v1502 = vunpack.c.h.b16 %v1343
    %v1503 = vunpack.c.l.b16 %v1344
    %v1504 = vunpack.c.h.b16 %v1344
    %v1505 = vunpack.c.l.b16 %v1345
    %v1506 = vunpack.c.h.b16 %v1345
    %v1507 = vunpack.c.l.b16 %v1346
    %v1508 = vunpack.c.h.b16 %v1346
    %v1509 = vunpack.c.l.b16 %v1347
    %v1510 = vunpack.c.h.b16 %v1347
    %v1511 = vunpack.c.l.b16 %v1348
    %v1512 = vunpack.c.h.b16 %v1348
    %v1513 = vunpack.c.l.b16 %v1349
    %v1514 = vunpack.c.h.b16 %v1349
    %v1515 = vunpack.c.l.b16 %v1350
    %v1516 = vunpack.c.h.b16 %v1350
    %v1517 = vunpack.c.l.b16 %v1351
    %v1518 = vunpack.c.h.b16 %v1351
    %v1519 = vunpack.c.l.b16 %v1352
    %v1520 = vunpack.c.h.b16 %v1352
    %v1521 = vunpack.c.l.b16 %v1353
    %v1522 = vunpack.c.h.b16 %v1353
    %v1523 = vunpack.c.l.b16 %v1354
    %v1524 = vunpack.c.h.b16 %v1354
    %v1525 = vunpack.c.l.b16 %v1355
    %v1526 = vunpack.c.h.b16 %v1355
    %v1527 = vunpack.c.l.b16 %v1356
    %v1528 = vunpack.c.h.b16 %v1356
    %v1529 = vunpack.c.l.b16 %v1357
    %v1530 = vunpack.c.h.b16 %v1357
    %v1531 = vunpack.c.l.b16 %v1358
    %v1532 = vunpack.c.h.b16 %v1358
    %v1533 = vunpack.c.l.b16 %v1359
    %v1534 = vunpack.c.h.b16 %v1359
    %v1535 = vunpack.c.l.b16 %v1360
    %v1536 = vunpack.c.h.b16 %v1360
    %v1537 = vunpack.c.l.b16 %v1361
    %v1538 = vunpack.c.h.b16 %v1361
    %v1539 = vunpack.c.l.b16 %v1362
    %v1540 = vunpack.c.h.b16 %v1362
    %v1541 = vunpack.c.l.b16 %v1363
    %v1542 = vunpack.c.h.b16 %v1363
    %v1543 = vunpack.c.l.b16 %v1364
    %v1544 = vunpack.c.h.b16 %v1364
    %v1545 = vunpack.c.l.b16 %v1365
    %v1546 = vunpack.c.h.b16 %v1365
    %v1547 = vunpack.c.l.b16 %v1366
    %v1548 = vunpack.c.h.b16 %v1366
    %v1549 = vunpack.c.l.b16 %v1367
    %v1550 = vunpack.c.h.b16 %v1367
    %v1551 = vunpack.c.l.b16 %v1368
    %v1552 = vunpack.c.h.b16 %v1368
    %v1553 = vunpack.c.l.b16 %v1369
    %v1554 = vunpack.c.h.b16 %v1369
    %v1555 = vunpack.c.l.b16 %v1370
    %v1556 = vunpack.c.h.b16 %v1370
    %v1557 = vunpack.c.l.b16 %v1371
    %v1558 = vunpack.c.h.b16 %v1371
    %v1559 = vunpack.c.l.b16 %v1372
    %v1560 = vunpack.c.h.b16 %v1372
    %v1561 = vunpack.c.l.b16 %v1373
    %v1562 = vunpack.c.h.b16 %v1373
    %v1563 = vunpack.c.l.b16 %v1374
    %v1564 = vunpack.c.h.b16 %v1374
    %v1565 = vunpack.c.l.b16 %v1375
    %v1566 = vunpack.c.h.b16 %v1375
    %v1567 = vunpack.c.l.b16 %v1376
    %v1568 = vunpack.c.h.b16 %v1376
    %v1569 = vpack.c.b16 %v1445, %v1441
    %v1570 = vpack.c.b16 %v1446, %v1442
    %v1571 = vpack.c.b16 %v1447, %v1443
    %v1572 = vpack.c.b16 %v1448, %v1444
    %v1573 = vpack.c.b16 %v1453, %v1449
    %v1574 = vpack.c.b16 %v1454, %v1450
    %v1575 = vpack.c.b16 %v1455, %v1451
    %v1576 = vpack.c.b16 %v1456, %v1452
    %v1577 = vpack.c.b16 %v1461, %v1457
    %v1578 = vpack.c.b16 %v1462, %v1458
    %v1579 = vpack.c.b16 %v1463, %v1459
    %v1580 = vpack.c.b16 %v1464, %v1460
    %v1581 = vpack.c.b16 %v1469, %v1465
    %v1582 = vpack.c.b16 %v1470, %v1466
    %v1583 = vpack.c.b16 %v1471, %v1467
    %v1584 = vpack.c.b16 %v1472, %v1468
    %v1585 = vpack.c.b16 %v1477, %v1473
    %v1586 = vpack.c.b16 %v1478, %v1474
    %v1587 = vpack.c.b16 %v1479, %v1475
    %v1588 = vpack.c.b16 %v1480, %v1476
    %v1589 = vpack.c.b16 %v1485, %v1481
    %v1590 = vpack.c.b16 %v1486, %v1482
    %v1591 = vpack.c.b16 %v1487, %v1483
    %v1592 = vpack.c.b16 %v1488, %v1484
    %v1593 = vpack.c.b16 %v1493, %v1489
    %v1594 = vpack.c.b16 %v1494, %v1490
    %v1595 = vpack.c.b16 %v1495, %v1491
    %v1596 = vpack.c.b16 %v1496, %v1492
    %v1597 = vpack.c.b16 %v1501, %v1497
    %v1598 = vpack.c.b16 %v1502, %v1498
    %v1599 = vpack.c.b16 %v1503, %v1499
    %v1600 = vpack.c.b16 %v1504, %v1500
    %v1601 = vpack.c.b16 %v1509, %v1505
    %v1602 = vpack.c.b16 %v1510, %v1506
    %v1603 = vpack.c.b16 %v1511, %v1507
    %v1604 = vpack.c.b16 %v1512, %v1508
    %v1605 = vpack.c.b16 %v1517, %v1513
    %v1606 = vpack.c.b16 %v1518, %v1514
    %v1607 = vpack.c.b16 %v1519, %v1515
    %v1608 = vpack.c.b16 %v1520, %v1516
    %v1609 = vpack.c.b16 %v1525, %v1521
    %v1610 = vpack.c.b16 %v1526, %v1522
    %v1611 = vpack.c.b16 %v1527, %v1523
    %v1612 = vpack.c.b16 %v1528, %v1524
    %v1613 = vpack.c.b16 %v1533, %v1529
    %v1614 = vpack.c.b16 %v1534, %v1530
    %v1615 = vpack.c.b16 %v1535, %v1531
    %v1616 = vpack.c.b16 %v1536, %v1532
    %v1617 = vpack.c.b16 %v1541, %v1537
    %v1618 = vpack.c.b16 %v1542, %v1538
    %v1619 = vpack.c.b16 %v1543, %v1539
    %v1620 = vpack.c.b16 %v1544, %v1540
    %v1621 = vpack.c.b16 %v1549, %v1545
    %v1622 = vpack.c.b16 %v1550, %v1546
    %v1623 = vpack.c.b16 %v1551, %v1547
    %v1624 = vpack.c.b16 %v1552, %v1548
    %v1625 = vpack.c.b16 %v1557, %v1553
    %v1626 = vpack.c.b16 %v1558, %v1554
    %v1627 = vpack.c.b16 %v1559, %v1555
    %v1628 = vpack.c.b16 %v1560, %v1556
    %v1629 = vpack.c.b16 %v1565, %v1561
    %v1630 = vpack.c.b16 %v1566, %v1562
    %v1631 = vpack.c.b16 %v1567, %v1563
    %v1632 = vpack.c.b16 %v1568, %v1564
    %1697 = vmatpush.bf16.msra.mxu0 %v1597
    %1698 = vmatpush.bf16.msra.mxu0 %v1593
    %1699 = vmatpush.bf16.msra.mxu0 %v1589
    %1700 = vmatpush.bf16.msra.mxu0 %v1585
    %1701 = vmatpush.bf16.msra.mxu0 %v1581
    %1702 = vmatpush.bf16.msra.mxu0 %v1577
    %1703 = vmatpush.bf16.msra.mxu0 %v1573
    %1704 = vmatpush.bf16.msra.mxu0 %v1569
    %1705 = vmatmul.bf16.gmra.mxu0 %v1311
    %v1706 = vpop.f32.mrf.mxu0
    %v1707 = vadd.f32 0.0, %v1706
    %v1708 = vpop.f32.mrf.mxu0
    %1709 = vdwg.mxu0
    %1710 = vmatpush.bf16.msra.mxu0 %v1629
    %1711 = vmatpush.bf16.msra.mxu0 %v1625
    %1712 = vmatpush.bf16.msra.mxu0 %v1621
    %1713 = vmatpush.bf16.msra.mxu0 %v1617
    %1714 = vmatpush.bf16.msra.mxu0 %v1613
    %1715 = vmatpush.bf16.msra.mxu0 %v1609
    %1716 = vmatpush.bf16.msra.mxu0 %v1605
    %1717 = vmatpush.bf16.msra.mxu0 %v1601
    %1718 = vmatmul.bf16.gmra.mxu0 %v1312
    %v1719 = vpop.f32.mrf.mxu0
    %v1720 = vadd.f32 %v1707, %v1719
    %v1721 = vpop.f32.mrf.mxu0
    %1722 = vdwg.mxu0
    %1723 = vmatpush.bf16.msra.mxu0 %v1598
    %1724 = vmatpush.bf16.msra.mxu0 %v1594
    %1725 = vmatpush.bf16.msra.mxu0 %v1590
    %1726 = vmatpush.bf16.msra.mxu0 %v1586
    %1727 = vmatpush.bf16.msra.mxu0 %v1582
    %1728 = vmatpush.bf16.msra.mxu0 %v1578
    %1729 = vmatpush.bf16.msra.mxu0 %v1574
    %1730 = vmatpush.bf16.msra.mxu0 %v1570
    %1731 = vmatmul.bf16.gmra.mxu0 %v1311
    %v1732 = vpop.f32.mrf.mxu0
    %v1733 = vadd.f32 0.0, %v1732
    %v1734 = vpop.f32.mrf.mxu0
    %1735 = vdwg.mxu0
    %1736 = vmatpush.bf16.msra.mxu0 %v1630
    %1737 = vmatpush.bf16.msra.mxu0 %v1626
    %1738 = vmatpush.bf16.msra.mxu0 %v1622
    %1739 = vmatpush.bf16.msra.mxu0 %v1618
    %1740 = vmatpush.bf16.msra.mxu0 %v1614
    %1741 = vmatpush.bf16.msra.mxu0 %v1610
    %1742 = vmatpush.bf16.msra.mxu0 %v1606
    %1743 = vmatpush.bf16.msra.mxu0 %v1602
    %1744 = vmatmul.bf16.gmra.mxu0 %v1312
    %v1745 = vpop.f32.mrf.mxu0
    %v1746 = vadd.f32 %v1733, %v1745
    %v1747 = vpop.f32.mrf.mxu0
    %1748 = vdwg.mxu0
    %1749 = vmatpush.bf16.msra.mxu0 %v1599
    %1750 = vmatpush.bf16.msra.mxu0 %v1595
    %1751 = vmatpush.bf16.msra.mxu0 %v1591
    %1752 = vmatpush.bf16.msra.mxu0 %v1587
    %1753 = vmatpush.bf16.msra.mxu0 %v1583
    %1754 = vmatpush.bf16.msra.mxu0 %v1579
    %1755 = vmatpush.bf16.msra.mxu0 %v1575
    %1756 = vmatpush.bf16.msra.mxu0 %v1571
    %1757 = vmatmul.bf16.gmra.mxu0 %v1311
    %v1758 = vpop.f32.mrf.mxu0
    %v1759 = vadd.f32 0.0, %v1758
    %v1760 = vpop.f32.mrf.mxu0
    %1761 = vdwg.mxu0
    %1762 = vmatpush.bf16.msra.mxu0 %v1631
    %1763 = vmatpush.bf16.msra.mxu0 %v1627
    %1764 = vmatpush.bf16.msra.mxu0 %v1623
    %1765 = vmatpush.bf16.msra.mxu0 %v1619
    %1766 = vmatpush.bf16.msra.mxu0 %v1615
    %1767 = vmatpush.bf16.msra.mxu0 %v1611
    %1768 = vmatpush.bf16.msra.mxu0 %v1607
    %1769 = vmatpush.bf16.msra.mxu0 %v1603
    %1770 = vmatmul.bf16.gmra.mxu0 %v1312
    %v1771 = vpop.f32.mrf.mxu0
    %v1772 = vadd.f32 %v1759, %v1771
    %v1773 = vpop.f32.mrf.mxu0
    %1774 = vdwg.mxu0
    %1775 = vmatpush.bf16.msra.mxu0 %v1600
    %1776 = vmatpush.bf16.msra.mxu0 %v1596
    %1777 = vmatpush.bf16.msra.mxu0 %v1592
    %1778 = vmatpush.bf16.msra.mxu0 %v1588
    %1779 = vmatpush.bf16.msra.mxu0 %v1584
    %1780 = vmatpush.bf16.msra.mxu0 %v1580
    %1781 = vmatpush.bf16.msra.mxu0 %v1576
    %1782 = vmatpush.bf16.msra.mxu0 %v1572
    %1783 = vmatmul.bf16.gmra.mxu0 %v1311
    %v1784 = vpop.f32.mrf.mxu0
    %v1785 = vadd.f32 0.0, %v1784
    %v1786 = vpop.f32.mrf.mxu0
    %1787 = vdwg.mxu0
    %1788 = vmatpush.bf16.msra.mxu0 %v1632
    %1789 = vmatpush.bf16.msra.mxu0 %v1628
    %1790 = vmatpush.bf16.msra.mxu0 %v1624
    %1791 = vmatpush.bf16.msra.mxu0 %v1620
    %1792 = vmatpush.bf16.msra.mxu0 %v1616
    %1793 = vmatpush.bf16.msra.mxu0 %v1612
    %1794 = vmatpush.bf16.msra.mxu0 %v1608
    %1795 = vmatpush.bf16.msra.mxu0 %v1604
    %1796 = vmatmul.bf16.gmra.mxu0 %v1312
    %v1797 = vpop.f32.mrf.mxu0
    %v1798 = vadd.f32 %v1785, %v1797
    %v1799 = vpop.f32.mrf.mxu0
    %1800 = vdwg.mxu0
    %v1865 = vunpack.c.l.b16 %v1216
    %v1866 = vunpack.c.h.b16 %v1216
    %v1867 = vunpack.c.l.b16 %v1217
    %v1868 = vunpack.c.h.b16 %v1217
    %v1869 = vunpack.c.l.b16 %v1218
    %v1870 = vunpack.c.h.b16 %v1218
    %v1871 = vunpack.c.l.b16 %v1219
    %v1872 = vunpack.c.h.b16 %v1219
    %v1873 = vunpack.c.l.b16 %v1220
    %v1874 = vunpack.c.h.b16 %v1220
    %v1875 = vunpack.c.l.b16 %v1221
    %v1876 = vunpack.c.h.b16 %v1221
    %v1877 = vunpack.c.l.b16 %v1222
    %v1878 = vunpack.c.h.b16 %v1222
    %v1879 = vunpack.c.l.b16 %v1223
    %v1880 = vunpack.c.h.b16 %v1223
    %v1881 = vunpack.c.l.b16 %v1224
    %v1882 = vunpack.c.h.b16 %v1224
    %v1883 = vunpack.c.l.b16 %v1225
    %v1884 = vunpack.c.h.b16 %v1225
    %v1885 = vunpack.c.l.b16 %v1226
    %v1886 = vunpack.c.h.b16 %v1226
    %v1887 = vunpack.c.l.b16 %v1227
    %v1888 = vunpack.c.h.b16 %v1227
    %v1889 = vunpack.c.l.b16 %v1228
    %v1890 = vunpack.c.h.b16 %v1228
    %v1891 = vunpack.c.l.b16 %v1229
    %v1892 = vunpack.c.h.b16 %v1229
    %v1893 = vunpack.c.l.b16 %v1230
    %v1894 = vunpack.c.h.b16 %v1230
    %v1895 = vunpack.c.l.b16 %v1231
    %v1896 = vunpack.c.h.b16 %v1231
    %v1897 = vunpack.c.l.b16 %v1232
    %v1898 = vunpack.c.h.b16 %v1232
    %v1899 = vunpack.c.l.b16 %v1233
    %v1900 = vunpack.c.h.b16 %v1233
    %v1901 = vunpack.c.l.b16 %v1234
    %v1902 = vunpack.c.h.b16 %v1234
    %v1903 = vunpack.c.l.b16 %v1235
    %v1904 = vunpack.c.h.b16 %v1235
    %v1905 = vunpack.c.l.b16 %v1236
    %v1906 = vunpack.c.h.b16 %v1236
    %v1907 = vunpack.c.l.b16 %v1237
    %v1908 = vunpack.c.h.b16 %v1237
    %v1909 = vunpack.c.l.b16 %v1238
    %v1910 = vunpack.c.h.b16 %v1238
    %v1911 = vunpack.c.l.b16 %v1239
    %v1912 = vunpack.c.h.b16 %v1239
    %v1913 = vunpack.c.l.b16 %v1240
    %v1914 = vunpack.c.h.b16 %v1240
    %v1915 = vunpack.c.l.b16 %v1241
    %v1916 = vunpack.c.h.b16 %v1241
    %v1917 = vunpack.c.l.b16 %v1242
    %v1918 = vunpack.c.h.b16 %v1242
    %v1919 = vunpack.c.l.b16 %v1243
    %v1920 = vunpack.c.h.b16 %v1243
    %v1921 = vunpack.c.l.b16 %v1244
    %v1922 = vunpack.c.h.b16 %v1244
    %v1923 = vunpack.c.l.b16 %v1245
    %v1924 = vunpack.c.h.b16 %v1245
    %v1925 = vunpack.c.l.b16 %v1246
    %v1926 = vunpack.c.h.b16 %v1246
    %v1927 = vunpack.c.l.b16 %v1247
    %v1928 = vunpack.c.h.b16 %v1247
    %v1929 = vunpack.c.l.b16 %v1248
    %v1930 = vunpack.c.h.b16 %v1248
    %v1931 = vunpack.c.l.b16 %v1249
    %v1932 = vunpack.c.h.b16 %v1249
    %v1933 = vunpack.c.l.b16 %v1250
    %v1934 = vunpack.c.h.b16 %v1250
    %v1935 = vunpack.c.l.b16 %v1251
    %v1936 = vunpack.c.h.b16 %v1251
    %v1937 = vunpack.c.l.b16 %v1252
    %v1938 = vunpack.c.h.b16 %v1252
    %v1939 = vunpack.c.l.b16 %v1253
    %v1940 = vunpack.c.h.b16 %v1253
    %v1941 = vunpack.c.l.b16 %v1254
    %v1942 = vunpack.c.h.b16 %v1254
    %v1943 = vunpack.c.l.b16 %v1255
    %v1944 = vunpack.c.h.b16 %v1255
    %v1945 = vunpack.c.l.b16 %v1256
    %v1946 = vunpack.c.h.b16 %v1256
    %v1947 = vunpack.c.l.b16 %v1257
    %v1948 = vunpack.c.h.b16 %v1257
    %v1949 = vunpack.c.l.b16 %v1258
    %v1950 = vunpack.c.h.b16 %v1258
    %v1951 = vunpack.c.l.b16 %v1259
    %v1952 = vunpack.c.h.b16 %v1259
    %v1953 = vunpack.c.l.b16 %v1260
    %v1954 = vunpack.c.h.b16 %v1260
    %v1955 = vunpack.c.l.b16 %v1261
    %v1956 = vunpack.c.h.b16 %v1261
    %v1957 = vunpack.c.l.b16 %v1262
    %v1958 = vunpack.c.h.b16 %v1262
    %v1959 = vunpack.c.l.b16 %v1263
    %v1960 = vunpack.c.h.b16 %v1263
    %v1961 = vunpack.c.l.b16 %v1264
    %v1962 = vunpack.c.h.b16 %v1264
    %v1963 = vunpack.c.l.b16 %v1265
    %v1964 = vunpack.c.h.b16 %v1265
    %v1965 = vunpack.c.l.b16 %v1266
    %v1966 = vunpack.c.h.b16 %v1266
    %v1967 = vunpack.c.l.b16 %v1267
    %v1968 = vunpack.c.h.b16 %v1267
    %v1969 = vunpack.c.l.b16 %v1268
    %v1970 = vunpack.c.h.b16 %v1268
    %v1971 = vunpack.c.l.b16 %v1269
    %v1972 = vunpack.c.h.b16 %v1269
    %v1973 = vunpack.c.l.b16 %v1270
    %v1974 = vunpack.c.h.b16 %v1270
    %v1975 = vunpack.c.l.b16 %v1271
    %v1976 = vunpack.c.h.b16 %v1271
    %v1977 = vunpack.c.l.b16 %v1272
    %v1978 = vunpack.c.h.b16 %v1272
    %v1979 = vunpack.c.l.b16 %v1273
    %v1980 = vunpack.c.h.b16 %v1273
    %v1981 = vunpack.c.l.b16 %v1274
    %v1982 = vunpack.c.h.b16 %v1274
    %v1983 = vunpack.c.l.b16 %v1275
    %v1984 = vunpack.c.h.b16 %v1275
    %v1985 = vunpack.c.l.b16 %v1276
    %v1986 = vunpack.c.h.b16 %v1276
    %v1987 = vunpack.c.l.b16 %v1277
    %v1988 = vunpack.c.h.b16 %v1277
    %v1989 = vunpack.c.l.b16 %v1278
    %v1990 = vunpack.c.h.b16 %v1278
    %v1991 = vunpack.c.l.b16 %v1279
    %v1992 = vunpack.c.h.b16 %v1279
    %v1993 = vpack.c.b16 %v1869, %v1865
    %v1994 = vpack.c.b16 %v1870, %v1866
    %v1995 = vpack.c.b16 %v1871, %v1867
    %v1996 = vpack.c.b16 %v1872, %v1868
    %v1997 = vpack.c.b16 %v1877, %v1873
    %v1998 = vpack.c.b16 %v1878, %v1874
    %v1999 = vpack.c.b16 %v1879, %v1875
    %v2000 = vpack.c.b16 %v1880, %v1876
    %v2001 = vpack.c.b16 %v1885, %v1881
    %v2002 = vpack.c.b16 %v1886, %v1882
    %v2003 = vpack.c.b16 %v1887, %v1883
    %v2004 = vpack.c.b16 %v1888, %v1884
    %v2005 = vpack.c.b16 %v1893, %v1889
    %v2006 = vpack.c.b16 %v1894, %v1890
    %v2007 = vpack.c.b16 %v1895, %v1891
    %v2008 = vpack.c.b16 %v1896, %v1892
    %v2009 = vpack.c.b16 %v1901, %v1897
    %v2010 = vpack.c.b16 %v1902, %v1898
    %v2011 = vpack.c.b16 %v1903, %v1899
    %v2012 = vpack.c.b16 %v1904, %v1900
    %v2013 = vpack.c.b16 %v1909, %v1905
    %v2014 = vpack.c.b16 %v1910, %v1906
    %v2015 = vpack.c.b16 %v1911, %v1907
    %v2016 = vpack.c.b16 %v1912, %v1908
    %v2017 = vpack.c.b16 %v1917, %v1913
    %v2018 = vpack.c.b16 %v1918, %v1914
    %v2019 = vpack.c.b16 %v1919, %v1915
    %v2020 = vpack.c.b16 %v1920, %v1916
    %v2021 = vpack.c.b16 %v1925, %v1921
    %v2022 = vpack.c.b16 %v1926, %v1922
    %v2023 = vpack.c.b16 %v1927, %v1923
    %v2024 = vpack.c.b16 %v1928, %v1924
    %v2025 = vpack.c.b16 %v1933, %v1929
    %v2026 = vpack.c.b16 %v1934, %v1930
    %v2027 = vpack.c.b16 %v1935, %v1931
    %v2028 = vpack.c.b16 %v1936, %v1932
    %v2029 = vpack.c.b16 %v1941, %v1937
    %v2030 = vpack.c.b16 %v1942, %v1938
    %v2031 = vpack.c.b16 %v1943, %v1939
    %v2032 = vpack.c.b16 %v1944, %v1940
    %v2033 = vpack.c.b16 %v1949, %v1945
    %v2034 = vpack.c.b16 %v1950, %v1946
    %v2035 = vpack.c.b16 %v1951, %v1947
    %v2036 = vpack.c.b16 %v1952, %v1948
    %v2037 = vpack.c.b16 %v1957, %v1953
    %v2038 = vpack.c.b16 %v1958, %v1954
    %v2039 = vpack.c.b16 %v1959, %v1955
    %v2040 = vpack.c.b16 %v1960, %v1956
    %v2041 = vpack.c.b16 %v1965, %v1961
    %v2042 = vpack.c.b16 %v1966, %v1962
    %v2043 = vpack.c.b16 %v1967, %v1963
    %v2044 = vpack.c.b16 %v1968, %v1964
    %v2045 = vpack.c.b16 %v1973, %v1969
    %v2046 = vpack.c.b16 %v1974, %v1970
    %v2047 = vpack.c.b16 %v1975, %v1971
    %v2048 = vpack.c.b16 %v1976, %v1972
    %v2049 = vpack.c.b16 %v1981, %v1977
    %v2050 = vpack.c.b16 %v1982, %v1978
    %v2051 = vpack.c.b16 %v1983, %v1979
    %v2052 = vpack.c.b16 %v1984, %v1980
    %v2053 = vpack.c.b16 %v1989, %v1985
    %v2054 = vpack.c.b16 %v1990, %v1986
    %v2055 = vpack.c.b16 %v1991, %v1987
    %v2056 = vpack.c.b16 %v1992, %v1988
    %2121 = vmatpush.bf16.msra.mxu0 %v2021
    %2122 = vmatpush.bf16.msra.mxu0 %v2017
    %2123 = vmatpush.bf16.msra.mxu0 %v2013
    %2124 = vmatpush.bf16.msra.mxu0 %v2009
    %2125 = vmatpush.bf16.msra.mxu0 %v2005
    %2126 = vmatpush.bf16.msra.mxu0 %v2001
    %2127 = vmatpush.bf16.msra.mxu0 %v1997
    %2128 = vmatpush.bf16.msra.mxu0 %v1993
    %2129 = vmatmul.bf16.gmra.mxu0 %v1214
    %v2130 = vpop.f32.mrf.mxu0
    %v2131 = vadd.f32 %v1720, %v2130
    %v2132 = vpop.f32.mrf.mxu0
    %2133 = vdwg.mxu0
    %2134 = vmatpush.bf16.msra.mxu0 %v2053
    %2135 = vmatpush.bf16.msra.mxu0 %v2049
    %2136 = vmatpush.bf16.msra.mxu0 %v2045
    %2137 = vmatpush.bf16.msra.mxu0 %v2041
    %2138 = vmatpush.bf16.msra.mxu0 %v2037
    %2139 = vmatpush.bf16.msra.mxu0 %v2033
    %2140 = vmatpush.bf16.msra.mxu0 %v2029
    %2141 = vmatpush.bf16.msra.mxu0 %v2025
    %2142 = vmatmul.bf16.gmra.mxu0 %v1215
    %v2143 = vpop.f32.mrf.mxu0
    %v2144 = vadd.f32 %v2131, %v2143
    %v2145 = vpop.f32.mrf.mxu0
    %2146 = vdwg.mxu0
    %2147 = vmatpush.bf16.msra.mxu0 %v2022
    %2148 = vmatpush.bf16.msra.mxu0 %v2018
    %2149 = vmatpush.bf16.msra.mxu0 %v2014
    %2150 = vmatpush.bf16.msra.mxu0 %v2010
    %2151 = vmatpush.bf16.msra.mxu0 %v2006
    %2152 = vmatpush.bf16.msra.mxu0 %v2002
    %2153 = vmatpush.bf16.msra.mxu0 %v1998
    %2154 = vmatpush.bf16.msra.mxu0 %v1994
    %2155 = vmatmul.bf16.gmra.mxu0 %v1214
    %v2156 = vpop.f32.mrf.mxu0
    %v2157 = vadd.f32 %v1746, %v2156
    %v2158 = vpop.f32.mrf.mxu0
    %2159 = vdwg.mxu0
    %2160 = vmatpush.bf16.msra.mxu0 %v2054
    %2161 = vmatpush.bf16.msra.mxu0 %v2050
    %2162 = vmatpush.bf16.msra.mxu0 %v2046
    %2163 = vmatpush.bf16.msra.mxu0 %v2042
    %2164 = vmatpush.bf16.msra.mxu0 %v2038
    %2165 = vmatpush.bf16.msra.mxu0 %v2034
    %2166 = vmatpush.bf16.msra.mxu0 %v2030
    %2167 = vmatpush.bf16.msra.mxu0 %v2026
    %2168 = vmatmul.bf16.gmra.mxu0 %v1215
    %v2169 = vpop.f32.mrf.mxu0
    %v2170 = vadd.f32 %v2157, %v2169
    %v2171 = vpop.f32.mrf.mxu0
    %2172 = vdwg.mxu0
    %2173 = vmatpush.bf16.msra.mxu0 %v2023
    %2174 = vmatpush.bf16.msra.mxu0 %v2019
    %2175 = vmatpush.bf16.msra.mxu0 %v2015
    %2176 = vmatpush.bf16.msra.mxu0 %v2011
    %2177 = vmatpush.bf16.msra.mxu0 %v2007
    %2178 = vmatpush.bf16.msra.mxu0 %v2003
    %2179 = vmatpush.bf16.msra.mxu0 %v1999
    %2180 = vmatpush.bf16.msra.mxu0 %v1995
    %2181 = vmatmul.bf16.gmra.mxu0 %v1214
    %v2182 = vpop.f32.mrf.mxu0
    %v2183 = vadd.f32 %v1772, %v2182
    %v2184 = vpop.f32.mrf.mxu0
    %2185 = vdwg.mxu0
    %2186 = vmatpush.bf16.msra.mxu0 %v2055
    %2187 = vmatpush.bf16.msra.mxu0 %v2051
    %2188 = vmatpush.bf16.msra.mxu0 %v2047
    %2189 = vmatpush.bf16.msra.mxu0 %v2043
    %2190 = vmatpush.bf16.msra.mxu0 %v2039
    %2191 = vmatpush.bf16.msra.mxu0 %v2035
    %2192 = vmatpush.bf16.msra.mxu0 %v2031
    %2193 = vmatpush.bf16.msra.mxu0 %v2027
    %2194 = vmatmul.bf16.gmra.mxu0 %v1215
    %v2195 = vpop.f32.mrf.mxu0
    %v2196 = vadd.f32 %v2183, %v2195
    %v2197 = vpop.f32.mrf.mxu0
    %2198 = vdwg.mxu0
    %2199 = vmatpush.bf16.msra.mxu0 %v2024
    %2200 = vmatpush.bf16.msra.mxu0 %v2020
    %2201 = vmatpush.bf16.msra.mxu0 %v2016
    %2202 = vmatpush.bf16.msra.mxu0 %v2012
    %2203 = vmatpush.bf16.msra.mxu0 %v2008
    %2204 = vmatpush.bf16.msra.mxu0 %v2004
    %2205 = vmatpush.bf16.msra.mxu0 %v2000
    %2206 = vmatpush.bf16.msra.mxu0 %v1996
    %2207 = vmatmul.bf16.gmra.mxu0 %v1214
    %v2208 = vpop.f32.mrf.mxu0
    %v2209 = vadd.f32 %v1798, %v2208
    %v2210 = vpop.f32.mrf.mxu0
    %2211 = vdwg.mxu0
    %2212 = vmatpush.bf16.msra.mxu0 %v2056
    %2213 = vmatpush.bf16.msra.mxu0 %v2052
    %2214 = vmatpush.bf16.msra.mxu0 %v2048
    %2215 = vmatpush.bf16.msra.mxu0 %v2044
    %2216 = vmatpush.bf16.msra.mxu0 %v2040
    %2217 = vmatpush.bf16.msra.mxu0 %v2036
    %2218 = vmatpush.bf16.msra.mxu0 %v2032
    %2219 = vmatpush.bf16.msra.mxu0 %v2028
    %2220 = vmatmul.bf16.gmra.mxu0 %v1215
    %v2221 = vpop.f32.mrf.mxu0
    %v2222 = vadd.f32 %v2209, %v2221
    %v2223 = vpop.f32.mrf.mxu0
    %2224 = vdwg.mxu0
    %s2225 = scalar_lea.vmem [#allocation7], 2
    %v2226 = vld [vmem:[%s2225] sm:$0x1]
    %v2228 = vsel %vm1177, %v2226, 0
    %2230 = vmatpush.bf16.msra.mxu0 0
    %2231 = vmatpush.bf16.msra.mxu0 0
    %2232 = vmatpush.bf16.msra.mxu0 0
    %2233 = vmatpush.bf16.msra.mxu0 0
    %2234 = vmatpush.bf16.msra.mxu0 0
    %2235 = vmatpush.bf16.msra.mxu0 0
    %2236 = vmatpush.bf16.msra.mxu0 0
    %2237 = vmatpush.bf16.msra.mxu0 %v1183
    %2238 = vmatmul.bf16.gmra.mxu0 %v2228
    %v2239 = vpop.f32.mrf.mxu0
    %v2240 = vadd.f32 0.0, %v2239
    %v2241 = vpop.f32.mrf.mxu0
    %2242 = vdwg.mxu0
    %2243 = vmatpush.bf16.msra.mxu0 0
    %2244 = vmatpush.bf16.msra.mxu0 0
    %2245 = vmatpush.bf16.msra.mxu0 0
    %2246 = vmatpush.bf16.msra.mxu0 0
    %2247 = vmatpush.bf16.msra.mxu0 0
    %2248 = vmatpush.bf16.msra.mxu0 0
    %2249 = vmatpush.bf16.msra.mxu0 0
    %2250 = vmatpush.bf16.msra.mxu0 %v1186
    %2251 = vmatmul.bf16.gmra.mxu0 %v2228
    %v2252 = vpop.f32.mrf.mxu0
    %v2253 = vadd.f32 0.0, %v2252
    %v2254 = vpop.f32.mrf.mxu0
    %2255 = vdwg.mxu0
    %v2256 = vpack.c.bf16 %v2240, %v2240
    %v2257 = vpack.c.bf16 %v2253, %v2253
    %v2258 = vld [vmem:[#allocation2 + $0x400] sm:$0xff]
    %v2259 = vld [vmem:[#allocation2 + $0x408] sm:$0xff]
    %v2260 = vld [vmem:[#allocation2 + $0x410] sm:$0xff]
    %v2261 = vld [vmem:[#allocation2 + $0x418] sm:$0xff]
    %v2262 = vld [vmem:[#allocation2 + $0x420] sm:$0xff]
    %v2263 = vld [vmem:[#allocation2 + $0x428] sm:$0xff]
    %v2264 = vld [vmem:[#allocation2 + $0x430] sm:$0xff]
    %v2265 = vld [vmem:[#allocation2 + $0x438] sm:$0xff]
    %v2266 = vld [vmem:[#allocation2 + $0x440] sm:$0xff]
    %v2267 = vld [vmem:[#allocation2 + $0x448] sm:$0xff]
    %v2268 = vld [vmem:[#allocation2 + $0x450] sm:$0xff]
    %v2269 = vld [vmem:[#allocation2 + $0x458] sm:$0xff]
    %v2270 = vld [vmem:[#allocation2 + $0x460] sm:$0xff]
    %v2271 = vld [vmem:[#allocation2 + $0x468] sm:$0xff]
    %v2272 = vld [vmem:[#allocation2 + $0x470] sm:$0xff]
    %v2273 = vld [vmem:[#allocation2 + $0x478] sm:$0xff]
    %v2274 = vld [vmem:[#allocation2 + $0x480] sm:$0xff]
    %v2275 = vld [vmem:[#allocation2 + $0x488] sm:$0xff]
    %v2276 = vld [vmem:[#allocation2 + $0x490] sm:$0xff]
    %v2277 = vld [vmem:[#allocation2 + $0x498] sm:$0xff]
    %v2278 = vld [vmem:[#allocation2 + $0x4a0] sm:$0xff]
    %v2279 = vld [vmem:[#allocation2 + $0x4a8] sm:$0xff]
    %v2280 = vld [vmem:[#allocation2 + $0x4b0] sm:$0xff]
    %v2281 = vld [vmem:[#allocation2 + $0x4b8] sm:$0xff]
    %v2282 = vld [vmem:[#allocation2 + $0x4c0] sm:$0xff]
    %v2283 = vld [vmem:[#allocation2 + $0x4c8] sm:$0xff]
    %v2284 = vld [vmem:[#allocation2 + $0x4d0] sm:$0xff]
    %v2285 = vld [vmem:[#allocation2 + $0x4d8] sm:$0xff]
    %v2286 = vld [vmem:[#allocation2 + $0x4e0] sm:$0xff]
    %v2287 = vld [vmem:[#allocation2 + $0x4e8] sm:$0xff]
    %v2288 = vld [vmem:[#allocation2 + $0x4f0] sm:$0xff]
    %v2289 = vld [vmem:[#allocation2 + $0x4f8] sm:$0xff]
    %v2290 = vld [vmem:[#allocation2 + $0x500] sm:$0xff]
    %v2291 = vld [vmem:[#allocation2 + $0x508] sm:$0xff]
    %v2292 = vld [vmem:[#allocation2 + $0x510] sm:$0xff]
    %v2293 = vld [vmem:[#allocation2 + $0x518] sm:$0xff]
    %v2294 = vld [vmem:[#allocation2 + $0x520] sm:$0xff]
    %v2295 = vld [vmem:[#allocation2 + $0x528] sm:$0xff]
    %v2296 = vld [vmem:[#allocation2 + $0x530] sm:$0xff]
    %v2297 = vld [vmem:[#allocation2 + $0x538] sm:$0xff]
    %v2298 = vld [vmem:[#allocation2 + $0x540] sm:$0xff]
    %v2299 = vld [vmem:[#allocation2 + $0x548] sm:$0xff]
    %v2300 = vld [vmem:[#allocation2 + $0x550] sm:$0xff]
    %v2301 = vld [vmem:[#allocation2 + $0x558] sm:$0xff]
    %v2302 = vld [vmem:[#allocation2 + $0x560] sm:$0xff]
    %v2303 = vld [vmem:[#allocation2 + $0x568] sm:$0xff]
    %v2304 = vld [vmem:[#allocation2 + $0x570] sm:$0xff]
    %v2305 = vld [vmem:[#allocation2 + $0x578] sm:$0xff]
    %v2306 = vld [vmem:[#allocation2 + $0x580] sm:$0xff]
    %v2307 = vld [vmem:[#allocation2 + $0x588] sm:$0xff]
    %v2308 = vld [vmem:[#allocation2 + $0x590] sm:$0xff]
    %v2309 = vld [vmem:[#allocation2 + $0x598] sm:$0xff]
    %v2310 = vld [vmem:[#allocation2 + $0x5a0] sm:$0xff]
    %v2311 = vld [vmem:[#allocation2 + $0x5a8] sm:$0xff]
    %v2312 = vld [vmem:[#allocation2 + $0x5b0] sm:$0xff]
    %v2313 = vld [vmem:[#allocation2 + $0x5b8] sm:$0xff]
    %v2314 = vld [vmem:[#allocation2 + $0x5c0] sm:$0xff]
    %v2315 = vld [vmem:[#allocation2 + $0x5c8] sm:$0xff]
    %v2316 = vld [vmem:[#allocation2 + $0x5d0] sm:$0xff]
    %v2317 = vld [vmem:[#allocation2 + $0x5d8] sm:$0xff]
    %v2318 = vld [vmem:[#allocation2 + $0x5e0] sm:$0xff]
    %v2319 = vld [vmem:[#allocation2 + $0x5e8] sm:$0xff]
    %v2320 = vld [vmem:[#allocation2 + $0x5f0] sm:$0xff]
    %v2321 = vld [vmem:[#allocation2 + $0x5f8] sm:$0xff]
    %v2386 = vunpack.c.l.b16 %v2258
    %v2387 = vunpack.c.h.b16 %v2258
    %v2388 = vunpack.c.l.b16 %v2259
    %v2389 = vunpack.c.h.b16 %v2259
    %v2390 = vunpack.c.l.b16 %v2260
    %v2391 = vunpack.c.h.b16 %v2260
    %v2392 = vunpack.c.l.b16 %v2261
    %v2393 = vunpack.c.h.b16 %v2261
    %v2394 = vunpack.c.l.b16 %v2262
    %v2395 = vunpack.c.h.b16 %v2262
    %v2396 = vunpack.c.l.b16 %v2263
    %v2397 = vunpack.c.h.b16 %v2263
    %v2398 = vunpack.c.l.b16 %v2264
    %v2399 = vunpack.c.h.b16 %v2264
    %v2400 = vunpack.c.l.b16 %v2265
    %v2401 = vunpack.c.h.b16 %v2265
    %v2402 = vunpack.c.l.b16 %v2266
    %v2403 = vunpack.c.h.b16 %v2266
    %v2404 = vunpack.c.l.b16 %v2267
    %v2405 = vunpack.c.h.b16 %v2267
    %v2406 = vunpack.c.l.b16 %v2268
    %v2407 = vunpack.c.h.b16 %v2268
    %v2408 = vunpack.c.l.b16 %v2269
    %v2409 = vunpack.c.h.b16 %v2269
    %v2410 = vunpack.c.l.b16 %v2270
    %v2411 = vunpack.c.h.b16 %v2270
    %v2412 = vunpack.c.l.b16 %v2271
    %v2413 = vunpack.c.h.b16 %v2271
    %v2414 = vunpack.c.l.b16 %v2272
    %v2415 = vunpack.c.h.b16 %v2272
    %v2416 = vunpack.c.l.b16 %v2273
    %v2417 = vunpack.c.h.b16 %v2273
    %v2418 = vunpack.c.l.b16 %v2274
    %v2419 = vunpack.c.h.b16 %v2274
    %v2420 = vunpack.c.l.b16 %v2275
    %v2421 = vunpack.c.h.b16 %v2275
    %v2422 = vunpack.c.l.b16 %v2276
    %v2423 = vunpack.c.h.b16 %v2276
    %v2424 = vunpack.c.l.b16 %v2277
    %v2425 = vunpack.c.h.b16 %v2277
    %v2426 = vunpack.c.l.b16 %v2278
    %v2427 = vunpack.c.h.b16 %v2278
    %v2428 = vunpack.c.l.b16 %v2279
    %v2429 = vunpack.c.h.b16 %v2279
    %v2430 = vunpack.c.l.b16 %v2280
    %v2431 = vunpack.c.h.b16 %v2280
    %v2432 = vunpack.c.l.b16 %v2281
    %v2433 = vunpack.c.h.b16 %v2281
    %v2434 = vunpack.c.l.b16 %v2282
    %v2435 = vunpack.c.h.b16 %v2282
    %v2436 = vunpack.c.l.b16 %v2283
    %v2437 = vunpack.c.h.b16 %v2283
    %v2438 = vunpack.c.l.b16 %v2284
    %v2439 = vunpack.c.h.b16 %v2284
    %v2440 = vunpack.c.l.b16 %v2285
    %v2441 = vunpack.c.h.b16 %v2285
    %v2442 = vunpack.c.l.b16 %v2286
    %v2443 = vunpack.c.h.b16 %v2286
    %v2444 = vunpack.c.l.b16 %v2287
    %v2445 = vunpack.c.h.b16 %v2287
    %v2446 = vunpack.c.l.b16 %v2288
    %v2447 = vunpack.c.h.b16 %v2288
    %v2448 = vunpack.c.l.b16 %v2289
    %v2449 = vunpack.c.h.b16 %v2289
    %v2450 = vunpack.c.l.b16 %v2290
    %v2451 = vunpack.c.h.b16 %v2290
    %v2452 = vunpack.c.l.b16 %v2291
    %v2453 = vunpack.c.h.b16 %v2291
    %v2454 = vunpack.c.l.b16 %v2292
    %v2455 = vunpack.c.h.b16 %v2292
    %v2456 = vunpack.c.l.b16 %v2293
    %v2457 = vunpack.c.h.b16 %v2293
    %v2458 = vunpack.c.l.b16 %v2294
    %v2459 = vunpack.c.h.b16 %v2294
    %v2460 = vunpack.c.l.b16 %v2295
    %v2461 = vunpack.c.h.b16 %v2295
    %v2462 = vunpack.c.l.b16 %v2296
    %v2463 = vunpack.c.h.b16 %v2296
    %v2464 = vunpack.c.l.b16 %v2297
    %v2465 = vunpack.c.h.b16 %v2297
    %v2466 = vunpack.c.l.b16 %v2298
    %v2467 = vunpack.c.h.b16 %v2298
    %v2468 = vunpack.c.l.b16 %v2299
    %v2469 = vunpack.c.h.b16 %v2299
    %v2470 = vunpack.c.l.b16 %v2300
    %v2471 = vunpack.c.h.b16 %v2300
    %v2472 = vunpack.c.l.b16 %v2301
    %v2473 = vunpack.c.h.b16 %v2301
    %v2474 = vunpack.c.l.b16 %v2302
    %v2475 = vunpack.c.h.b16 %v2302
    %v2476 = vunpack.c.l.b16 %v2303
    %v2477 = vunpack.c.h.b16 %v2303
    %v2478 = vunpack.c.l.b16 %v2304
    %v2479 = vunpack.c.h.b16 %v2304
    %v2480 = vunpack.c.l.b16 %v2305
    %v2481 = vunpack.c.h.b16 %v2305
    %v2482 = vunpack.c.l.b16 %v2306
    %v2483 = vunpack.c.h.b16 %v2306
    %v2484 = vunpack.c.l.b16 %v2307
    %v2485 = vunpack.c.h.b16 %v2307
    %v2486 = vunpack.c.l.b16 %v2308
    %v2487 = vunpack.c.h.b16 %v2308
    %v2488 = vunpack.c.l.b16 %v2309
    %v2489 = vunpack.c.h.b16 %v2309
    %v2490 = vunpack.c.l.b16 %v2310
    %v2491 = vunpack.c.h.b16 %v2310
    %v2492 = vunpack.c.l.b16 %v2311
    %v2493 = vunpack.c.h.b16 %v2311
    %v2494 = vunpack.c.l.b16 %v2312
    %v2495 = vunpack.c.h.b16 %v2312
    %v2496 = vunpack.c.l.b16 %v2313
    %v2497 = vunpack.c.h.b16 %v2313
    %v2498 = vunpack.c.l.b16 %v2314
    %v2499 = vunpack.c.h.b16 %v2314
    %v2500 = vunpack.c.l.b16 %v2315
    %v2501 = vunpack.c.h.b16 %v2315
    %v2502 = vunpack.c.l.b16 %v2316
    %v2503 = vunpack.c.h.b16 %v2316
    %v2504 = vunpack.c.l.b16 %v2317
    %v2505 = vunpack.c.h.b16 %v2317
    %v2506 = vunpack.c.l.b16 %v2318
    %v2507 = vunpack.c.h.b16 %v2318
    %v2508 = vunpack.c.l.b16 %v2319
    %v2509 = vunpack.c.h.b16 %v2319
    %v2510 = vunpack.c.l.b16 %v2320
    %v2511 = vunpack.c.h.b16 %v2320
    %v2512 = vunpack.c.l.b16 %v2321
    %v2513 = vunpack.c.h.b16 %v2321
    %v2514 = vpack.c.b16 %v2390, %v2386
    %v2515 = vpack.c.b16 %v2391, %v2387
    %v2516 = vpack.c.b16 %v2392, %v2388
    %v2517 = vpack.c.b16 %v2393, %v2389
    %v2518 = vpack.c.b16 %v2398, %v2394
    %v2519 = vpack.c.b16 %v2399, %v2395
    %v2520 = vpack.c.b16 %v2400, %v2396
    %v2521 = vpack.c.b16 %v2401, %v2397
    %v2522 = vpack.c.b16 %v2406, %v2402
    %v2523 = vpack.c.b16 %v2407, %v2403
    %v2524 = vpack.c.b16 %v2408, %v2404
    %v2525 = vpack.c.b16 %v2409, %v2405
    %v2526 = vpack.c.b16 %v2414, %v2410
    %v2527 = vpack.c.b16 %v2415, %v2411
    %v2528 = vpack.c.b16 %v2416, %v2412
    %v2529 = vpack.c.b16 %v2417, %v2413
    %v2530 = vpack.c.b16 %v2422, %v2418
    %v2531 = vpack.c.b16 %v2423, %v2419
    %v2532 = vpack.c.b16 %v2424, %v2420
    %v2533 = vpack.c.b16 %v2425, %v2421
    %v2534 = vpack.c.b16 %v2430, %v2426
    %v2535 = vpack.c.b16 %v2431, %v2427
    %v2536 = vpack.c.b16 %v2432, %v2428
    %v2537 = vpack.c.b16 %v2433, %v2429
    %v2538 = vpack.c.b16 %v2438, %v2434
    %v2539 = vpack.c.b16 %v2439, %v2435
    %v2540 = vpack.c.b16 %v2440, %v2436
    %v2541 = vpack.c.b16 %v2441, %v2437
    %v2542 = vpack.c.b16 %v2446, %v2442
    %v2543 = vpack.c.b16 %v2447, %v2443
    %v2544 = vpack.c.b16 %v2448, %v2444
    %v2545 = vpack.c.b16 %v2449, %v2445
    %v2546 = vpack.c.b16 %v2454, %v2450
    %v2547 = vpack.c.b16 %v2455, %v2451
    %v2548 = vpack.c.b16 %v2456, %v2452
    %v2549 = vpack.c.b16 %v2457, %v2453
    %v2550 = vpack.c.b16 %v2462, %v2458
    %v2551 = vpack.c.b16 %v2463, %v2459
    %v2552 = vpack.c.b16 %v2464, %v2460
    %v2553 = vpack.c.b16 %v2465, %v2461
    %v2554 = vpack.c.b16 %v2470, %v2466
    %v2555 = vpack.c.b16 %v2471, %v2467
    %v2556 = vpack.c.b16 %v2472, %v2468
    %v2557 = vpack.c.b16 %v2473, %v2469
    %v2558 = vpack.c.b16 %v2478, %v2474
    %v2559 = vpack.c.b16 %v2479, %v2475
    %v2560 = vpack.c.b16 %v2480, %v2476
    %v2561 = vpack.c.b16 %v2481, %v2477
    %v2562 = vpack.c.b16 %v2486, %v2482
    %v2563 = vpack.c.b16 %v2487, %v2483
    %v2564 = vpack.c.b16 %v2488, %v2484
    %v2565 = vpack.c.b16 %v2489, %v2485
    %v2566 = vpack.c.b16 %v2494, %v2490
    %v2567 = vpack.c.b16 %v2495, %v2491
    %v2568 = vpack.c.b16 %v2496, %v2492
    %v2569 = vpack.c.b16 %v2497, %v2493
    %v2570 = vpack.c.b16 %v2502, %v2498
    %v2571 = vpack.c.b16 %v2503, %v2499
    %v2572 = vpack.c.b16 %v2504, %v2500
    %v2573 = vpack.c.b16 %v2505, %v2501
    %v2574 = vpack.c.b16 %v2510, %v2506
    %v2575 = vpack.c.b16 %v2511, %v2507
    %v2576 = vpack.c.b16 %v2512, %v2508
    %v2577 = vpack.c.b16 %v2513, %v2509
    %2642 = vmatpush.bf16.msra.mxu0 %v2542
    %2643 = vmatpush.bf16.msra.mxu0 %v2538
    %2644 = vmatpush.bf16.msra.mxu0 %v2534
    %2645 = vmatpush.bf16.msra.mxu0 %v2530
    %2646 = vmatpush.bf16.msra.mxu0 %v2526
    %2647 = vmatpush.bf16.msra.mxu0 %v2522
    %2648 = vmatpush.bf16.msra.mxu0 %v2518
    %2649 = vmatpush.bf16.msra.mxu0 %v2514
    %2650 = vmatmul.bf16.gmra.mxu0 %v2256
    %v2651 = vpop.f32.mrf.mxu0
    %v2652 = vadd.f32 0.0, %v2651
    %v2653 = vpop.f32.mrf.mxu0
    %2654 = vdwg.mxu0
    %2655 = vmatpush.bf16.msra.mxu0 %v2574
    %2656 = vmatpush.bf16.msra.mxu0 %v2570
    %2657 = vmatpush.bf16.msra.mxu0 %v2566
    %2658 = vmatpush.bf16.msra.mxu0 %v2562
    %2659 = vmatpush.bf16.msra.mxu0 %v2558
    %2660 = vmatpush.bf16.msra.mxu0 %v2554
    %2661 = vmatpush.bf16.msra.mxu0 %v2550
    %2662 = vmatpush.bf16.msra.mxu0 %v2546
    %2663 = vmatmul.bf16.gmra.mxu0 %v2257
    %v2664 = vpop.f32.mrf.mxu0
    %v2665 = vadd.f32 %v2652, %v2664
    %v2666 = vpop.f32.mrf.mxu0
    %2667 = vdwg.mxu0
    %2668 = vmatpush.bf16.msra.mxu0 %v2543
    %2669 = vmatpush.bf16.msra.mxu0 %v2539
    %2670 = vmatpush.bf16.msra.mxu0 %v2535
    %2671 = vmatpush.bf16.msra.mxu0 %v2531
    %2672 = vmatpush.bf16.msra.mxu0 %v2527
    %2673 = vmatpush.bf16.msra.mxu0 %v2523
    %2674 = vmatpush.bf16.msra.mxu0 %v2519
    %2675 = vmatpush.bf16.msra.mxu0 %v2515
    %2676 = vmatmul.bf16.gmra.mxu0 %v2256
    %v2677 = vpop.f32.mrf.mxu0
    %v2678 = vadd.f32 0.0, %v2677
    %v2679 = vpop.f32.mrf.mxu0
    %2680 = vdwg.mxu0
    %2681 = vmatpush.bf16.msra.mxu0 %v2575
    %2682 = vmatpush.bf16.msra.mxu0 %v2571
    %2683 = vmatpush.bf16.msra.mxu0 %v2567
    %2684 = vmatpush.bf16.msra.mxu0 %v2563
    %2685 = vmatpush.bf16.msra.mxu0 %v2559
    %2686 = vmatpush.bf16.msra.mxu0 %v2555
    %2687 = vmatpush.bf16.msra.mxu0 %v2551
    %2688 = vmatpush.bf16.msra.mxu0 %v2547
    %2689 = vmatmul.bf16.gmra.mxu0 %v2257
    %v2690 = vpop.f32.mrf.mxu0
    %v2691 = vadd.f32 %v2678, %v2690
    %v2692 = vpop.f32.mrf.mxu0
    %2693 = vdwg.mxu0
    %2694 = vmatpush.bf16.msra.mxu0 %v2544
    %2695 = vmatpush.bf16.msra.mxu0 %v2540
    %2696 = vmatpush.bf16.msra.mxu0 %v2536
    %2697 = vmatpush.bf16.msra.mxu0 %v2532
    %2698 = vmatpush.bf16.msra.mxu0 %v2528
    %2699 = vmatpush.bf16.msra.mxu0 %v2524
    %2700 = vmatpush.bf16.msra.mxu0 %v2520
    %2701 = vmatpush.bf16.msra.mxu0 %v2516
    %2702 = vmatmul.bf16.gmra.mxu0 %v2256
    %v2703 = vpop.f32.mrf.mxu0
    %v2704 = vadd.f32 0.0, %v2703
    %v2705 = vpop.f32.mrf.mxu0
    %2706 = vdwg.mxu0
    %2707 = vmatpush.bf16.msra.mxu0 %v2576
    %2708 = vmatpush.bf16.msra.mxu0 %v2572
    %2709 = vmatpush.bf16.msra.mxu0 %v2568
    %2710 = vmatpush.bf16.msra.mxu0 %v2564
    %2711 = vmatpush.bf16.msra.mxu0 %v2560
    %2712 = vmatpush.bf16.msra.mxu0 %v2556
    %2713 = vmatpush.bf16.msra.mxu0 %v2552
    %2714 = vmatpush.bf16.msra.mxu0 %v2548
    %2715 = vmatmul.bf16.gmra.mxu0 %v2257
    %v2716 = vpop.f32.mrf.mxu0
    %v2717 = vadd.f32 %v2704, %v2716
    %v2718 = vpop.f32.mrf.mxu0
    %2719 = vdwg.mxu0
    %2720 = vmatpush.bf16.msra.mxu0 %v2545
    %2721 = vmatpush.bf16.msra.mxu0 %v2541
    %2722 = vmatpush.bf16.msra.mxu0 %v2537
    %2723 = vmatpush.bf16.msra.mxu0 %v2533
    %2724 = vmatpush.bf16.msra.mxu0 %v2529
    %2725 = vmatpush.bf16.msra.mxu0 %v2525
    %2726 = vmatpush.bf16.msra.mxu0 %v2521
    %2727 = vmatpush.bf16.msra.mxu0 %v2517
    %2728 = vmatmul.bf16.gmra.mxu0 %v2256
    %v2729 = vpop.f32.mrf.mxu0
    %v2730 = vadd.f32 0.0, %v2729
    %v2731 = vpop.f32.mrf.mxu0
    %2732 = vdwg.mxu0
    %2733 = vmatpush.bf16.msra.mxu0 %v2577
    %2734 = vmatpush.bf16.msra.mxu0 %v2573
    %2735 = vmatpush.bf16.msra.mxu0 %v2569
    %2736 = vmatpush.bf16.msra.mxu0 %v2565
    %2737 = vmatpush.bf16.msra.mxu0 %v2561
    %2738 = vmatpush.bf16.msra.mxu0 %v2557
    %2739 = vmatpush.bf16.msra.mxu0 %v2553
    %2740 = vmatpush.bf16.msra.mxu0 %v2549
    %2741 = vmatmul.bf16.gmra.mxu0 %v2257
    %v2742 = vpop.f32.mrf.mxu0
    %v2743 = vadd.f32 %v2730, %v2742
    %v2744 = vpop.f32.mrf.mxu0
    %2745 = vdwg.mxu0
    %v2746 = vadd.f32 %v2144, %v2665
    %v2747 = vadd.f32 %v2170, %v2691
    %v2748 = vadd.f32 %v2196, %v2717
    %v2749 = vadd.f32 %v2222, %v2743
    %s2750 = scalar_lea.vmem [#allocation7], 3
    %v2751 = vld [vmem:[%s2750] sm:$0x1]
    %v2753 = vsel %vm1177, %v2751, 0
    %2755 = vmatpush.bf16.msra.mxu0 0
    %2756 = vmatpush.bf16.msra.mxu0 0
    %2757 = vmatpush.bf16.msra.mxu0 0
    %2758 = vmatpush.bf16.msra.mxu0 0
    %2759 = vmatpush.bf16.msra.mxu0 0
    %2760 = vmatpush.bf16.msra.mxu0 0
    %2761 = vmatpush.bf16.msra.mxu0 0
    %2762 = vmatpush.bf16.msra.mxu0 %v1183
    %2763 = vmatmul.bf16.gmra.mxu0 %v2753
    %v2764 = vpop.f32.mrf.mxu0
    %v2765 = vadd.f32 0.0, %v2764
    %v2766 = vpop.f32.mrf.mxu0
    %2767 = vdwg.mxu0
    %2768 = vmatpush.bf16.msra.mxu0 0
    %2769 = vmatpush.bf16.msra.mxu0 0
    %2770 = vmatpush.bf16.msra.mxu0 0
    %2771 = vmatpush.bf16.msra.mxu0 0
    %2772 = vmatpush.bf16.msra.mxu0 0
    %2773 = vmatpush.bf16.msra.mxu0 0
    %2774 = vmatpush.bf16.msra.mxu0 0
    %2775 = vmatpush.bf16.msra.mxu0 %v1186
    %2776 = vmatmul.bf16.gmra.mxu0 %v2753
    %v2777 = vpop.f32.mrf.mxu0
    %v2778 = vadd.f32 0.0, %v2777
    %v2779 = vpop.f32.mrf.mxu0
    %2780 = vdwg.mxu0
    %v2781 = vpack.c.bf16 %v2765, %v2765
    %v2782 = vpack.c.bf16 %v2778, %v2778
    %v2783 = vld [vmem:[#allocation2 + $0x600] sm:$0xff]
    %v2784 = vld [vmem:[#allocation2 + $0x608] sm:$0xff]
    %v2785 = vld [vmem:[#allocation2 + $0x610] sm:$0xff]
    %v2786 = vld [vmem:[#allocation2 + $0x618] sm:$0xff]
    %v2787 = vld [vmem:[#allocation2 + $0x620] sm:$0xff]
    %v2788 = vld [vmem:[#allocation2 + $0x628] sm:$0xff]
    %v2789 = vld [vmem:[#allocation2 + $0x630] sm:$0xff]
    %v2790 = vld [vmem:[#allocation2 + $0x638] sm:$0xff]
    %v2791 = vld [vmem:[#allocation2 + $0x640] sm:$0xff]
    %v2792 = vld [vmem:[#allocation2 + $0x648] sm:$0xff]
    %v2793 = vld [vmem:[#allocation2 + $0x650] sm:$0xff]
    %v2794 = vld [vmem:[#allocation2 + $0x658] sm:$0xff]
    %v2795 = vld [vmem:[#allocation2 + $0x660] sm:$0xff]
    %v2796 = vld [vmem:[#allocation2 + $0x668] sm:$0xff]
    %v2797 = vld [vmem:[#allocation2 + $0x670] sm:$0xff]
    %v2798 = vld [vmem:[#allocation2 + $0x678] sm:$0xff]
    %v2799 = vld [vmem:[#allocation2 + $0x680] sm:$0xff]
    %v2800 = vld [vmem:[#allocation2 + $0x688] sm:$0xff]
    %v2801 = vld [vmem:[#allocation2 + $0x690] sm:$0xff]
    %v2802 = vld [vmem:[#allocation2 + $0x698] sm:$0xff]
    %v2803 = vld [vmem:[#allocation2 + $0x6a0] sm:$0xff]
    %v2804 = vld [vmem:[#allocation2 + $0x6a8] sm:$0xff]
    %v2805 = vld [vmem:[#allocation2 + $0x6b0] sm:$0xff]
    %v2806 = vld [vmem:[#allocation2 + $0x6b8] sm:$0xff]
    %v2807 = vld [vmem:[#allocation2 + $0x6c0] sm:$0xff]
    %v2808 = vld [vmem:[#allocation2 + $0x6c8] sm:$0xff]
    %v2809 = vld [vmem:[#allocation2 + $0x6d0] sm:$0xff]
    %v2810 = vld [vmem:[#allocation2 + $0x6d8] sm:$0xff]
    %v2811 = vld [vmem:[#allocation2 + $0x6e0] sm:$0xff]
    %v2812 = vld [vmem:[#allocation2 + $0x6e8] sm:$0xff]
    %v2813 = vld [vmem:[#allocation2 + $0x6f0] sm:$0xff]
    %v2814 = vld [vmem:[#allocation2 + $0x6f8] sm:$0xff]
    %v2815 = vld [vmem:[#allocation2 + $0x700] sm:$0xff]
    %v2816 = vld [vmem:[#allocation2 + $0x708] sm:$0xff]
    %v2817 = vld [vmem:[#allocation2 + $0x710] sm:$0xff]
    %v2818 = vld [vmem:[#allocation2 + $0x718] sm:$0xff]
    %v2819 = vld [vmem:[#allocation2 + $0x720] sm:$0xff]
    %v2820 = vld [vmem:[#allocation2 + $0x728] sm:$0xff]
    %v2821 = vld [vmem:[#allocation2 + $0x730] sm:$0xff]
    %v2822 = vld [vmem:[#allocation2 + $0x738] sm:$0xff]
    %v2823 = vld [vmem:[#allocation2 + $0x740] sm:$0xff]
    %v2824 = vld [vmem:[#allocation2 + $0x748] sm:$0xff]
    %v2825 = vld [vmem:[#allocation2 + $0x750] sm:$0xff]
    %v2826 = vld [vmem:[#allocation2 + $0x758] sm:$0xff]
    %v2827 = vld [vmem:[#allocation2 + $0x760] sm:$0xff]
    %v2828 = vld [vmem:[#allocation2 + $0x768] sm:$0xff]
    %v2829 = vld [vmem:[#allocation2 + $0x770] sm:$0xff]
    %v2830 = vld [vmem:[#allocation2 + $0x778] sm:$0xff]
    %v2831 = vld [vmem:[#allocation2 + $0x780] sm:$0xff]
    %v2832 = vld [vmem:[#allocation2 + $0x788] sm:$0xff]
    %v2833 = vld [vmem:[#allocation2 + $0x790] sm:$0xff]
    %v2834 = vld [vmem:[#allocation2 + $0x798] sm:$0xff]
    %v2835 = vld [vmem:[#allocation2 + $0x7a0] sm:$0xff]
    %v2836 = vld [vmem:[#allocation2 + $0x7a8] sm:$0xff]
    %v2837 = vld [vmem:[#allocation2 + $0x7b0] sm:$0xff]
    %v2838 = vld [vmem:[#allocation2 + $0x7b8] sm:$0xff]
    %v2839 = vld [vmem:[#allocation2 + $0x7c0] sm:$0xff]
    %v2840 = vld [vmem:[#allocation2 + $0x7c8] sm:$0xff]
    %v2841 = vld [vmem:[#allocation2 + $0x7d0] sm:$0xff]
    %v2842 = vld [vmem:[#allocation2 + $0x7d8] sm:$0xff]
    %v2843 = vld [vmem:[#allocation2 + $0x7e0] sm:$0xff]
    %v2844 = vld [vmem:[#allocation2 + $0x7e8] sm:$0xff]
    %v2845 = vld [vmem:[#allocation2 + $0x7f0] sm:$0xff]
    %v2846 = vld [vmem:[#allocation2 + $0x7f8] sm:$0xff]
    %v2911 = vunpack.c.l.b16 %v2783
    %v2912 = vunpack.c.h.b16 %v2783
    %v2913 = vunpack.c.l.b16 %v2784
    %v2914 = vunpack.c.h.b16 %v2784
    %v2915 = vunpack.c.l.b16 %v2785
    %v2916 = vunpack.c.h.b16 %v2785
    %v2917 = vunpack.c.l.b16 %v2786
    %v2918 = vunpack.c.h.b16 %v2786
    %v2919 = vunpack.c.l.b16 %v2787
    %v2920 = vunpack.c.h.b16 %v2787
    %v2921 = vunpack.c.l.b16 %v2788
    %v2922 = vunpack.c.h.b16 %v2788
    %v2923 = vunpack.c.l.b16 %v2789
    %v2924 = vunpack.c.h.b16 %v2789
    %v2925 = vunpack.c.l.b16 %v2790
    %v2926 = vunpack.c.h.b16 %v2790
    %v2927 = vunpack.c.l.b16 %v2791
    %v2928 = vunpack.c.h.b16 %v2791
    %v2929 = vunpack.c.l.b16 %v2792
    %v2930 = vunpack.c.h.b16 %v2792
    %v2931 = vunpack.c.l.b16 %v2793
    %v2932 = vunpack.c.h.b16 %v2793
    %v2933 = vunpack.c.l.b16 %v2794
    %v2934 = vunpack.c.h.b16 %v2794
    %v2935 = vunpack.c.l.b16 %v2795
    %v2936 = vunpack.c.h.b16 %v2795
    %v2937 = vunpack.c.l.b16 %v2796
    %v2938 = vunpack.c.h.b16 %v2796
    %v2939 = vunpack.c.l.b16 %v2797
    %v2940 = vunpack.c.h.b16 %v2797
    %v2941 = vunpack.c.l.b16 %v2798
    %v2942 = vunpack.c.h.b16 %v2798
    %v2943 = vunpack.c.l.b16 %v2799
    %v2944 = vunpack.c.h.b16 %v2799
    %v2945 = vunpack.c.l.b16 %v2800
    %v2946 = vunpack.c.h.b16 %v2800
    %v2947 = vunpack.c.l.b16 %v2801
    %v2948 = vunpack.c.h.b16 %v2801
    %v2949 = vunpack.c.l.b16 %v2802
    %v2950 = vunpack.c.h.b16 %v2802
    %v2951 = vunpack.c.l.b16 %v2803
    %v2952 = vunpack.c.h.b16 %v2803
    %v2953 = vunpack.c.l.b16 %v2804
    %v2954 = vunpack.c.h.b16 %v2804
    %v2955 = vunpack.c.l.b16 %v2805
    %v2956 = vunpack.c.h.b16 %v2805
    %v2957 = vunpack.c.l.b16 %v2806
    %v2958 = vunpack.c.h.b16 %v2806
    %v2959 = vunpack.c.l.b16 %v2807
    %v2960 = vunpack.c.h.b16 %v2807
    %v2961 = vunpack.c.l.b16 %v2808
    %v2962 = vunpack.c.h.b16 %v2808
    %v2963 = vunpack.c.l.b16 %v2809
    %v2964 = vunpack.c.h.b16 %v2809
    %v2965 = vunpack.c.l.b16 %v2810
    %v2966 = vunpack.c.h.b16 %v2810
    %v2967 = vunpack.c.l.b16 %v2811
    %v2968 = vunpack.c.h.b16 %v2811
    %v2969 = vunpack.c.l.b16 %v2812
    %v2970 = vunpack.c.h.b16 %v2812
    %v2971 = vunpack.c.l.b16 %v2813
    %v2972 = vunpack.c.h.b16 %v2813
    %v2973 = vunpack.c.l.b16 %v2814
    %v2974 = vunpack.c.h.b16 %v2814
    %v2975 = vunpack.c.l.b16 %v2815
    %v2976 = vunpack.c.h.b16 %v2815
    %v2977 = vunpack.c.l.b16 %v2816
    %v2978 = vunpack.c.h.b16 %v2816
    %v2979 = vunpack.c.l.b16 %v2817
    %v2980 = vunpack.c.h.b16 %v2817
    %v2981 = vunpack.c.l.b16 %v2818
    %v2982 = vunpack.c.h.b16 %v2818
    %v2983 = vunpack.c.l.b16 %v2819
    %v2984 = vunpack.c.h.b16 %v2819
    %v2985 = vunpack.c.l.b16 %v2820
    %v2986 = vunpack.c.h.b16 %v2820
    %v2987 = vunpack.c.l.b16 %v2821
    %v2988 = vunpack.c.h.b16 %v2821
    %v2989 = vunpack.c.l.b16 %v2822
    %v2990 = vunpack.c.h.b16 %v2822
    %v2991 = vunpack.c.l.b16 %v2823
    %v2992 = vunpack.c.h.b16 %v2823
    %v2993 = vunpack.c.l.b16 %v2824
    %v2994 = vunpack.c.h.b16 %v2824
    %v2995 = vunpack.c.l.b16 %v2825
    %v2996 = vunpack.c.h.b16 %v2825
    %v2997 = vunpack.c.l.b16 %v2826
    %v2998 = vunpack.c.h.b16 %v2826
    %v2999 = vunpack.c.l.b16 %v2827
    %v3000 = vunpack.c.h.b16 %v2827
    %v3001 = vunpack.c.l.b16 %v2828
    %v3002 = vunpack.c.h.b16 %v2828
    %v3003 = vunpack.c.l.b16 %v2829
    %v3004 = vunpack.c.h.b16 %v2829
    %v3005 = vunpack.c.l.b16 %v2830
    %v3006 = vunpack.c.h.b16 %v2830
    %v3007 = vunpack.c.l.b16 %v2831
    %v3008 = vunpack.c.h.b16 %v2831
    %v3009 = vunpack.c.l.b16 %v2832
    %v3010 = vunpack.c.h.b16 %v2832
    %v3011 = vunpack.c.l.b16 %v2833
    %v3012 = vunpack.c.h.b16 %v2833
    %v3013 = vunpack.c.l.b16 %v2834
    %v3014 = vunpack.c.h.b16 %v2834
    %v3015 = vunpack.c.l.b16 %v2835
    %v3016 = vunpack.c.h.b16 %v2835
    %v3017 = vunpack.c.l.b16 %v2836
    %v3018 = vunpack.c.h.b16 %v2836
    %v3019 = vunpack.c.l.b16 %v2837
    %v3020 = vunpack.c.h.b16 %v2837
    %v3021 = vunpack.c.l.b16 %v2838
    %v3022 = vunpack.c.h.b16 %v2838
    %v3023 = vunpack.c.l.b16 %v2839
    %v3024 = vunpack.c.h.b16 %v2839
    %v3025 = vunpack.c.l.b16 %v2840
    %v3026 = vunpack.c.h.b16 %v2840
    %v3027 = vunpack.c.l.b16 %v2841
    %v3028 = vunpack.c.h.b16 %v2841
    %v3029 = vunpack.c.l.b16 %v2842
    %v3030 = vunpack.c.h.b16 %v2842
    %v3031 = vunpack.c.l.b16 %v2843
    %v3032 = vunpack.c.h.b16 %v2843
    %v3033 = vunpack.c.l.b16 %v2844
    %v3034 = vunpack.c.h.b16 %v2844
    %v3035 = vunpack.c.l.b16 %v2845
    %v3036 = vunpack.c.h.b16 %v2845
    %v3037 = vunpack.c.l.b16 %v2846
    %v3038 = vunpack.c.h.b16 %v2846
    %v3039 = vpack.c.b16 %v2915, %v2911
    %v3040 = vpack.c.b16 %v2916, %v2912
    %v3041 = vpack.c.b16 %v2917, %v2913
    %v3042 = vpack.c.b16 %v2918, %v2914
    %v3043 = vpack.c.b16 %v2923, %v2919
    %v3044 = vpack.c.b16 %v2924, %v2920
    %v3045 = vpack.c.b16 %v2925, %v2921
    %v3046 = vpack.c.b16 %v2926, %v2922
    %v3047 = vpack.c.b16 %v2931, %v2927
    %v3048 = vpack.c.b16 %v2932, %v2928
    %v3049 = vpack.c.b16 %v2933, %v2929
    %v3050 = vpack.c.b16 %v2934, %v2930
    %v3051 = vpack.c.b16 %v2939, %v2935
    %v3052 = vpack.c.b16 %v2940, %v2936
    %v3053 = vpack.c.b16 %v2941, %v2937
    %v3054 = vpack.c.b16 %v2942, %v2938
    %v3055 = vpack.c.b16 %v2947, %v2943
    %v3056 = vpack.c.b16 %v2948, %v2944
    %v3057 = vpack.c.b16 %v2949, %v2945
    %v3058 = vpack.c.b16 %v2950, %v2946
    %v3059 = vpack.c.b16 %v2955, %v2951
    %v3060 = vpack.c.b16 %v2956, %v2952
    %v3061 = vpack.c.b16 %v2957, %v2953
    %v3062 = vpack.c.b16 %v2958, %v2954
    %v3063 = vpack.c.b16 %v2963, %v2959
    %v3064 = vpack.c.b16 %v2964, %v2960
    %v3065 = vpack.c.b16 %v2965, %v2961
    %v3066 = vpack.c.b16 %v2966, %v2962
    %v3067 = vpack.c.b16 %v2971, %v2967
    %v3068 = vpack.c.b16 %v2972, %v2968
    %v3069 = vpack.c.b16 %v2973, %v2969
    %v3070 = vpack.c.b16 %v2974, %v2970
    %v3071 = vpack.c.b16 %v2979, %v2975
    %v3072 = vpack.c.b16 %v2980, %v2976
    %v3073 = vpack.c.b16 %v2981, %v2977
    %v3074 = vpack.c.b16 %v2982, %v2978
    %v3075 = vpack.c.b16 %v2987, %v2983
    %v3076 = vpack.c.b16 %v2988, %v2984
    %v3077 = vpack.c.b16 %v2989, %v2985
    %v3078 = vpack.c.b16 %v2990, %v2986
    %v3079 = vpack.c.b16 %v2995, %v2991
    %v3080 = vpack.c.b16 %v2996, %v2992
    %v3081 = vpack.c.b16 %v2997, %v2993
    %v3082 = vpack.c.b16 %v2998, %v2994
    %v3083 = vpack.c.b16 %v3003, %v2999
    %v3084 = vpack.c.b16 %v3004, %v3000
    %v3085 = vpack.c.b16 %v3005, %v3001
    %v3086 = vpack.c.b16 %v3006, %v3002
    %v3087 = vpack.c.b16 %v3011, %v3007
    %v3088 = vpack.c.b16 %v3012, %v3008
    %v3089 = vpack.c.b16 %v3013, %v3009
    %v3090 = vpack.c.b16 %v3014, %v3010
    %v3091 = vpack.c.b16 %v3019, %v3015
    %v3092 = vpack.c.b16 %v3020, %v3016
    %v3093 = vpack.c.b16 %v3021, %v3017
    %v3094 = vpack.c.b16 %v3022, %v3018
    %v3095 = vpack.c.b16 %v3027, %v3023
    %v3096 = vpack.c.b16 %v3028, %v3024
    %v3097 = vpack.c.b16 %v3029, %v3025
    %v3098 = vpack.c.b16 %v3030, %v3026
    %v3099 = vpack.c.b16 %v3035, %v3031
    %v3100 = vpack.c.b16 %v3036, %v3032
    %v3101 = vpack.c.b16 %v3037, %v3033
    %v3102 = vpack.c.b16 %v3038, %v3034
    %3167 = vmatpush.bf16.msra.mxu0 %v3067
    %3168 = vmatpush.bf16.msra.mxu0 %v3063
    %3169 = vmatpush.bf16.msra.mxu0 %v3059
    %3170 = vmatpush.bf16.msra.mxu0 %v3055
    %3171 = vmatpush.bf16.msra.mxu0 %v3051
    %3172 = vmatpush.bf16.msra.mxu0 %v3047
    %3173 = vmatpush.bf16.msra.mxu0 %v3043
    %3174 = vmatpush.bf16.msra.mxu0 %v3039
    %3175 = vmatmul.bf16.gmra.mxu0 %v2781
    %v3176 = vpop.f32.mrf.mxu0
    %v3177 = vadd.f32 0.0, %v3176
    %v3178 = vpop.f32.mrf.mxu0
    %3179 = vdwg.mxu0
    %3180 = vmatpush.bf16.msra.mxu0 %v3099
    %3181 = vmatpush.bf16.msra.mxu0 %v3095
    %3182 = vmatpush.bf16.msra.mxu0 %v3091
    %3183 = vmatpush.bf16.msra.mxu0 %v3087
    %3184 = vmatpush.bf16.msra.mxu0 %v3083
    %3185 = vmatpush.bf16.msra.mxu0 %v3079
    %3186 = vmatpush.bf16.msra.mxu0 %v3075
    %3187 = vmatpush.bf16.msra.mxu0 %v3071
    %3188 = vmatmul.bf16.gmra.mxu0 %v2782
    %v3189 = vpop.f32.mrf.mxu0
    %v3190 = vadd.f32 %v3177, %v3189
    %v3191 = vpop.f32.mrf.mxu0
    %3192 = vdwg.mxu0
    %3193 = vmatpush.bf16.msra.mxu0 %v3068
    %3194 = vmatpush.bf16.msra.mxu0 %v3064
    %3195 = vmatpush.bf16.msra.mxu0 %v3060
    %3196 = vmatpush.bf16.msra.mxu0 %v3056
    %3197 = vmatpush.bf16.msra.mxu0 %v3052
    %3198 = vmatpush.bf16.msra.mxu0 %v3048
    %3199 = vmatpush.bf16.msra.mxu0 %v3044
    %3200 = vmatpush.bf16.msra.mxu0 %v3040
    %3201 = vmatmul.bf16.gmra.mxu0 %v2781
    %v3202 = vpop.f32.mrf.mxu0
    %v3203 = vadd.f32 0.0, %v3202
    %v3204 = vpop.f32.mrf.mxu0
    %3205 = vdwg.mxu0
    %3206 = vmatpush.bf16.msra.mxu0 %v3100
    %3207 = vmatpush.bf16.msra.mxu0 %v3096
    %3208 = vmatpush.bf16.msra.mxu0 %v3092
    %3209 = vmatpush.bf16.msra.mxu0 %v3088
    %3210 = vmatpush.bf16.msra.mxu0 %v3084
    %3211 = vmatpush.bf16.msra.mxu0 %v3080
    %3212 = vmatpush.bf16.msra.mxu0 %v3076
    %3213 = vmatpush.bf16.msra.mxu0 %v3072
    %3214 = vmatmul.bf16.gmra.mxu0 %v2782
    %v3215 = vpop.f32.mrf.mxu0
    %v3216 = vadd.f32 %v3203, %v3215
    %v3217 = vpop.f32.mrf.mxu0
    %3218 = vdwg.mxu0
    %3219 = vmatpush.bf16.msra.mxu0 %v3069
    %3220 = vmatpush.bf16.msra.mxu0 %v3065
    %3221 = vmatpush.bf16.msra.mxu0 %v3061
    %3222 = vmatpush.bf16.msra.mxu0 %v3057
    %3223 = vmatpush.bf16.msra.mxu0 %v3053
    %3224 = vmatpush.bf16.msra.mxu0 %v3049
    %3225 = vmatpush.bf16.msra.mxu0 %v3045
    %3226 = vmatpush.bf16.msra.mxu0 %v3041
    %3227 = vmatmul.bf16.gmra.mxu0 %v2781
    %v3228 = vpop.f32.mrf.mxu0
    %v3229 = vadd.f32 0.0, %v3228
    %v3230 = vpop.f32.mrf.mxu0
    %3231 = vdwg.mxu0
    %3232 = vmatpush.bf16.msra.mxu0 %v3101
    %3233 = vmatpush.bf16.msra.mxu0 %v3097
    %3234 = vmatpush.bf16.msra.mxu0 %v3093
    %3235 = vmatpush.bf16.msra.mxu0 %v3089
    %3236 = vmatpush.bf16.msra.mxu0 %v3085
    %3237 = vmatpush.bf16.msra.mxu0 %v3081
    %3238 = vmatpush.bf16.msra.mxu0 %v3077
    %3239 = vmatpush.bf16.msra.mxu0 %v3073
    %3240 = vmatmul.bf16.gmra.mxu0 %v2782
    %v3241 = vpop.f32.mrf.mxu0
    %v3242 = vadd.f32 %v3229, %v3241
    %v3243 = vpop.f32.mrf.mxu0
    %3244 = vdwg.mxu0
    %3245 = vmatpush.bf16.msra.mxu0 %v3070
    %3246 = vmatpush.bf16.msra.mxu0 %v3066
    %3247 = vmatpush.bf16.msra.mxu0 %v3062
    %3248 = vmatpush.bf16.msra.mxu0 %v3058
    %3249 = vmatpush.bf16.msra.mxu0 %v3054
    %3250 = vmatpush.bf16.msra.mxu0 %v3050
    %3251 = vmatpush.bf16.msra.mxu0 %v3046
    %3252 = vmatpush.bf16.msra.mxu0 %v3042
    %3253 = vmatmul.bf16.gmra.mxu0 %v2781
    %v3254 = vpop.f32.mrf.mxu0
    %v3255 = vadd.f32 0.0, %v3254
    %v3256 = vpop.f32.mrf.mxu0
    %3257 = vdwg.mxu0
    %3258 = vmatpush.bf16.msra.mxu0 %v3102
    %3259 = vmatpush.bf16.msra.mxu0 %v3098
    %3260 = vmatpush.bf16.msra.mxu0 %v3094
    %3261 = vmatpush.bf16.msra.mxu0 %v3090
    %3262 = vmatpush.bf16.msra.mxu0 %v3086
    %3263 = vmatpush.bf16.msra.mxu0 %v3082
    %3264 = vmatpush.bf16.msra.mxu0 %v3078
    %3265 = vmatpush.bf16.msra.mxu0 %v3074
    %3266 = vmatmul.bf16.gmra.mxu0 %v2782
    %v3267 = vpop.f32.mrf.mxu0
    %v3268 = vadd.f32 %v3255, %v3267
    %v3269 = vpop.f32.mrf.mxu0
    %3270 = vdwg.mxu0
    %v3271 = vadd.f32 %v2746, %v3190
    %v3272 = vadd.f32 %v2747, %v3216
    %v3273 = vadd.f32 %v2748, %v3242
    %v3274 = vadd.f32 %v2749, %v3268
    %s3275 = scalar_lea.vmem [#allocation7], 4
    %v3276 = vld [vmem:[%s3275] sm:$0x1]
    %v3278 = vsel %vm1177, %v3276, 0
    %3280 = vmatpush.bf16.msra.mxu0 0
    %3281 = vmatpush.bf16.msra.mxu0 0
    %3282 = vmatpush.bf16.msra.mxu0 0
    %3283 = vmatpush.bf16.msra.mxu0 0
    %3284 = vmatpush.bf16.msra.mxu0 0
    %3285 = vmatpush.bf16.msra.mxu0 0
    %3286 = vmatpush.bf16.msra.mxu0 0
    %3287 = vmatpush.bf16.msra.mxu0 %v1183
    %3288 = vmatmul.bf16.gmra.mxu0 %v3278
    %v3289 = vpop.f32.mrf.mxu0
    %v3290 = vadd.f32 0.0, %v3289
    %v3291 = vpop.f32.mrf.mxu0
    %3292 = vdwg.mxu0
    %3293 = vmatpush.bf16.msra.mxu0 0
    %3294 = vmatpush.bf16.msra.mxu0 0
    %3295 = vmatpush.bf16.msra.mxu0 0
    %3296 = vmatpush.bf16.msra.mxu0 0
    %3297 = vmatpush.bf16.msra.mxu0 0
    %3298 = vmatpush.bf16.msra.mxu0 0
    %3299 = vmatpush.bf16.msra.mxu0 0
    %3300 = vmatpush.bf16.msra.mxu0 %v1186
    %3301 = vmatmul.bf16.gmra.mxu0 %v3278
    %v3302 = vpop.f32.mrf.mxu0
    %v3303 = vadd.f32 0.0, %v3302
    %v3304 = vpop.f32.mrf.mxu0
    %3305 = vdwg.mxu0
    %v3306 = vpack.c.bf16 %v3290, %v3290
    %v3307 = vpack.c.bf16 %v3303, %v3303
    %v3308 = vld [vmem:[#allocation2 + $0x800] sm:$0xff]
    %v3309 = vld [vmem:[#allocation2 + $0x808] sm:$0xff]
    %v3310 = vld [vmem:[#allocation2 + $0x810] sm:$0xff]
    %v3311 = vld [vmem:[#allocation2 + $0x818] sm:$0xff]
    %v3312 = vld [vmem:[#allocation2 + $0x820] sm:$0xff]
    %v3313 = vld [vmem:[#allocation2 + $0x828] sm:$0xff]
    %v3314 = vld [vmem:[#allocation2 + $0x830] sm:$0xff]
    %v3315 = vld [vmem:[#allocation2 + $0x838] sm:$0xff]
    %v3316 = vld [vmem:[#allocation2 + $0x840] sm:$0xff]
    %v3317 = vld [vmem:[#allocation2 + $0x848] sm:$0xff]
    %v3318 = vld [vmem:[#allocation2 + $0x850] sm:$0xff]
    %v3319 = vld [vmem:[#allocation2 + $0x858] sm:$0xff]
    %v3320 = vld [vmem:[#allocation2 + $0x860] sm:$0xff]
    %v3321 = vld [vmem:[#allocation2 + $0x868] sm:$0xff]
    %v3322 = vld [vmem:[#allocation2 + $0x870] sm:$0xff]
    %v3323 = vld [vmem:[#allocation2 + $0x878] sm:$0xff]
    %v3324 = vld [vmem:[#allocation2 + $0x880] sm:$0xff]
    %v3325 = vld [vmem:[#allocation2 + $0x888] sm:$0xff]
    %v3326 = vld [vmem:[#allocation2 + $0x890] sm:$0xff]
    %v3327 = vld [vmem:[#allocation2 + $0x898] sm:$0xff]
    %v3328 = vld [vmem:[#allocation2 + $0x8a0] sm:$0xff]
    %v3329 = vld [vmem:[#allocation2 + $0x8a8] sm:$0xff]
    %v3330 = vld [vmem:[#allocation2 + $0x8b0] sm:$0xff]
    %v3331 = vld [vmem:[#allocation2 + $0x8b8] sm:$0xff]
    %v3332 = vld [vmem:[#allocation2 + $0x8c0] sm:$0xff]
    %v3333 = vld [vmem:[#allocation2 + $0x8c8] sm:$0xff]
    %v3334 = vld [vmem:[#allocation2 + $0x8d0] sm:$0xff]
    %v3335 = vld [vmem:[#allocation2 + $0x8d8] sm:$0xff]
    %v3336 = vld [vmem:[#allocation2 + $0x8e0] sm:$0xff]
    %v3337 = vld [vmem:[#allocation2 + $0x8e8] sm:$0xff]
    %v3338 = vld [vmem:[#allocation2 + $0x8f0] sm:$0xff]
    %v3339 = vld [vmem:[#allocation2 + $0x8f8] sm:$0xff]
    %v3340 = vld [vmem:[#allocation2 + $0x900] sm:$0xff]
    %v3341 = vld [vmem:[#allocation2 + $0x908] sm:$0xff]
    %v3342 = vld [vmem:[#allocation2 + $0x910] sm:$0xff]
    %v3343 = vld [vmem:[#allocation2 + $0x918] sm:$0xff]
    %v3344 = vld [vmem:[#allocation2 + $0x920] sm:$0xff]
    %v3345 = vld [vmem:[#allocation2 + $0x928] sm:$0xff]
    %v3346 = vld [vmem:[#allocation2 + $0x930] sm:$0xff]
    %v3347 = vld [vmem:[#allocation2 + $0x938] sm:$0xff]
    %v3348 = vld [vmem:[#allocation2 + $0x940] sm:$0xff]
    %v3349 = vld [vmem:[#allocation2 + $0x948] sm:$0xff]
    %v3350 = vld [vmem:[#allocation2 + $0x950] sm:$0xff]
    %v3351 = vld [vmem:[#allocation2 + $0x958] sm:$0xff]
    %v3352 = vld [vmem:[#allocation2 + $0x960] sm:$0xff]
    %v3353 = vld [vmem:[#allocation2 + $0x968] sm:$0xff]
    %v3354 = vld [vmem:[#allocation2 + $0x970] sm:$0xff]
    %v3355 = vld [vmem:[#allocation2 + $0x978] sm:$0xff]
    %v3356 = vld [vmem:[#allocation2 + $0x980] sm:$0xff]
    %v3357 = vld [vmem:[#allocation2 + $0x988] sm:$0xff]
    %v3358 = vld [vmem:[#allocation2 + $0x990] sm:$0xff]
    %v3359 = vld [vmem:[#allocation2 + $0x998] sm:$0xff]
    %v3360 = vld [vmem:[#allocation2 + $0x9a0] sm:$0xff]
    %v3361 = vld [vmem:[#allocation2 + $0x9a8] sm:$0xff]
    %v3362 = vld [vmem:[#allocation2 + $0x9b0] sm:$0xff]
    %v3363 = vld [vmem:[#allocation2 + $0x9b8] sm:$0xff]
    %v3364 = vld [vmem:[#allocation2 + $0x9c0] sm:$0xff]
    %v3365 = vld [vmem:[#allocation2 + $0x9c8] sm:$0xff]
    %v3366 = vld [vmem:[#allocation2 + $0x9d0] sm:$0xff]
    %v3367 = vld [vmem:[#allocation2 + $0x9d8] sm:$0xff]
    %v3368 = vld [vmem:[#allocation2 + $0x9e0] sm:$0xff]
    %v3369 = vld [vmem:[#allocation2 + $0x9e8] sm:$0xff]
    %v3370 = vld [vmem:[#allocation2 + $0x9f0] sm:$0xff]
    %v3371 = vld [vmem:[#allocation2 + $0x9f8] sm:$0xff]
    %v3436 = vunpack.c.l.b16 %v3308
    %v3437 = vunpack.c.h.b16 %v3308
    %v3438 = vunpack.c.l.b16 %v3309
    %v3439 = vunpack.c.h.b16 %v3309
    %v3440 = vunpack.c.l.b16 %v3310
    %v3441 = vunpack.c.h.b16 %v3310
    %v3442 = vunpack.c.l.b16 %v3311
    %v3443 = vunpack.c.h.b16 %v3311
    %v3444 = vunpack.c.l.b16 %v3312
    %v3445 = vunpack.c.h.b16 %v3312
    %v3446 = vunpack.c.l.b16 %v3313
    %v3447 = vunpack.c.h.b16 %v3313
    %v3448 = vunpack.c.l.b16 %v3314
    %v3449 = vunpack.c.h.b16 %v3314
    %v3450 = vunpack.c.l.b16 %v3315
    %v3451 = vunpack.c.h.b16 %v3315
    %v3452 = vunpack.c.l.b16 %v3316
    %v3453 = vunpack.c.h.b16 %v3316
    %v3454 = vunpack.c.l.b16 %v3317
    %v3455 = vunpack.c.h.b16 %v3317
    %v3456 = vunpack.c.l.b16 %v3318
    %v3457 = vunpack.c.h.b16 %v3318
    %v3458 = vunpack.c.l.b16 %v3319
    %v3459 = vunpack.c.h.b16 %v3319
    %v3460 = vunpack.c.l.b16 %v3320
    %v3461 = vunpack.c.h.b16 %v3320
    %v3462 = vunpack.c.l.b16 %v3321
    %v3463 = vunpack.c.h.b16 %v3321
    %v3464 = vunpack.c.l.b16 %v3322
    %v3465 = vunpack.c.h.b16 %v3322
    %v3466 = vunpack.c.l.b16 %v3323
    %v3467 = vunpack.c.h.b16 %v3323
    %v3468 = vunpack.c.l.b16 %v3324
    %v3469 = vunpack.c.h.b16 %v3324
    %v3470 = vunpack.c.l.b16 %v3325
    %v3471 = vunpack.c.h.b16 %v3325
    %v3472 = vunpack.c.l.b16 %v3326
    %v3473 = vunpack.c.h.b16 %v3326
    %v3474 = vunpack.c.l.b16 %v3327
    %v3475 = vunpack.c.h.b16 %v3327
    %v3476 = vunpack.c.l.b16 %v3328
    %v3477 = vunpack.c.h.b16 %v3328
    %v3478 = vunpack.c.l.b16 %v3329
    %v3479 = vunpack.c.h.b16 %v3329
    %v3480 = vunpack.c.l.b16 %v3330
    %v3481 = vunpack.c.h.b16 %v3330
    %v3482 = vunpack.c.l.b16 %v3331
    %v3483 = vunpack.c.h.b16 %v3331
    %v3484 = vunpack.c.l.b16 %v3332
    %v3485 = vunpack.c.h.b16 %v3332
    %v3486 = vunpack.c.l.b16 %v3333
    %v3487 = vunpack.c.h.b16 %v3333
    %v3488 = vunpack.c.l.b16 %v3334
    %v3489 = vunpack.c.h.b16 %v3334
    %v3490 = vunpack.c.l.b16 %v3335
    %v3491 = vunpack.c.h.b16 %v3335
    %v3492 = vunpack.c.l.b16 %v3336
    %v3493 = vunpack.c.h.b16 %v3336
    %v3494 = vunpack.c.l.b16 %v3337
    %v3495 = vunpack.c.h.b16 %v3337
    %v3496 = vunpack.c.l.b16 %v3338
    %v3497 = vunpack.c.h.b16 %v3338
    %v3498 = vunpack.c.l.b16 %v3339
    %v3499 = vunpack.c.h.b16 %v3339
    %v3500 = vunpack.c.l.b16 %v3340
    %v3501 = vunpack.c.h.b16 %v3340
    %v3502 = vunpack.c.l.b16 %v3341
    %v3503 = vunpack.c.h.b16 %v3341
    %v3504 = vunpack.c.l.b16 %v3342
    %v3505 = vunpack.c.h.b16 %v3342
    %v3506 = vunpack.c.l.b16 %v3343
    %v3507 = vunpack.c.h.b16 %v3343
    %v3508 = vunpack.c.l.b16 %v3344
    %v3509 = vunpack.c.h.b16 %v3344
    %v3510 = vunpack.c.l.b16 %v3345
    %v3511 = vunpack.c.h.b16 %v3345
    %v3512 = vunpack.c.l.b16 %v3346
    %v3513 = vunpack.c.h.b16 %v3346
    %v3514 = vunpack.c.l.b16 %v3347
    %v3515 = vunpack.c.h.b16 %v3347
    %v3516 = vunpack.c.l.b16 %v3348
    %v3517 = vunpack.c.h.b16 %v3348
    %v3518 = vunpack.c.l.b16 %v3349
    %v3519 = vunpack.c.h.b16 %v3349
    %v3520 = vunpack.c.l.b16 %v3350
    %v3521 = vunpack.c.h.b16 %v3350
    %v3522 = vunpack.c.l.b16 %v3351
    %v3523 = vunpack.c.h.b16 %v3351
    %v3524 = vunpack.c.l.b16 %v3352
    %v3525 = vunpack.c.h.b16 %v3352
    %v3526 = vunpack.c.l.b16 %v3353
    %v3527 = vunpack.c.h.b16 %v3353
    %v3528 = vunpack.c.l.b16 %v3354
    %v3529 = vunpack.c.h.b16 %v3354
    %v3530 = vunpack.c.l.b16 %v3355
    %v3531 = vunpack.c.h.b16 %v3355
    %v3532 = vunpack.c.l.b16 %v3356
    %v3533 = vunpack.c.h.b16 %v3356
    %v3534 = vunpack.c.l.b16 %v3357
    %v3535 = vunpack.c.h.b16 %v3357
    %v3536 = vunpack.c.l.b16 %v3358
    %v3537 = vunpack.c.h.b16 %v3358
    %v3538 = vunpack.c.l.b16 %v3359
    %v3539 = vunpack.c.h.b16 %v3359
    %v3540 = vunpack.c.l.b16 %v3360
    %v3541 = vunpack.c.h.b16 %v3360
    %v3542 = vunpack.c.l.b16 %v3361
    %v3543 = vunpack.c.h.b16 %v3361
    %v3544 = vunpack.c.l.b16 %v3362
    %v3545 = vunpack.c.h.b16 %v3362
    %v3546 = vunpack.c.l.b16 %v3363
    %v3547 = vunpack.c.h.b16 %v3363
    %v3548 = vunpack.c.l.b16 %v3364
    %v3549 = vunpack.c.h.b16 %v3364
    %v3550 = vunpack.c.l.b16 %v3365
    %v3551 = vunpack.c.h.b16 %v3365
    %v3552 = vunpack.c.l.b16 %v3366
    %v3553 = vunpack.c.h.b16 %v3366
    %v3554 = vunpack.c.l.b16 %v3367
    %v3555 = vunpack.c.h.b16 %v3367
    %v3556 = vunpack.c.l.b16 %v3368
    %v3557 = vunpack.c.h.b16 %v3368
    %v3558 = vunpack.c.l.b16 %v3369
    %v3559 = vunpack.c.h.b16 %v3369
    %v3560 = vunpack.c.l.b16 %v3370
    %v3561 = vunpack.c.h.b16 %v3370
    %v3562 = vunpack.c.l.b16 %v3371
    %v3563 = vunpack.c.h.b16 %v3371
    %v3564 = vpack.c.b16 %v3440, %v3436
    %v3565 = vpack.c.b16 %v3441, %v3437
    %v3566 = vpack.c.b16 %v3442, %v3438
    %v3567 = vpack.c.b16 %v3443, %v3439
    %v3568 = vpack.c.b16 %v3448, %v3444
    %v3569 = vpack.c.b16 %v3449, %v3445
    %v3570 = vpack.c.b16 %v3450, %v3446
    %v3571 = vpack.c.b16 %v3451, %v3447
    %v3572 = vpack.c.b16 %v3456, %v3452
    %v3573 = vpack.c.b16 %v3457, %v3453
    %v3574 = vpack.c.b16 %v3458, %v3454
    %v3575 = vpack.c.b16 %v3459, %v3455
    %v3576 = vpack.c.b16 %v3464, %v3460
    %v3577 = vpack.c.b16 %v3465, %v3461
    %v3578 = vpack.c.b16 %v3466, %v3462
    %v3579 = vpack.c.b16 %v3467, %v3463
    %v3580 = vpack.c.b16 %v3472, %v3468
    %v3581 = vpack.c.b16 %v3473, %v3469
    %v3582 = vpack.c.b16 %v3474, %v3470
    %v3583 = vpack.c.b16 %v3475, %v3471
    %v3584 = vpack.c.b16 %v3480, %v3476
    %v3585 = vpack.c.b16 %v3481, %v3477
    %v3586 = vpack.c.b16 %v3482, %v3478
    %v3587 = vpack.c.b16 %v3483, %v3479
    %v3588 = vpack.c.b16 %v3488, %v3484
    %v3589 = vpack.c.b16 %v3489, %v3485
    %v3590 = vpack.c.b16 %v3490, %v3486
    %v3591 = vpack.c.b16 %v3491, %v3487
    %v3592 = vpack.c.b16 %v3496, %v3492
    %v3593 = vpack.c.b16 %v3497, %v3493
    %v3594 = vpack.c.b16 %v3498, %v3494
    %v3595 = vpack.c.b16 %v3499, %v3495
    %v3596 = vpack.c.b16 %v3504, %v3500
    %v3597 = vpack.c.b16 %v3505, %v3501
    %v3598 = vpack.c.b16 %v3506, %v3502
    %v3599 = vpack.c.b16 %v3507, %v3503
    %v3600 = vpack.c.b16 %v3512, %v3508
    %v3601 = vpack.c.b16 %v3513, %v3509
    %v3602 = vpack.c.b16 %v3514, %v3510
    %v3603 = vpack.c.b16 %v3515, %v3511
    %v3604 = vpack.c.b16 %v3520, %v3516
    %v3605 = vpack.c.b16 %v3521, %v3517
    %v3606 = vpack.c.b16 %v3522, %v3518
    %v3607 = vpack.c.b16 %v3523, %v3519
    %v3608 = vpack.c.b16 %v3528, %v3524
    %v3609 = vpack.c.b16 %v3529, %v3525
    %v3610 = vpack.c.b16 %v3530, %v3526
    %v3611 = vpack.c.b16 %v3531, %v3527
    %v3612 = vpack.c.b16 %v3536, %v3532
    %v3613 = vpack.c.b16 %v3537, %v3533
    %v3614 = vpack.c.b16 %v3538, %v3534
    %v3615 = vpack.c.b16 %v3539, %v3535
    %v3616 = vpack.c.b16 %v3544, %v3540
    %v3617 = vpack.c.b16 %v3545, %v3541
    %v3618 = vpack.c.b16 %v3546, %v3542
    %v3619 = vpack.c.b16 %v3547, %v3543
    %v3620 = vpack.c.b16 %v3552, %v3548
    %v3621 = vpack.c.b16 %v3553, %v3549
    %v3622 = vpack.c.b16 %v3554, %v3550
    %v3623 = vpack.c.b16 %v3555, %v3551
    %v3624 = vpack.c.b16 %v3560, %v3556
    %v3625 = vpack.c.b16 %v3561, %v3557
    %v3626 = vpack.c.b16 %v3562, %v3558
    %v3627 = vpack.c.b16 %v3563, %v3559
    %3692 = vmatpush.bf16.msra.mxu0 %v3592
    %3693 = vmatpush.bf16.msra.mxu0 %v3588
    %3694 = vmatpush.bf16.msra.mxu0 %v3584
    %3695 = vmatpush.bf16.msra.mxu0 %v3580
    %3696 = vmatpush.bf16.msra.mxu0 %v3576
    %3697 = vmatpush.bf16.msra.mxu0 %v3572
    %3698 = vmatpush.bf16.msra.mxu0 %v3568
    %3699 = vmatpush.bf16.msra.mxu0 %v3564
    %3700 = vmatmul.bf16.gmra.mxu0 %v3306
    %v3701 = vpop.f32.mrf.mxu0
    %v3702 = vadd.f32 0.0, %v3701
    %v3703 = vpop.f32.mrf.mxu0
    %3704 = vdwg.mxu0
    %3705 = vmatpush.bf16.msra.mxu0 %v3624
    %3706 = vmatpush.bf16.msra.mxu0 %v3620
    %3707 = vmatpush.bf16.msra.mxu0 %v3616
    %3708 = vmatpush.bf16.msra.mxu0 %v3612
    %3709 = vmatpush.bf16.msra.mxu0 %v3608
    %3710 = vmatpush.bf16.msra.mxu0 %v3604
    %3711 = vmatpush.bf16.msra.mxu0 %v3600
    %3712 = vmatpush.bf16.msra.mxu0 %v3596
    %3713 = vmatmul.bf16.gmra.mxu0 %v3307
    %v3714 = vpop.f32.mrf.mxu0
    %v3715 = vadd.f32 %v3702, %v3714
    %v3716 = vpop.f32.mrf.mxu0
    %3717 = vdwg.mxu0
    %3718 = vmatpush.bf16.msra.mxu0 %v3593
    %3719 = vmatpush.bf16.msra.mxu0 %v3589
    %3720 = vmatpush.bf16.msra.mxu0 %v3585
    %3721 = vmatpush.bf16.msra.mxu0 %v3581
    %3722 = vmatpush.bf16.msra.mxu0 %v3577
    %3723 = vmatpush.bf16.msra.mxu0 %v3573
    %3724 = vmatpush.bf16.msra.mxu0 %v3569
    %3725 = vmatpush.bf16.msra.mxu0 %v3565
    %3726 = vmatmul.bf16.gmra.mxu0 %v3306
    %v3727 = vpop.f32.mrf.mxu0
    %v3728 = vadd.f32 0.0, %v3727
    %v3729 = vpop.f32.mrf.mxu0
    %3730 = vdwg.mxu0
    %3731 = vmatpush.bf16.msra.mxu0 %v3625
    %3732 = vmatpush.bf16.msra.mxu0 %v3621
    %3733 = vmatpush.bf16.msra.mxu0 %v3617
    %3734 = vmatpush.bf16.msra.mxu0 %v3613
    %3735 = vmatpush.bf16.msra.mxu0 %v3609
    %3736 = vmatpush.bf16.msra.mxu0 %v3605
    %3737 = vmatpush.bf16.msra.mxu0 %v3601
    %3738 = vmatpush.bf16.msra.mxu0 %v3597
    %3739 = vmatmul.bf16.gmra.mxu0 %v3307
    %v3740 = vpop.f32.mrf.mxu0
    %v3741 = vadd.f32 %v3728, %v3740
    %v3742 = vpop.f32.mrf.mxu0
    %3743 = vdwg.mxu0
    %3744 = vmatpush.bf16.msra.mxu0 %v3594
    %3745 = vmatpush.bf16.msra.mxu0 %v3590
    %3746 = vmatpush.bf16.msra.mxu0 %v3586
    %3747 = vmatpush.bf16.msra.mxu0 %v3582
    %3748 = vmatpush.bf16.msra.mxu0 %v3578
    %3749 = vmatpush.bf16.msra.mxu0 %v3574
    %3750 = vmatpush.bf16.msra.mxu0 %v3570
    %3751 = vmatpush.bf16.msra.mxu0 %v3566
    %3752 = vmatmul.bf16.gmra.mxu0 %v3306
    %v3753 = vpop.f32.mrf.mxu0
    %v3754 = vadd.f32 0.0, %v3753
    %v3755 = vpop.f32.mrf.mxu0
    %3756 = vdwg.mxu0
    %3757 = vmatpush.bf16.msra.mxu0 %v3626
    %3758 = vmatpush.bf16.msra.mxu0 %v3622
    %3759 = vmatpush.bf16.msra.mxu0 %v3618
    %3760 = vmatpush.bf16.msra.mxu0 %v3614
    %3761 = vmatpush.bf16.msra.mxu0 %v3610
    %3762 = vmatpush.bf16.msra.mxu0 %v3606
    %3763 = vmatpush.bf16.msra.mxu0 %v3602
    %3764 = vmatpush.bf16.msra.mxu0 %v3598
    %3765 = vmatmul.bf16.gmra.mxu0 %v3307
    %v3766 = vpop.f32.mrf.mxu0
    %v3767 = vadd.f32 %v3754, %v3766
    %v3768 = vpop.f32.mrf.mxu0
    %3769 = vdwg.mxu0
    %3770 = vmatpush.bf16.msra.mxu0 %v3595
    %3771 = vmatpush.bf16.msra.mxu0 %v3591
    %3772 = vmatpush.bf16.msra.mxu0 %v3587
    %3773 = vmatpush.bf16.msra.mxu0 %v3583
    %3774 = vmatpush.bf16.msra.mxu0 %v3579
    %3775 = vmatpush.bf16.msra.mxu0 %v3575
    %3776 = vmatpush.bf16.msra.mxu0 %v3571
    %3777 = vmatpush.bf16.msra.mxu0 %v3567
    %3778 = vmatmul.bf16.gmra.mxu0 %v3306
    %v3779 = vpop.f32.mrf.mxu0
    %v3780 = vadd.f32 0.0, %v3779
    %v3781 = vpop.f32.mrf.mxu0
    %3782 = vdwg.mxu0
    %3783 = vmatpush.bf16.msra.mxu0 %v3627
    %3784 = vmatpush.bf16.msra.mxu0 %v3623
    %3785 = vmatpush.bf16.msra.mxu0 %v3619
    %3786 = vmatpush.bf16.msra.mxu0 %v3615
    %3787 = vmatpush.bf16.msra.mxu0 %v3611
    %3788 = vmatpush.bf16.msra.mxu0 %v3607
    %3789 = vmatpush.bf16.msra.mxu0 %v3603
    %3790 = vmatpush.bf16.msra.mxu0 %v3599
    %3791 = vmatmul.bf16.gmra.mxu0 %v3307
    %v3792 = vpop.f32.mrf.mxu0
    %v3793 = vadd.f32 %v3780, %v3792
    %v3794 = vpop.f32.mrf.mxu0
    %3795 = vdwg.mxu0
    %v3796 = vadd.f32 %v3271, %v3715
    %v3797 = vadd.f32 %v3272, %v3741
    %v3798 = vadd.f32 %v3273, %v3767
    %v3799 = vadd.f32 %v3274, %v3793
    %v3800 = vld [vmem:[#allocation22] sm:$0xf]
    %v3802 = vperm.slane %v3800, 0
    %v3803 = vperm.slane %v3800, 1
    %v3804 = vperm.slane %v3800, 2
    %v3805 = vperm.slane %v3800, 3
    %v3810 = vmul.f32 %v3796, %v3802
    %v3811 = vmul.f32 %v3797, %v3803
    %v3812 = vmul.f32 %v3798, %v3804
    %v3813 = vmul.f32 %v3799, %v3805
    %v3814 = vld [vmem:[#allocation24] sm:$0xf]
    %v3816 = vperm.slane %v3814, 0
    %v3817 = vperm.slane %v3814, 1
    %v3818 = vperm.slane %v3814, 2
    %v3819 = vperm.slane %v3814, 3
    %v3824 = vadd.f32 %v3810, %v3816
    %v3825 = vadd.f32 %v3811, %v3817
    %v3826 = vadd.f32 %v3812, %v3818
    %v3827 = vadd.f32 %v3813, %v3819
    %v3828 = vmax.f32 %v3824, 0.0
    %v3829 = vmax.f32 %v3825, 0.0
    %v3830 = vmax.f32 %v3826, 0.0
    %v3831 = vmax.f32 %v3827, 0.0
    %v3832 = vpack.c.bf16 %v3828, %v3828
    %v3833 = vpack.c.bf16 %v3829, %v3829
    %v3834 = vpack.c.bf16 %v3830, %v3830
    %v3835 = vpack.c.bf16 %v3831, %v3831
    %v3836 = vld [vmem:[%s15] sm:$0xf]
    %v3837 = vld [vmem:[%s15 + $0x4] sm:$0xf]
    %v3838 = vld [vmem:[%s15 + $0x8] sm:$0xf]
    %v3839 = vld [vmem:[%s15 + $0xc] sm:$0xf]
    %v3840 = vld [vmem:[%s15 + $0x10] sm:$0xf]
    %v3841 = vld [vmem:[%s15 + $0x14] sm:$0xf]
    %v3842 = vld [vmem:[%s15 + $0x18] sm:$0xf]
    %v3843 = vld [vmem:[%s15 + $0x1c] sm:$0xf]
    %v3844 = vld [vmem:[%s15 + $0x20] sm:$0xf]
    %v3845 = vld [vmem:[%s15 + $0x24] sm:$0xf]
    %v3846 = vld [vmem:[%s15 + $0x28] sm:$0xf]
    %v3847 = vld [vmem:[%s15 + $0x2c] sm:$0xf]
    %v3848 = vld [vmem:[%s15 + $0x30] sm:$0xf]
    %v3849 = vld [vmem:[%s15 + $0x34] sm:$0xf]
    %v3850 = vld [vmem:[%s15 + $0x38] sm:$0xf]
    %v3851 = vld [vmem:[%s15 + $0x3c] sm:$0xf]
    %v3852 = vld [vmem:[%s15 + $0x40] sm:$0xf]
    %v3853 = vld [vmem:[%s15 + $0x44] sm:$0xf]
    %v3854 = vld [vmem:[%s15 + $0x48] sm:$0xf]
    %v3855 = vld [vmem:[%s15 + $0x4c] sm:$0xf]
    %v3856 = vld [vmem:[%s15 + $0x50] sm:$0xf]
    %v3857 = vld [vmem:[%s15 + $0x54] sm:$0xf]
    %v3858 = vld [vmem:[%s15 + $0x58] sm:$0xf]
    %v3859 = vld [vmem:[%s15 + $0x5c] sm:$0xf]
    %v3860 = vld [vmem:[%s15 + $0x60] sm:$0xf]
    %v3861 = vld [vmem:[%s15 + $0x64] sm:$0xf]
    %v3862 = vld [vmem:[%s15 + $0x68] sm:$0xf]
    %v3863 = vld [vmem:[%s15 + $0x6c] sm:$0xf]
    %v3864 = vld [vmem:[%s15 + $0x70] sm:$0xf]
    %v3865 = vld [vmem:[%s15 + $0x74] sm:$0xf]
    %v3866 = vld [vmem:[%s15 + $0x78] sm:$0xf]
    %v3867 = vld [vmem:[%s15 + $0x7c] sm:$0xf]
    %v3868 = vld [vmem:[%s15 + $0x80] sm:$0xf]
    %v3869 = vld [vmem:[%s15 + $0x84] sm:$0xf]
    %v3870 = vld [vmem:[%s15 + $0x88] sm:$0xf]
    %v3871 = vld [vmem:[%s15 + $0x8c] sm:$0xf]
    %v3872 = vld [vmem:[%s15 + $0x90] sm:$0xf]
    %v3873 = vld [vmem:[%s15 + $0x94] sm:$0xf]
    %v3874 = vld [vmem:[%s15 + $0x98] sm:$0xf]
    %v3875 = vld [vmem:[%s15 + $0x9c] sm:$0xf]
    %v3876 = vld [vmem:[%s15 + $0xa0] sm:$0xf]
    %v3877 = vld [vmem:[%s15 + $0xa4] sm:$0xf]
    %v3878 = vld [vmem:[%s15 + $0xa8] sm:$0xf]
    %v3879 = vld [vmem:[%s15 + $0xac] sm:$0xf]
    %v3880 = vld [vmem:[%s15 + $0xb0] sm:$0xf]
    %v3881 = vld [vmem:[%s15 + $0xb4] sm:$0xf]
    %v3882 = vld [vmem:[%s15 + $0xb8] sm:$0xf]
    %v3883 = vld [vmem:[%s15 + $0xbc] sm:$0xf]
    %v3884 = vld [vmem:[%s15 + $0xc0] sm:$0xf]
    %v3885 = vld [vmem:[%s15 + $0xc4] sm:$0xf]
    %v3886 = vld [vmem:[%s15 + $0xc8] sm:$0xf]
    %v3887 = vld [vmem:[%s15 + $0xcc] sm:$0xf]
    %v3888 = vld [vmem:[%s15 + $0xd0] sm:$0xf]
    %v3889 = vld [vmem:[%s15 + $0xd4] sm:$0xf]
    %v3890 = vld [vmem:[%s15 + $0xd8] sm:$0xf]
    %v3891 = vld [vmem:[%s15 + $0xdc] sm:$0xf]
    %v3892 = vld [vmem:[%s15 + $0xe0] sm:$0xf]
    %v3893 = vld [vmem:[%s15 + $0xe4] sm:$0xf]
    %v3894 = vld [vmem:[%s15 + $0xe8] sm:$0xf]
    %v3895 = vld [vmem:[%s15 + $0xec] sm:$0xf]
    %v3896 = vld [vmem:[%s15 + $0xf0] sm:$0xf]
    %v3897 = vld [vmem:[%s15 + $0xf4] sm:$0xf]
    %v3898 = vld [vmem:[%s15 + $0xf8] sm:$0xf]
    %v3899 = vld [vmem:[%s15 + $0xfc] sm:$0xf]
    %v3900 = vld [vmem:[#allocation25] sm:$0x1]
    %v3902 = vperm.slane %v3900, 0
    %v3968 = vunpack.c.l.b16 %v3836
    %v3969 = vunpack.c.l.b16 %v3837
    %v3970 = vunpack.c.l.b16 %v3838
    %v3971 = vunpack.c.l.b16 %v3839
    %v3972 = vunpack.c.l.b16 %v3840
    %v3973 = vunpack.c.l.b16 %v3841
    %v3974 = vunpack.c.l.b16 %v3842
    %v3975 = vunpack.c.l.b16 %v3843
    %v3976 = vunpack.c.l.b16 %v3844
    %v3977 = vunpack.c.l.b16 %v3845
    %v3978 = vunpack.c.l.b16 %v3846
    %v3979 = vunpack.c.l.b16 %v3847
    %v3980 = vunpack.c.l.b16 %v3848
    %v3981 = vunpack.c.l.b16 %v3849
    %v3982 = vunpack.c.l.b16 %v3850
    %v3983 = vunpack.c.l.b16 %v3851
    %v3984 = vunpack.c.l.b16 %v3852
    %v3985 = vunpack.c.l.b16 %v3853
    %v3986 = vunpack.c.l.b16 %v3854
    %v3987 = vunpack.c.l.b16 %v3855
    %v3988 = vunpack.c.l.b16 %v3856
    %v3989 = vunpack.c.l.b16 %v3857
    %v3990 = vunpack.c.l.b16 %v3858
    %v3991 = vunpack.c.l.b16 %v3859
    %v3992 = vunpack.c.l.b16 %v3860
    %v3993 = vunpack.c.l.b16 %v3861
    %v3994 = vunpack.c.l.b16 %v3862
    %v3995 = vunpack.c.l.b16 %v3863
    %v3996 = vunpack.c.l.b16 %v3864
    %v3997 = vunpack.c.l.b16 %v3865
    %v3998 = vunpack.c.l.b16 %v3866
    %v3999 = vunpack.c.l.b16 %v3867
    %v4000 = vunpack.c.l.b16 %v3868
    %v4001 = vunpack.c.l.b16 %v3869
    %v4002 = vunpack.c.l.b16 %v3870
    %v4003 = vunpack.c.l.b16 %v3871
    %v4004 = vunpack.c.l.b16 %v3872
    %v4005 = vunpack.c.l.b16 %v3873
    %v4006 = vunpack.c.l.b16 %v3874
    %v4007 = vunpack.c.l.b16 %v3875
    %v4008 = vunpack.c.l.b16 %v3876
    %v4009 = vunpack.c.l.b16 %v3877
    %v4010 = vunpack.c.l.b16 %v3878
    %v4011 = vunpack.c.l.b16 %v3879
    %v4012 = vunpack.c.l.b16 %v3880
    %v4013 = vunpack.c.l.b16 %v3881
    %v4014 = vunpack.c.l.b16 %v3882
    %v4015 = vunpack.c.l.b16 %v3883
    %v4016 = vunpack.c.l.b16 %v3884
    %v4017 = vunpack.c.l.b16 %v3885
    %v4018 = vunpack.c.l.b16 %v3886
    %v4019 = vunpack.c.l.b16 %v3887
    %v4020 = vunpack.c.l.b16 %v3888
    %v4021 = vunpack.c.l.b16 %v3889
    %v4022 = vunpack.c.l.b16 %v3890
    %v4023 = vunpack.c.l.b16 %v3891
    %v4024 = vunpack.c.l.b16 %v3892
    %v4025 = vunpack.c.l.b16 %v3893
    %v4026 = vunpack.c.l.b16 %v3894
    %v4027 = vunpack.c.l.b16 %v3895
    %v4028 = vunpack.c.l.b16 %v3896
    %v4029 = vunpack.c.l.b16 %v3897
    %v4030 = vunpack.c.l.b16 %v3898
    %v4031 = vunpack.c.l.b16 %v3899
    %v4032 = vpack.c.b16 %v3969, %v3968
    %v4033 = vpack.c.b16 %v3971, %v3970
    %v4034 = vpack.c.b16 %v3973, %v3972
    %v4035 = vpack.c.b16 %v3975, %v3974
    %v4036 = vpack.c.b16 %v3977, %v3976
    %v4037 = vpack.c.b16 %v3979, %v3978
    %v4038 = vpack.c.b16 %v3981, %v3980
    %v4039 = vpack.c.b16 %v3983, %v3982
    %v4040 = vpack.c.b16 %v3985, %v3984
    %v4041 = vpack.c.b16 %v3987, %v3986
    %v4042 = vpack.c.b16 %v3989, %v3988
    %v4043 = vpack.c.b16 %v3991, %v3990
    %v4044 = vpack.c.b16 %v3993, %v3992
    %v4045 = vpack.c.b16 %v3995, %v3994
    %v4046 = vpack.c.b16 %v3997, %v3996
    %v4047 = vpack.c.b16 %v3999, %v3998
    %v4048 = vpack.c.b16 %v4001, %v4000
    %v4049 = vpack.c.b16 %v4003, %v4002
    %v4050 = vpack.c.b16 %v4005, %v4004
    %v4051 = vpack.c.b16 %v4007, %v4006
    %v4052 = vpack.c.b16 %v4009, %v4008
    %v4053 = vpack.c.b16 %v4011, %v4010
    %v4054 = vpack.c.b16 %v4013, %v4012
    %v4055 = vpack.c.b16 %v4015, %v4014
    %v4056 = vpack.c.b16 %v4017, %v4016
    %v4057 = vpack.c.b16 %v4019, %v4018
    %v4058 = vpack.c.b16 %v4021, %v4020
    %v4059 = vpack.c.b16 %v4023, %v4022
    %v4060 = vpack.c.b16 %v4025, %v4024
    %v4061 = vpack.c.b16 %v4027, %v4026
    %v4062 = vpack.c.b16 %v4029, %v4028
    %v4063 = vpack.c.b16 %v4031, %v4030
    %4096 = vmatpush.bf16.msra.mxu0 %v4039
    %4097 = vmatpush.bf16.msra.mxu0 %v4038
    %4098 = vmatpush.bf16.msra.mxu0 %v4037
    %4099 = vmatpush.bf16.msra.mxu0 %v4036
    %4100 = vmatpush.bf16.msra.mxu0 %v4035
    %4101 = vmatpush.bf16.msra.mxu0 %v4034
    %4102 = vmatpush.bf16.msra.mxu0 %v4033
    %4103 = vmatpush.bf16.msra.mxu0 %v4032
    %4104 = vmatmul.bf16.gmra.mxu0 %v3832
    %v4105 = vpop.f32.mrf.mxu0
    %v4106 = vadd.f32 %v3902, %v4105
    %v4107 = vpop.f32.mrf.mxu0
    %4108 = vdwg.mxu0
    %4109 = vmatpush.bf16.msra.mxu0 %v4047
    %4110 = vmatpush.bf16.msra.mxu0 %v4046
    %4111 = vmatpush.bf16.msra.mxu0 %v4045
    %4112 = vmatpush.bf16.msra.mxu0 %v4044
    %4113 = vmatpush.bf16.msra.mxu0 %v4043
    %4114 = vmatpush.bf16.msra.mxu0 %v4042
    %4115 = vmatpush.bf16.msra.mxu0 %v4041
    %4116 = vmatpush.bf16.msra.mxu0 %v4040
    %4117 = vmatmul.bf16.gmra.mxu0 %v3833
    %v4118 = vpop.f32.mrf.mxu0
    %v4119 = vadd.f32 %v4106, %v4118
    %v4120 = vpop.f32.mrf.mxu0
    %4121 = vdwg.mxu0
    %4122 = vmatpush.bf16.msra.mxu0 %v4055
    %4123 = vmatpush.bf16.msra.mxu0 %v4054
    %4124 = vmatpush.bf16.msra.mxu0 %v4053
    %4125 = vmatpush.bf16.msra.mxu0 %v4052
    %4126 = vmatpush.bf16.msra.mxu0 %v4051
    %4127 = vmatpush.bf16.msra.mxu0 %v4050
    %4128 = vmatpush.bf16.msra.mxu0 %v4049
    %4129 = vmatpush.bf16.msra.mxu0 %v4048
    %4130 = vmatmul.bf16.gmra.mxu0 %v3834
    %v4131 = vpop.f32.mrf.mxu0
    %v4132 = vadd.f32 %v4119, %v4131
    %v4133 = vpop.f32.mrf.mxu0
    %4134 = vdwg.mxu0
    %4135 = vmatpush.bf16.msra.mxu0 %v4063
    %4136 = vmatpush.bf16.msra.mxu0 %v4062
    %4137 = vmatpush.bf16.msra.mxu0 %v4061
    %4138 = vmatpush.bf16.msra.mxu0 %v4060
    %4139 = vmatpush.bf16.msra.mxu0 %v4059
    %4140 = vmatpush.bf16.msra.mxu0 %v4058
    %4141 = vmatpush.bf16.msra.mxu0 %v4057
    %4142 = vmatpush.bf16.msra.mxu0 %v4056
    %4143 = vmatmul.bf16.gmra.mxu0 %v3835
    %v4144 = vpop.f32.mrf.mxu0
    %v4145 = vadd.f32 %v4132, %v4144
    %v4146 = vpop.f32.mrf.mxu0
    %4147 = vdwg.mxu0
    %vm4148 = vcmask 123904
    %4149 = vst.msk [vmem:[#allocation27] sm:$0x3] %vm4148, %v4145
    // Predicated region
    $region130: #{conv_encoder_forward.1} parent=1 // pred_check
      _
    $region131: #{conv_encoder_forward.1} parent=1 // pred_check_branch
      %4151 = sbr.rel (0) target = $region133
    $region132: #{conv_encoder_forward.1} parent=1 // pred_region
      %4153 = vsyncadd [#allocation6], 0
      %s4155 = sshll.u32 [#allocation27], 4
      %s4156 = int_to_ptr.vmem [resolvable:$true] %s4155
      %s4157 = sshll.u32 %s18, 4
      %s4158 = int_to_ptr.hbm [resolvable:$true] %s4157
      %4160 = dma.vmem_to_hbm [thread:$0]  %s4156, 32, %s4158, [#allocation6]
    $region133: #{conv_encoder_forward.1} parent=1 // pred_fallthru
      _
    // Predicated region
    $region134: #{conv_encoder_forward.1} parent=1 // pred_check
      _
    $region135: #{conv_encoder_forward.1} parent=1 // pred_check_branch
      %4162 = sbr.rel (0) target = $region137
    $region136: #{conv_encoder_forward.1} parent=1 // pred_region
      %4164 = dma.done [#allocation6], 32
    $region137: #{conv_encoder_forward.1} parent=1 // pred_fallthru
      _
    %4165 = vsyncpa [#allocation5], 1
    %4166 = vsyncpa [#allocation8], 1
    %4167 = vsyncpa [#allocation11], 1
    %4168 = vsyncpa [#allocation14], 1
    %4169 = vsyncpa [#allocation17], 1
    %4170 = vsyncpa [#allocation20], 1
    %4171 = vsyncpa [#allocation23], 1
    %4172 = vsyncpa [#allocation26], 1
    %4173 = vsyncpa [#allocation6], 1
  %4174 = vsyncmov [#allocation3]
  %s4175 = vpop.sfrf %4174
  %p4176 = scmp.eq.s32.totalorder %s4175, 0
  %p4177 = pneg %p4176
  %4179 = shalt.err (%p4177)

</llo_original>
